<compile_context>
chip_gen: v6e
topology: v6e:2x2x1
jax: 0.10.0
libtpu: 0.0.40
codegen_flags: <defaults>
</compile_context>

<pallas_src>
import jax
import jax.numpy as jnp
import numpy as np
from jax.experimental import pallas as pl
from jax.experimental.pallas import tpu as pltpu

FILTERS = 16
BN_EPS = 1e-5


def _round_up(x, m):
    return ((x + m - 1) // m) * m


def _device_defaults():
    """(default batch tile, vmem_limit_bytes) per TPU generation."""
    try:
        kind = jax.devices()[0].device_kind.lower()
    except Exception:
        kind = ""
    if "v7" in kind:                                   # 64 MiB VMEM / TC, 2 TCs
        return 512, 48 * 1024 * 1024
    if "v6" in kind:                                   # 128 MiB VMEM
        return 1024, 96 * 1024 * 1024
    if "v5 lite" in kind or "v5e" in kind or "v5lite" in kind:
        return 512, 64 * 1024 * 1024                   # bf16 + raised scoped limit
    return 256, None                                   # unknown: conservative defaults


# ------------------------------- kernel -------------------------------------

def strided_block_kernel(
        x9_ref, x3_ref, x1_ref,
        w9a_ref, w9pw_ref, w93_ref,
        w3x_ref, w3c_ref, w3a_ref, w3pw_ref,
        w31_ref, wc1_ref, bias_ref,
        o9_ref, o3_ref, o1_ref):
    F = FILTERS
    tn = x3_ref.shape[0]
    bf16 = jnp.bfloat16
    f32 = jnp.float32

    def mm(a, w_ref):
        # bf16 x bf16 MXU matmul with f32 accumulation
        return jnp.dot(a, w_ref[...], preferred_element_type=f32)

    def brelu(v, i):
        # bias-add (BN shift; scales already folded into weights) + ReLU, in f32
        return jnp.maximum(v + bias_ref[i:i + 1, :v.shape[1]], 0.0)

    x9 = x9_ref[...]        # bf16 (tn*9, 9F)  rows=(sample, sub-board b); cols = k*F + f
    x3 = x3_ref[...]        # bf16 (tn, 9F)    cols = p*F + f
    x1 = x1_ref[...]        # bf16 (tn, F)

    # ---- conv9 path: grouped 3x3/stride-3 conv + PixelShuffle(3) + BN + ReLU,
    #      then 1x1 channel-mix + BN + ReLU, residual add ----
    y = brelu(mm(x9, w9a_ref), 0)                       # f32 (tn*9, 9F)
    y = brelu(mm(y.astype(bf16), w9pw_ref), 1)
    o9_ref[...] = (x9.astype(f32) + y).astype(o9_ref.dtype)

    # ---- conv9to3: dense 3x3/stride-3 conv + BN + ReLU (one output pixel per sub-board) ----
    z = brelu(mm(x9, w93_ref), 2)                       # f32 (tn*9, F)

    # ---- conv3 path: 1x1 over concat([x3, conv9to3(x9)]) + BN/ReLU,
    #      grouped 3x3 valid conv + PixelShuffle(3) + BN/ReLU, 1x1 + BN/ReLU, residual ----
    t = mm(x3, w3x_ref)                                 # f32 (tn, 9F)
    zc = mm(z.astype(bf16), w3c_ref)                    # f32 (tn*9, F): single K=16 matmul
    zc3 = zc.reshape(tn, 9, F)                          # leading-dim split only
    t = t + jnp.concatenate([zc3[:, k, :] for k in range(9)], axis=-1)   # (tn, 9F)
    t = brelu(t, 3)
    t = brelu(mm(t.astype(bf16), w3a_ref), 4)
    t = brelu(mm(t.astype(bf16), w3pw_ref), 5)
    o3_ref[...] = (x3.astype(f32) + t).astype(o3_ref.dtype)

    # ---- conv3to1: dense 3x3 valid conv + BN + ReLU; compress1: merged concat matmul ----
    u = brelu(mm(x3, w31_ref), 6)                       # f32 (tn, F)
    xu = jnp.concatenate([x1, u.astype(bf16)], axis=-1)  # bf16 (tn, 2F)
    o1_ref[...] = (x1.astype(f32) + mm(xu, wc1_ref)).astype(o1_ref.dtype)


# ------------------------------- wrappers ------------------------------------

def strided_block_forward_wide(x9w, x3w, x1w, params, tn=None):
    """Run the block on channels-last "wide" slabs (bf16).

    x9w: (N*9, 9F) rows=(sample, sub-board b), cols = k*F + f
    x3w: (N, 9F)   cols = p*F + f
    x1w: (N, F)
    Returns wide bf16 slabs of the same (unpadded) shapes — chain StridedBlocks on this
    layout to avoid repeated NCHW<->wide repacking HBM traffic.
    """
    F = FILTERS
    W = 9 * F
    N = x3w.shape[0]
    bf16 = jnp.bfloat16

    default_tn, vmem_limit = _device_defaults()
    if tn is None:
        tn = min(default_tn, _round_up(N, 16))
        tn = max(16, _round_up(tn, 16))
        # keep >= 2 grid steps so ("parallel",) can use both v7x TensorCores
        while _round_up(N, tn) // tn < 2 and tn > 16:
            tn = max(16, _round_up(tn // 2, 16))
    else:
        tn = max(16, _round_up(tn, 16))    # multiple of 16: bf16 sublane packing

    npad = _round_up(N, tn)
    x9w = x9w.astype(bf16)
    x3w = x3w.astype(bf16)
    x1w = x1w.astype(bf16)
    if npad != N:
        # TODO(synk): fold padding into the producer / handle a ragged tail block instead.
        x9w = jnp.pad(x9w, ((0, (npad - N) * 9), (0, 0)))
        x3w = jnp.pad(x3w, ((0, npad - N), (0, 0)))
        x1w = jnp.pad(x1w, ((0, npad - N), (0, 0)))

    (w9a, w9pw, w93, w3x, w3c, w3a, w3pw, w31, wc1, bias) = params

    cp = dict(dimension_semantics=("parallel",))
    if vmem_limit is not None:
        cp["vmem_limit_bytes"] = vmem_limit

    const = lambda n: (0, 0)
    kernel = pl.pallas_call(
        strided_block_kernel,
        out_shape=(
            jax.ShapeDtypeStruct((npad * 9, W), bf16),
            jax.ShapeDtypeStruct((npad, W), bf16),
            jax.ShapeDtypeStruct((npad, F), bf16),
        ),
        grid=(npad // tn,),
        in_specs=[
            pl.BlockSpec((tn * 9, W), lambda n: (n, 0)),   # x9 wide
            pl.BlockSpec((tn, W), lambda n: (n, 0)),       # x3 wide
            pl.BlockSpec((tn, F), lambda n: (n, 0)),       # x1
            pl.BlockSpec((W, W), const),                   # w9a  (grouped+shuffle, BN folded)
            pl.BlockSpec((W, W), const),                   # w9pw (block-diag 1x1)
            pl.BlockSpec((W, F), const),                   # w93  (conv9to3)
            pl.BlockSpec((W, W), const),                   # w3x  (conv3 1x1, x3 half)
            pl.BlockSpec((F, F), const),                   # w3c  (conv3 1x1, conv9to3 half)
            pl.BlockSpec((W, W), const),                   # w3a  (grouped+shuffle)
            pl.BlockSpec((W, W), const),                   # w3pw (final 1x1)
            pl.BlockSpec((W, F), const),                   # w31  (conv3to1)
            pl.BlockSpec((2 * F, F), const),               # wc1  (compress1, stacked)
            pl.BlockSpec((8, W), const),                   # bias table (f32 BN shifts)
        ],
        out_specs=(
            pl.BlockSpec((tn * 9, W), lambda n: (n, 0)),
            pl.BlockSpec((tn, W), lambda n: (n, 0)),
            pl.BlockSpec((tn, F), lambda n: (n, 0)),
        ),
        compiler_params=pltpu.CompilerParams(**cp),
    )
    o9w, o3w, o1w = kernel(x9w, x3w, x1w, w9a, w9pw, w93, w3x, w3c, w3a,
                           w3pw, w31, wc1, bias)
    return o9w[:N * 9], o3w[:N], o1w[:N]


def strided_block_forward(x9, x3, x1, params, tn=None):
    """NCHW boundary wrapper: pack to wide layout once, run the kernel, unpack."""
    N, F = x9.shape[0], x9.shape[1]
    W = 9 * F
    f32 = jnp.float32

    x9w = (x9.reshape(N, F, 3, 3, 3, 3)
             .transpose(0, 2, 4, 3, 5, 1)          # [n, bh, bw, kh, kw, f]
             .reshape(N * 9, W))
    x3w = x3.transpose(0, 2, 3, 1).reshape(N, W)
    x1w = x1.reshape(N, F)

    o9w, o3w, o1w = strided_block_forward_wide(x9w, x3w, x1w, params, tn=tn)

    o9 = (o9w.astype(f32).reshape(N, 3, 3, 3, 3, F)
          .transpose(0, 5, 1, 3, 2, 4)
          .reshape(N, F, 9, 9))
    o3 = o3w.astype(f32).reshape(N, 3, 3, F).transpose(0, 3, 1, 2)
    o1 = o1w.astype(f32).reshape(N, F, 1, 1)
    return o9, o3, o1


# ------------------------- parameter construction ---------------------------

def init_params(key, F=FILTERS):
    ks = jax.random.split(key, 16)
    raw = dict(
        w9a=0.2 * jax.random.normal(ks[0], (9 * F, 1, 3, 3), jnp.float32),   # grouped conv
        w9pw=0.2 * jax.random.normal(ks[1], (F, F, 1), jnp.float32),         # "Conv1d" k=1
        w93=0.2 * jax.random.normal(ks[2], (F, F, 3, 3), jnp.float32),       # conv9to3
        w3x=0.2 * jax.random.normal(ks[3], (F, 2 * F, 1, 1), jnp.float32),   # conv3 1x1
        w3a=0.2 * jax.random.normal(ks[4], (9 * F, 1, 3, 3), jnp.float32),   # conv3 grouped
        w3pw=0.2 * jax.random.normal(ks[5], (F, F, 1, 1), jnp.float32),      # conv3 final 1x1
        w31=0.2 * jax.random.normal(ks[6], (F, F, 3, 3), jnp.float32),       # conv3to1
        wc1=0.2 * jax.random.normal(ks[7], (F, 2 * F, 1, 1), jnp.float32),   # compress1
    )
    bn = []
    for i in range(7):
        kk = jax.random.split(ks[8 + i], 4)
        gamma = jax.random.uniform(kk[0], (F,), jnp.float32, 0.5, 1.5)
        beta = 0.1 * jax.random.normal(kk[1], (F,), jnp.float32)
        mean = 0.1 * jax.random.normal(kk[2], (F,), jnp.float32)
        var = jax.random.uniform(kk[3], (F,), jnp.float32, 0.5, 1.5)
        bn.append((gamma, beta, mean, var))
    raw["bn"] = bn   # order: bn9a, bn9b, bn93, bn3a, bn3b, bn3c, bn31
    return raw


def pack_params(raw, F=FILTERS):
    W = 9 * F
    bf16 = jnp.bfloat16
    scale, shift = [], []
    for (g, b, m, v) in raw["bn"]:
        s = g / jnp.sqrt(v + BN_EPS)
        scale.append(s)
        shift.append(b - m * s)

    eye_f = jnp.eye(F, dtype=jnp.float32)
    eye_9 = jnp.eye(9, dtype=jnp.float32)

    def grouped_shuffle_wide(w_grouped, sc):
        # W[k*F+fi, d*F+fo] = w_grouped[9*fo + d, 0, k//3, k%3] * (fi==fo) * sc[fo]
        A = w_grouped.reshape(F, 9, 9)                     # [f, d, k]
        At = A.transpose(2, 1, 0)                          # [k, d, f]
        Wm = At[:, None, :, :] * eye_f[None, :, None, :]   # [k, fi, d, fo]
        return Wm.reshape(W, W) * jnp.tile(sc, 9)[None, :]

    def pointwise_wide(w_T, sc):
        # block-diagonal: same FxF channel-mix applied at each of the 9 positions
        return jnp.kron(eye_9, w_T * sc[None, :])

    def dense33(w, sc):
        # W[(kh*3+kw)*F + ci, co] = w[co, ci, kh, kw] * sc[co]
        return w.transpose(2, 3, 1, 0).reshape(W, F) * sc[None, :]

    w9a = grouped_shuffle_wide(raw["w9a"], scale[0])
    w9pw = pointwise_wide(raw["w9pw"][:, :, 0].T, scale[1])
    w93 = dense33(raw["w93"], scale[2])
    w3x = pointwise_wide(raw["w3x"][:, :F, 0, 0].T, scale[3])
    w3c = raw["w3x"][:, F:, 0, 0].T * scale[3][None, :]    # (F, F) conv9to3->conv3 bridge
    w3a = grouped_shuffle_wide(raw["w3a"], scale[4])
    w3pw = pointwise_wide(raw["w3pw"][:, :, 0, 0].T, scale[5])
    w31 = dense33(raw["w31"], scale[6])
    wc1 = jnp.concatenate([raw["wc1"][:, :F, 0, 0].T,      # (2F, F): [x1 rows; conv3to1 rows]
                           raw["wc1"][:, F:, 0, 0].T], axis=0)

    bias = jnp.zeros((8, W), jnp.float32)
    for i in (0, 1, 3, 4, 5):                  # applied on 9F-wide tensors
        bias = bias.at[i].set(jnp.tile(shift[i], 9))
    bias = bias.at[2, :F].set(shift[2])        # applied on F-wide tensor (conv9to3)
    bias = bias.at[6, :F].set(shift[6])        # applied on F-wide tensor (conv3to1)

    ws = (w9a, w9pw, w93, w3x, w3c, w3a, w3pw, w31, wc1)
    return tuple(w.astype(bf16) for w in ws) + (bias,)


# ------------------------- pure-JAX reference (NCHW) ------------------------

def reference_forward(x9, x3, x1, raw, F=FILTERS):
    def conv2d(x, w, stride=1, groups=1):
        return jax.lax.conv_general_dilated(
            x, w, window_strides=(stride, stride), padding="VALID",
            dimension_numbers=("NCHW", "OIHW", "NCHW"),
            feature_group_count=groups)

    def pixel_shuffle(x, r):
        n, c, h, w = x.shape
        x = x.reshape(n, c // (r * r), r, r, h, w)
        x = x.transpose(0, 1, 4, 2, 5, 3)
        return x.reshape(n, c // (r * r), h * r, w * r)

    def bn(x, p):
        g, b, m, v = p
        inv = g / jnp.sqrt(v + BN_EPS)
        return (x - m[None, :, None, None]) * inv[None, :, None, None] + b[None, :, None, None]

    relu = lambda t: jnp.maximum(t, 0.0)
    bn_p = raw["bn"]

    a = pixel_shuffle(conv2d(x9, raw["w9a"], stride=3, groups=F), 3)
    a = relu(bn(a, bn_p[0]))
    a = conv2d(a, raw["w9pw"][:, :, :, None])
    x9_ = relu(bn(a, bn_p[1]))

    b3 = relu(bn(conv2d(x9, raw["w93"], stride=3), bn_p[2]))

    c = jnp.concatenate([x3, b3], axis=1)
    c = relu(bn(conv2d(c, raw["w3x"]), bn_p[3]))
    c = pixel_shuffle(conv2d(c, raw["w3a"], stride=1, groups=F), 3)
    c = relu(bn(c, bn_p[4]))
    c = conv2d(c, raw["w3pw"])
    x3_ = relu(bn(c, bn_p[5]))

    d = relu(bn(conv2d(x3, raw["w31"]), bn_p[6]))
    e = jnp.concatenate([x1, d], axis=1)
    x1_ = conv2d(e, raw["wc1"])
    return x9 + x9_, x3 + x3_, x1 + x1_


if __name__ == "__main__":
    key = jax.random.PRNGKey(0)
    k_in, k_par = jax.random.split(key)
    kx9, kx3, kx1 = jax.random.split(k_in, 3)
    N, F = 40, FILTERS
    x9 = jax.random.normal(kx9, (N, F, 9, 9), jnp.float32)
    x3 = jax.random.normal(kx3, (N, F, 3, 3), jnp.float32)
    x1 = jax.random.normal(kx1, (N, F, 1, 1), jnp.float32)

    raw = init_params(k_par)
    params = pack_params(raw)

    # Default-tn path: device-specific tile is clamped (here to 32) so the grid has
    # >= 2 steps; exercises batching plus the zero-padded tail block (N=40 -> npad=64).
    o9, o3, o1 = jax.block_until_ready(strided_block_forward(x9, x3, x1, params))
    assert o9.shape == (N, F, 9, 9) and o3.shape == (N, F, 3, 3) and o1.shape == (N, F, 1, 1)

    r9, r3, r1 = reference_forward(x9, x3, x1, raw)
    # bf16 MXU + bf16 I/O slabs (f32 accumulation/epilogue): tolerance widened accordingly.
    for got, ref in ((o9, r9), (o3, r3), (o1, r1)):
        np.testing.assert_allclose(np.asarray(got), np.asarray(ref), rtol=4e-2, atol=4e-2)

    print("KERNEL_OK")
</pallas_src>

<mosaic_0001>
module attributes {stable_mosaic.version = 11 : i64} {
  func.func @strided_block_kernel(%arg0: i32, %arg1: memref<288x144xbf16, #tpu.memory_space<vmem>>, %arg2: memref<32x144xbf16, #tpu.memory_space<vmem>>, %arg3: memref<32x16xbf16, #tpu.memory_space<vmem>>, %arg4: memref<144x144xbf16, #tpu.memory_space<vmem>>, %arg5: memref<144x144xbf16, #tpu.memory_space<vmem>>, %arg6: memref<144x16xbf16, #tpu.memory_space<vmem>>, %arg7: memref<144x144xbf16, #tpu.memory_space<vmem>>, %arg8: memref<16x16xbf16, #tpu.memory_space<vmem>>, %arg9: memref<144x144xbf16, #tpu.memory_space<vmem>>, %arg10: memref<144x144xbf16, #tpu.memory_space<vmem>>, %arg11: memref<144x16xbf16, #tpu.memory_space<vmem>>, %arg12: memref<32x16xbf16, #tpu.memory_space<vmem>>, %arg13: memref<8x144xf32, #tpu.memory_space<vmem>>, %arg14: memref<288x144xbf16, #tpu.memory_space<vmem>>, %arg15: memref<32x144xbf16, #tpu.memory_space<vmem>>, %arg16: memref<32x16xbf16, #tpu.memory_space<vmem>>) attributes {dimension_semantics = [#tpu.dimension_semantics<parallel>], iteration_bounds = array<i64: 2>, scalar_prefetch = 0 : i64, scratch_operands = 0 : i64, tpu.core_type = #tpu.core_type<tc>, window_params = [{transform_indices = @transform_0, window_bounds = array<i64: 288, 144>}, {transform_indices = @transform_1, window_bounds = array<i64: 32, 144>}, {transform_indices = @transform_2, window_bounds = array<i64: 32, 16>}, {pipeline_mode = #tpu.pipeline_mode<synchronous>, transform_indices = @transform_3, window_bounds = array<i64: 144, 144>}, {pipeline_mode = #tpu.pipeline_mode<synchronous>, transform_indices = @transform_4, window_bounds = array<i64: 144, 144>}, {pipeline_mode = #tpu.pipeline_mode<synchronous>, transform_indices = @transform_5, window_bounds = array<i64: 144, 16>}, {pipeline_mode = #tpu.pipeline_mode<synchronous>, transform_indices = @transform_6, window_bounds = array<i64: 144, 144>}, {pipeline_mode = #tpu.pipeline_mode<synchronous>, transform_indices = @transform_7, window_bounds = array<i64: 16, 16>}, {pipeline_mode = #tpu.pipeline_mode<synchronous>, transform_indices = @transform_8, window_bounds = array<i64: 144, 144>}, {pipeline_mode = #tpu.pipeline_mode<synchronous>, transform_indices = @transform_9, window_bounds = array<i64: 144, 144>}, {pipeline_mode = #tpu.pipeline_mode<synchronous>, transform_indices = @transform_10, window_bounds = array<i64: 144, 16>}, {pipeline_mode = #tpu.pipeline_mode<synchronous>, transform_indices = @transform_11, window_bounds = array<i64: 32, 16>}, {pipeline_mode = #tpu.pipeline_mode<synchronous>, transform_indices = @transform_12, window_bounds = array<i64: 8, 144>}, {transform_indices = @transform_13, window_bounds = array<i64: 288, 144>}, {transform_indices = @transform_14, window_bounds = array<i64: 32, 144>}, {transform_indices = @transform_15, window_bounds = array<i64: 32, 16>}]} {
    %c0 = arith.constant 0 : index
    %c0_0 = arith.constant 0 : index
    %0 = vector.load %arg1[%c0, %c0_0] : memref<288x144xbf16, #tpu.memory_space<vmem>>, vector<288x144xbf16>
    %c0_1 = arith.constant 0 : index
    %c0_2 = arith.constant 0 : index
    %1 = vector.load %arg2[%c0_1, %c0_2] : memref<32x144xbf16, #tpu.memory_space<vmem>>, vector<32x144xbf16>
    %c0_3 = arith.constant 0 : index
    %c0_4 = arith.constant 0 : index
    %2 = vector.load %arg3[%c0_3, %c0_4] : memref<32x16xbf16, #tpu.memory_space<vmem>>, vector<32x16xbf16>
    %c0_5 = arith.constant 0 : index
    %c0_6 = arith.constant 0 : index
    %3 = vector.load %arg4[%c0_5, %c0_6] : memref<144x144xbf16, #tpu.memory_space<vmem>>, vector<144x144xbf16>
    %cst = arith.constant dense<0.000000e+00> : vector<288x144xf32>
    %4 = tpu.matmul %0, %3, %cst {dimension_numbers = #tpu.dot_dimension_numbers<[1], [0], [0], [1], [0, 0, 1, 1], [], []>} : vector<288x144xbf16>, vector<144x144xbf16>, vector<288x144xf32> -> vector<288x144xf32>
    %c0_7 = arith.constant 0 : index
    %c0_8 = arith.constant 0 : index
    %5 = vector.load %arg13[%c0_7, %c0_8] : memref<8x144xf32, #tpu.memory_space<vmem>>, vector<1x144xf32>
    %6 = vector.broadcast %5 : vector<1x144xf32> to vector<288x144xf32>
    %7 = arith.addf %4, %6 : vector<288x144xf32>
    %cst_9 = arith.constant 0.000000e+00 : f32
    %8 = vector.broadcast %cst_9 : f32 to vector<288x144xf32>
    %9 = arith.maximumf %7, %8 : vector<288x144xf32>
    %10 = arith.truncf %9 : vector<288x144xf32> to vector<288x144xbf16>
    %c0_10 = arith.constant 0 : index
    %c0_11 = arith.constant 0 : index
    %11 = vector.load %arg5[%c0_10, %c0_11] : memref<144x144xbf16, #tpu.memory_space<vmem>>, vector<144x144xbf16>
    %cst_12 = arith.constant dense<0.000000e+00> : vector<288x144xf32>
    %12 = tpu.matmul %10, %11, %cst_12 {dimension_numbers = #tpu.dot_dimension_numbers<[1], [0], [0], [1], [0, 0, 1, 1], [], []>} : vector<288x144xbf16>, vector<144x144xbf16>, vector<288x144xf32> -> vector<288x144xf32>
    %c1 = arith.constant 1 : index
    %c0_13 = arith.constant 0 : index
    %13 = vector.load %arg13[%c1, %c0_13] : memref<8x144xf32, #tpu.memory_space<vmem>>, vector<1x144xf32>
    %14 = vector.broadcast %13 : vector<1x144xf32> to vector<288x144xf32>
    %15 = arith.addf %12, %14 : vector<288x144xf32>
    %cst_14 = arith.constant 0.000000e+00 : f32
    %16 = vector.broadcast %cst_14 : f32 to vector<288x144xf32>
    %17 = arith.maximumf %15, %16 : vector<288x144xf32>
    %18 = arith.extf %0 : vector<288x144xbf16> to vector<288x144xf32>
    %19 = arith.addf %18, %17 : vector<288x144xf32>
    %20 = arith.truncf %19 : vector<288x144xf32> to vector<288x144xbf16>
    %c0_15 = arith.constant 0 : index
    %c0_16 = arith.constant 0 : index
    %21 = vector.load %arg14[%c0_15, %c0_16] : memref<288x144xbf16, #tpu.memory_space<vmem>>, vector<288x144xbf16>
    tpu.vector_store %arg14[%c0_15, %c0_16], %20 {strides = array<i32>} : memref<288x144xbf16, #tpu.memory_space<vmem>>, vector<288x144xbf16>,
    %c0_17 = arith.constant 0 : index
    %c0_18 = arith.constant 0 : index
    %22 = vector.load %arg6[%c0_17, %c0_18] : memref<144x16xbf16, #tpu.memory_space<vmem>>, vector<144x16xbf16>
    %cst_19 = arith.constant dense<0.000000e+00> : vector<288x16xf32>
    %23 = tpu.matmul %0, %22, %cst_19 {dimension_numbers = #tpu.dot_dimension_numbers<[1], [0], [0], [1], [0, 0, 1, 1], [], []>} : vector<288x144xbf16>, vector<144x16xbf16>, vector<288x16xf32> -> vector<288x16xf32>
    %c2 = arith.constant 2 : index
    %c0_20 = arith.constant 0 : index
    %24 = vector.load %arg13[%c2, %c0_20] : memref<8x144xf32, #tpu.memory_space<vmem>>, vector<1x16xf32>
    %25 = vector.broadcast %24 : vector<1x16xf32> to vector<288x16xf32>
    %26 = arith.addf %23, %25 : vector<288x16xf32>
    %cst_21 = arith.constant 0.000000e+00 : f32
    %27 = vector.broadcast %cst_21 : f32 to vector<288x16xf32>
    %28 = arith.maximumf %26, %27 : vector<288x16xf32>
    %c0_22 = arith.constant 0 : index
    %c0_23 = arith.constant 0 : index
    %29 = vector.load %arg7[%c0_22, %c0_23] : memref<144x144xbf16, #tpu.memory_space<vmem>>, vector<144x144xbf16>
    %cst_24 = arith.constant dense<0.000000e+00> : vector<32x144xf32>
    %30 = tpu.matmul %1, %29, %cst_24 {dimension_numbers = #tpu.dot_dimension_numbers<[1], [0], [0], [1], [0, 0, 1, 1], [], []>} : vector<32x144xbf16>, vector<144x144xbf16>, vector<32x144xf32> -> vector<32x144xf32>
    %31 = arith.truncf %28 : vector<288x16xf32> to vector<288x16xbf16>
    %c0_25 = arith.constant 0 : index
    %c0_26 = arith.constant 0 : index
    %32 = vector.load %arg8[%c0_25, %c0_26] : memref<16x16xbf16, #tpu.memory_space<vmem>>, vector<16x16xbf16>
    %cst_27 = arith.constant dense<0.000000e+00> : vector<288x16xf32>
    %33 = tpu.matmul %31, %32, %cst_27 {dimension_numbers = #tpu.dot_dimension_numbers<[1], [0], [0], [1], [0, 0, 1, 1], [], []>} : vector<288x16xbf16>, vector<16x16xbf16>, vector<288x16xf32> -> vector<288x16xf32>
    %34 = vector.shape_cast %33 : vector<288x16xf32> to vector<32x9x16xf32>
    %35 = vector.extract_strided_slice %34 {offsets = [0, 0, 0], sizes = [32, 1, 16], strides = [1, 1, 1]} : vector<32x9x16xf32> to vector<32x1x16xf32>
    %36 = vector.shape_cast %35 : vector<32x1x16xf32> to vector<32x16xf32>
    %37 = vector.extract_strided_slice %34 {offsets = [0, 1, 0], sizes = [32, 1, 16], strides = [1, 1, 1]} : vector<32x9x16xf32> to vector<32x1x16xf32>
    %38 = vector.shape_cast %37 : vector<32x1x16xf32> to vector<32x16xf32>
    %39 = vector.extract_strided_slice %34 {offsets = [0, 2, 0], sizes = [32, 1, 16], strides = [1, 1, 1]} : vector<32x9x16xf32> to vector<32x1x16xf32>
    %40 = vector.shape_cast %39 : vector<32x1x16xf32> to vector<32x16xf32>
    %41 = vector.extract_strided_slice %34 {offsets = [0, 3, 0], sizes = [32, 1, 16], strides = [1, 1, 1]} : vector<32x9x16xf32> to vector<32x1x16xf32>
    %42 = vector.shape_cast %41 : vector<32x1x16xf32> to vector<32x16xf32>
    %43 = vector.extract_strided_slice %34 {offsets = [0, 4, 0], sizes = [32, 1, 16], strides = [1, 1, 1]} : vector<32x9x16xf32> to vector<32x1x16xf32>
    %44 = vector.shape_cast %43 : vector<32x1x16xf32> to vector<32x16xf32>
    %45 = vector.extract_strided_slice %34 {offsets = [0, 5, 0], sizes = [32, 1, 16], strides = [1, 1, 1]} : vector<32x9x16xf32> to vector<32x1x16xf32>
    %46 = vector.shape_cast %45 : vector<32x1x16xf32> to vector<32x16xf32>
    %47 = vector.extract_strided_slice %34 {offsets = [0, 6, 0], sizes = [32, 1, 16], strides = [1, 1, 1]} : vector<32x9x16xf32> to vector<32x1x16xf32>
    %48 = vector.shape_cast %47 : vector<32x1x16xf32> to vector<32x16xf32>
    %49 = vector.extract_strided_slice %34 {offsets = [0, 7, 0], sizes = [32, 1, 16], strides = [1, 1, 1]} : vector<32x9x16xf32> to vector<32x1x16xf32>
    %50 = vector.shape_cast %49 : vector<32x1x16xf32> to vector<32x16xf32>
    %51 = vector.extract_strided_slice %34 {offsets = [0, 8, 0], sizes = [32, 1, 16], strides = [1, 1, 1]} : vector<32x9x16xf32> to vector<32x1x16xf32>
    %52 = vector.shape_cast %51 : vector<32x1x16xf32> to vector<32x16xf32>
    %53 = tpu.concatenate %36, %38, %40, %42, %44, %46, %48, %50, %52 in 1 : vector<32x16xf32>, vector<32x16xf32>, vector<32x16xf32>, vector<32x16xf32>, vector<32x16xf32>, vector<32x16xf32>, vector<32x16xf32>, vector<32x16xf32>, vector<32x16xf32> -> vector<32x144xf32>
    %54 = arith.addf %30, %53 : vector<32x144xf32>
    %c3 = arith.constant 3 : index
    %c0_28 = arith.constant 0 : index
    %55 = vector.load %arg13[%c3, %c0_28] : memref<8x144xf32, #tpu.memory_space<vmem>>, vector<1x144xf32>
    %56 = vector.broadcast %55 : vector<1x144xf32> to vector<32x144xf32>
    %57 = arith.addf %54, %56 : vector<32x144xf32>
    %cst_29 = arith.constant 0.000000e+00 : f32
    %58 = vector.broadcast %cst_29 : f32 to vector<32x144xf32>
    %59 = arith.maximumf %57, %58 : vector<32x144xf32>
    %60 = arith.truncf %59 : vector<32x144xf32> to vector<32x144xbf16>
    %c0_30 = arith.constant 0 : index
    %c0_31 = arith.constant 0 : index
    %61 = vector.load %arg9[%c0_30, %c0_31] : memref<144x144xbf16, #tpu.memory_space<vmem>>, vector<144x144xbf16>
    %cst_32 = arith.constant dense<0.000000e+00> : vector<32x144xf32>
    %62 = tpu.matmul %60, %61, %cst_32 {dimension_numbers = #tpu.dot_dimension_numbers<[1], [0], [0], [1], [0, 0, 1, 1], [], []>} : vector<32x144xbf16>, vector<144x144xbf16>, vector<32x144xf32> -> vector<32x144xf32>
    %c4 = arith.constant 4 : index
    %c0_33 = arith.constant 0 : index
    %63 = vector.load %arg13[%c4, %c0_33] : memref<8x144xf32, #tpu.memory_space<vmem>>, vector<1x144xf32>
    %64 = vector.broadcast %63 : vector<1x144xf32> to vector<32x144xf32>
    %65 = arith.addf %62, %64 : vector<32x144xf32>
    %cst_34 = arith.constant 0.000000e+00 : f32
    %66 = vector.broadcast %cst_34 : f32 to vector<32x144xf32>
    %67 = arith.maximumf %65, %66 : vector<32x144xf32>
    %68 = arith.truncf %67 : vector<32x144xf32> to vector<32x144xbf16>
    %c0_35 = arith.constant 0 : index
    %c0_36 = arith.constant 0 : index
    %69 = vector.load %arg10[%c0_35, %c0_36] : memref<144x144xbf16, #tpu.memory_space<vmem>>, vector<144x144xbf16>
    %cst_37 = arith.constant dense<0.000000e+00> : vector<32x144xf32>
    %70 = tpu.matmul %68, %69, %cst_37 {dimension_numbers = #tpu.dot_dimension_numbers<[1], [0], [0], [1], [0, 0, 1, 1], [], []>} : vector<32x144xbf16>, vector<144x144xbf16>, vector<32x144xf32> -> vector<32x144xf32>
    %c5 = arith.constant 5 : index
    %c0_38 = arith.constant 0 : index
    %71 = vector.load %arg13[%c5, %c0_38] : memref<8x144xf32, #tpu.memory_space<vmem>>, vector<1x144xf32>
    %72 = vector.broadcast %71 : vector<1x144xf32> to vector<32x144xf32>
    %73 = arith.addf %70, %72 : vector<32x144xf32>
    %cst_39 = arith.constant 0.000000e+00 : f32
    %74 = vector.broadcast %cst_39 : f32 to vector<32x144xf32>
    %75 = arith.maximumf %73, %74 : vector<32x144xf32>
    %76 = arith.extf %1 : vector<32x144xbf16> to vector<32x144xf32>
    %77 = arith.addf %76, %75 : vector<32x144xf32>
    %78 = arith.truncf %77 : vector<32x144xf32> to vector<32x144xbf16>
    %c0_40 = arith.constant 0 : index
    %c0_41 = arith.constant 0 : index
    %79 = vector.load %arg15[%c0_40, %c0_41] : memref<32x144xbf16, #tpu.memory_space<vmem>>, vector<32x144xbf16>
    tpu.vector_store %arg15[%c0_40, %c0_41], %78 {strides = array<i32>} : memref<32x144xbf16, #tpu.memory_space<vmem>>, vector<32x144xbf16>,
    %c0_42 = arith.constant 0 : index
    %c0_43 = arith.constant 0 : index
    %80 = vector.load %arg11[%c0_42, %c0_43] : memref<144x16xbf16, #tpu.memory_space<vmem>>, vector<144x16xbf16>
    %cst_44 = arith.constant dense<0.000000e+00> : vector<32x16xf32>
    %81 = tpu.matmul %1, %80, %cst_44 {dimension_numbers = #tpu.dot_dimension_numbers<[1], [0], [0], [1], [0, 0, 1, 1], [], []>} : vector<32x144xbf16>, vector<144x16xbf16>, vector<32x16xf32> -> vector<32x16xf32>
    %c6 = arith.constant 6 : index
    %c0_45 = arith.constant 0 : index
    %82 = vector.load %arg13[%c6, %c0_45] : memref<8x144xf32, #tpu.memory_space<vmem>>, vector<1x16xf32>
    %83 = vector.broadcast %82 : vector<1x16xf32> to vector<32x16xf32>
    %84 = arith.addf %81, %83 : vector<32x16xf32>
    %cst_46 = arith.constant 0.000000e+00 : f32
    %85 = vector.broadcast %cst_46 : f32 to vector<32x16xf32>
    %86 = arith.maximumf %84, %85 : vector<32x16xf32>
    %87 = arith.truncf %86 : vector<32x16xf32> to vector<32x16xbf16>
    %88 = tpu.concatenate %2, %87 in 1 : vector<32x16xbf16>, vector<32x16xbf16> -> vector<32x32xbf16>
    %89 = arith.extf %2 : vector<32x16xbf16> to vector<32x16xf32>
    %c0_47 = arith.constant 0 : index
    %c0_48 = arith.constant 0 : index
    %90 = vector.load %arg12[%c0_47, %c0_48] : memref<32x16xbf16, #tpu.memory_space<vmem>>, vector<32x16xbf16>
    %cst_49 = arith.constant dense<0.000000e+00> : vector<32x16xf32>
    %91 = tpu.matmul %88, %90, %cst_49 {dimension_numbers = #tpu.dot_dimension_numbers<[1], [0], [0], [1], [0, 0, 1, 1], [], []>} : vector<32x32xbf16>, vector<32x16xbf16>, vector<32x16xf32> -> vector<32x16xf32>
    %92 = arith.addf %89, %91 : vector<32x16xf32>
    %93 = arith.truncf %92 : vector<32x16xf32> to vector<32x16xbf16>
    %c0_50 = arith.constant 0 : index
    %c0_51 = arith.constant 0 : index
    %94 = vector.load %arg16[%c0_50, %c0_51] : memref<32x16xbf16, #tpu.memory_space<vmem>>, vector<32x16xbf16>
    tpu.vector_store %arg16[%c0_50, %c0_51], %93 {strides = array<i32>} : memref<32x16xbf16, #tpu.memory_space<vmem>>, vector<32x16xbf16>,
    return
  }
  func.func @transform_0(%arg0: i32) -> (i32, i32) {
    %c0_i32 = arith.constant 0 : i32
    %c0_i32_0 = arith.constant 0 : i32
    return %arg0, %c0_i32 : i32, i32
  }
  func.func @transform_1(%arg0: i32) -> (i32, i32) {
    %c0_i32 = arith.constant 0 : i32
    %c0_i32_0 = arith.constant 0 : i32
    return %arg0, %c0_i32 : i32, i32
  }
  func.func @transform_2(%arg0: i32) -> (i32, i32) {
    %c0_i32 = arith.constant 0 : i32
    %c0_i32_0 = arith.constant 0 : i32
    return %arg0, %c0_i32 : i32, i32
  }
  func.func @transform_3(%arg0: i32) -> (i32, i32) {
    %c0_i32 = arith.constant 0 : i32
    %c0_i32_0 = arith.constant 0 : i32
    %c0_i32_1 = arith.constant 0 : i32
    return %c0_i32, %c0_i32_0 : i32, i32
  }
  func.func @transform_4(%arg0: i32) -> (i32, i32) {
    %c0_i32 = arith.constant 0 : i32
    %c0_i32_0 = arith.constant 0 : i32
    %c0_i32_1 = arith.constant 0 : i32
    return %c0_i32, %c0_i32_0 : i32, i32
  }
  func.func @transform_5(%arg0: i32) -> (i32, i32) {
    %c0_i32 = arith.constant 0 : i32
    %c0_i32_0 = arith.constant 0 : i32
    %c0_i32_1 = arith.constant 0 : i32
    return %c0_i32, %c0_i32_0 : i32, i32
  }
  func.func @transform_6(%arg0: i32) -> (i32, i32) {
    %c0_i32 = arith.constant 0 : i32
    %c0_i32_0 = arith.constant 0 : i32
    %c0_i32_1 = arith.constant 0 : i32
    return %c0_i32, %c0_i32_0 : i32, i32
  }
  func.func @transform_7(%arg0: i32) -> (i32, i32) {
    %c0_i32 = arith.constant 0 : i32
    %c0_i32_0 = arith.constant 0 : i32
    %c0_i32_1 = arith.constant 0 : i32
    return %c0_i32, %c0_i32_0 : i32, i32
  }
  func.func @transform_8(%arg0: i32) -> (i32, i32) {
    %c0_i32 = arith.constant 0 : i32
    %c0_i32_0 = arith.constant 0 : i32
    %c0_i32_1 = arith.constant 0 : i32
    return %c0_i32, %c0_i32_0 : i32, i32
  }
  func.func @transform_9(%arg0: i32) -> (i32, i32) {
    %c0_i32 = arith.constant 0 : i32
    %c0_i32_0 = arith.constant 0 : i32
    %c0_i32_1 = arith.constant 0 : i32
    return %c0_i32, %c0_i32_0 : i32, i32
  }
  func.func @transform_10(%arg0: i32) -> (i32, i32) {
    %c0_i32 = arith.constant 0 : i32
    %c0_i32_0 = arith.constant 0 : i32
    %c0_i32_1 = arith.constant 0 : i32
    return %c0_i32, %c0_i32_0 : i32, i32
  }
  func.func @transform_11(%arg0: i32) -> (i32, i32) {
    %c0_i32 = arith.constant 0 : i32
    %c0_i32_0 = arith.constant 0 : i32
    %c0_i32_1 = arith.constant 0 : i32
    return %c0_i32, %c0_i32_0 : i32, i32
  }
  func.func @transform_12(%arg0: i32) -> (i32, i32) {
    %c0_i32 = arith.constant 0 : i32
    %c0_i32_0 = arith.constant 0 : i32
    %c0_i32_1 = arith.constant 0 : i32
    return %c0_i32, %c0_i32_0 : i32, i32
  }
  func.func @transform_13(%arg0: i32) -> (i32, i32) {
    %c0_i32 = arith.constant 0 : i32
    %c0_i32_0 = arith.constant 0 : i32
    return %arg0, %c0_i32 : i32, i32
  }
  func.func @transform_14(%arg0: i32) -> (i32, i32) {
    %c0_i32 = arith.constant 0 : i32
    %c0_i32_0 = arith.constant 0 : i32
    return %arg0, %c0_i32 : i32, i32
  }
  func.func @transform_15(%arg0: i32) -> (i32, i32) {
    %c0_i32 = arith.constant 0 : i32
    %c0_i32_0 = arith.constant 0 : i32
    return %arg0, %c0_i32 : i32, i32
  }
}

</mosaic_0001>

<llo_original>
// kernel: tpu_custom_call.1
$region0: #{tpu_custom_call.1}
  #allocation0 [shape = 'u32[]', space=smem, size = 0x4, offset = 0x4, fixed_abs, tag = 'smem constant byte address 0x4 - core index']
  #allocation1 [shape = 'u32[144,128]{1,0:T(1,128)}', space=vmem, size = 0x12000, scoped, tag = 'internal scratch']
  %s0 = inlined_call_operand.vmem [shape: bf16[576,144], index: 0, kind: input, shape index: {}]
  %s1 = inlined_call_operand.vmem [shape: bf16[64,144], index: 1, kind: input, shape index: {}]
  %s2 = inlined_call_operand.vmem [shape: bf16[64,16], index: 2, kind: input, shape index: {}]
  %s3 = inlined_call_operand.vmem [shape: bf16[144,144], index: 3, kind: input, shape index: {}]
  %s4 = inlined_call_operand.vmem [shape: bf16[144,144], index: 4, kind: input, shape index: {}]
  %s5 = inlined_call_operand.vmem [shape: bf16[144,16], index: 5, kind: input, shape index: {}]
  %s6 = inlined_call_operand.vmem [shape: bf16[144,144], index: 6, kind: input, shape index: {}]
  %s7 = inlined_call_operand.vmem [shape: bf16[16,16], index: 7, kind: input, shape index: {}]
  %s8 = inlined_call_operand.vmem [shape: bf16[144,144], index: 8, kind: input, shape index: {}]
  %s9 = inlined_call_operand.vmem [shape: bf16[144,144], index: 9, kind: input, shape index: {}]
  %s10 = inlined_call_operand.vmem [shape: bf16[144,16], index: 10, kind: input, shape index: {}]
  %s11 = inlined_call_operand.vmem [shape: bf16[32,16], index: 11, kind: input, shape index: {}]
  %s12 = inlined_call_operand.vmem [shape: f32[8,144], index: 12, kind: input, shape index: {}]
  %s13 = inlined_call_operand.vmem [shape: bf16[576,144], index: 13, kind: output, shape index: {0}]
  %s14 = inlined_call_operand.hbm [shape: bf16[64,144], index: 14, kind: output, shape index: {1}]
  %s15 = inlined_call_operand.vmem [shape: bf16[64,16], index: 15, kind: output, shape index: {2}]
  %16 = xla_tuple %s13, %s14, %s15
  %s17 = sld [smem:[#allocation0]]
  $region101: #{tpu_custom_call.1} parent=0
    _
  %s19 = ssub.s32 1, %s17
  %s20 = scalar_select 0, %s19, %s17
  $region1: #{tpu_custom_call.1} parent=0
    #allocation2 [shape = 'u8[32768]{0}', space=vmem, size = 0x8000, scoped, tag = 'output window, operand 1']
    #allocation3 [shape = 's32[2]{0}', space=sflag, size = 0x8, scoped, tag = 'scoped memory for tpu_custom_call.1']
    %21 = vsyncpa [#allocation3], 0
    %s22 = scalar_lea.sflag [#allocation3], 1
    %23 = vsyncpa %s22, 0
    loop: start=0, step=1, limit=4
    $region2: #{tpu_custom_call.1} parent=1 // loop_pre_header
      _
    $region3: #{tpu_custom_call.1} parent=1 // loop_header
      %s25 = sphi 0, %s29
      %p26 = scmp.ge.s32.totalorder %s25, 4
      %s35 = sphi 0, %s37
      %s38 = sphi 0, %s35
      %s39 = sphi 0, %s38
      %s55 = sphi 0, %s39
      %s61 = sphi 0, %s63
      %s64 = sphi 0, %s61
      %s65 = sphi 0, %s64
      %s81 = sphi 0, %s65
      %s87 = sphi 0, %s89
      %s90 = sphi 0, %s87
      %s91 = sphi 0, %s90
      %s107 = sphi 0, %s91
      %s111 = sphi 0, %s111
      %s113 = sphi 0, %s111
      %s114 = sphi 0, %s113
      %s128 = sphi 0, %s114
      %s132 = sphi 0, %s132
      %s134 = sphi 0, %s132
      %s135 = sphi 0, %s134
      %s149 = sphi 0, %s135
      %s153 = sphi 0, %s153
      %s155 = sphi 0, %s153
      %s156 = sphi 0, %s155
      %s170 = sphi 0, %s156
      %s174 = sphi 0, %s174
      %s176 = sphi 0, %s174
      %s177 = sphi 0, %s176
      %s191 = sphi 0, %s177
      %s195 = sphi 0, %s195
      %s197 = sphi 0, %s195
      %s198 = sphi 0, %s197
      %s212 = sphi 0, %s198
      %s216 = sphi 0, %s216
      %s218 = sphi 0, %s216
      %s219 = sphi 0, %s218
      %s233 = sphi 0, %s219
      %s237 = sphi 0, %s237
      %s239 = sphi 0, %s237
      %s240 = sphi 0, %s239
      %s254 = sphi 0, %s240
      %s258 = sphi 0, %s258
      %s260 = sphi 0, %s258
      %s261 = sphi 0, %s260
      %s275 = sphi 0, %s261
      %s279 = sphi 0, %s279
      %s281 = sphi 0, %s279
      %s282 = sphi 0, %s281
      %s296 = sphi 0, %s282
      %s300 = sphi 0, %s300
      %s302 = sphi 0, %s300
      %s303 = sphi 0, %s302
      %s317 = sphi 0, %s303
      %s323 = sphi 0, %s325
      %s326 = sphi 0, %s323
      %s327 = sphi 0, %s326
      %s343 = sphi 0, %s327
      %s349 = sphi 0, %s351
      %s352 = sphi 0, %s349
      %s353 = sphi 0, %s352
      %s369 = sphi 0, %s353
      %s375 = sphi 0, %s377
      %s378 = sphi 0, %s375
      %s379 = sphi 0, %s378
      %s395 = sphi 0, %s379
    $region4: #{tpu_custom_call.1} parent=1 // loop_header_branch
      %28 = sbr.rel (%p26) target = $region8
    $region5: #{tpu_custom_call.1} parent=1 // loop_body
      %s30 = ssub.s32 %s25, 1
      %s31 = ssub.s32 %s25, 2
      %s32 = sadd.s32 %s25, 1
      %s33 = ssub.s32 %s25, %s32
      %p34 = scmp.eq.s32.totalorder %s33, 0
      %s36 = sadd.s32 %s35, 1
      %s37 = scalar_select %p34, %s35, %s36
      %p40 = pneg %p34
      %p41 = scmp.eq.s32.totalorder %s25, 1
      %p42 = por %p40, %p41
      %p43 = scmp.ne.s32.totalorder %s35, %s38
      %p44 = scmp.eq.s32.totalorder %s25, 0
      %p45 = por %p43, %p44
      %p46 = scmp.ne.s32.totalorder %s35, %s38
      %p47 = scmp.eq.s32.totalorder %s30, 1
      %p48 = por %p46, %p47
      %p49 = scmp.ne.s32.totalorder %s38, %s39
      %p50 = scmp.eq.s32.totalorder %s30, 0
      %p51 = por %p49, %p50
      %p52 = scmp.ne.s32.totalorder %s38, %s39
      %p53 = scmp.eq.s32.totalorder %s31, 1
      %p54 = por %p52, %p53
      %p56 = scmp.ne.s32.totalorder %s39, %s55
      %p57 = scmp.eq.s32.totalorder %s31, 0
      %p58 = por %p56, %p57
      %s59 = ssub.s32 %s25, %s32
      %p60 = scmp.eq.s32.totalorder %s59, 0
      %s62 = sadd.s32 %s61, 1
      %s63 = scalar_select %p60, %s61, %s62
      %p66 = pneg %p60
      %p67 = scmp.eq.s32.totalorder %s25, 1
      %p68 = por %p66, %p67
      %p69 = scmp.ne.s32.totalorder %s61, %s64
      %p70 = scmp.eq.s32.totalorder %s25, 0
      %p71 = por %p69, %p70
      %p72 = scmp.ne.s32.totalorder %s61, %s64
      %p73 = scmp.eq.s32.totalorder %s30, 1
      %p74 = por %p72, %p73
      %p75 = scmp.ne.s32.totalorder %s64, %s65
      %p76 = scmp.eq.s32.totalorder %s30, 0
      %p77 = por %p75, %p76
      %p78 = scmp.ne.s32.totalorder %s64, %s65
      %p79 = scmp.eq.s32.totalorder %s31, 1
      %p80 = por %p78, %p79
      %p82 = scmp.ne.s32.totalorder %s65, %s81
      %p83 = scmp.eq.s32.totalorder %s31, 0
      %p84 = por %p82, %p83
      %s85 = ssub.s32 %s25, %s32
      %p86 = scmp.eq.s32.totalorder %s85, 0
      %s88 = sadd.s32 %s87, 1
      %s89 = scalar_select %p86, %s87, %s88
      %p92 = pneg %p86
      %p93 = scmp.eq.s32.totalorder %s25, 1
      %p94 = por %p92, %p93
      %p95 = scmp.ne.s32.totalorder %s87, %s90
      %p96 = scmp.eq.s32.totalorder %s25, 0
      %p97 = por %p95, %p96
      %p98 = scmp.ne.s32.totalorder %s87, %s90
      %p99 = scmp.eq.s32.totalorder %s30, 1
      %p100 = por %p98, %p99
      %p101 = scmp.ne.s32.totalorder %s90, %s91
      %p102 = scmp.eq.s32.totalorder %s30, 0
      %p103 = por %p101, %p102
      %p104 = scmp.ne.s32.totalorder %s90, %s91
      %p105 = scmp.eq.s32.totalorder %s31, 1
      %p106 = por %p104, %p105
      %p108 = scmp.ne.s32.totalorder %s91, %s107
      %p109 = scmp.eq.s32.totalorder %s31, 0
      %p110 = por %p108, %p109
      %s112 = sadd.s32 %s111, 1
      %p115 = scmp.eq.s32.totalorder %s25, 1
      %p116 = scmp.ne.s32.totalorder %s111, %s113
      %p117 = scmp.eq.s32.totalorder %s25, 0
      %p118 = por %p116, %p117
      %p119 = scmp.ne.s32.totalorder %s111, %s113
      %p120 = scmp.eq.s32.totalorder %s30, 1
      %p121 = por %p119, %p120
      %p122 = scmp.ne.s32.totalorder %s113, %s114
      %p123 = scmp.eq.s32.totalorder %s30, 0
      %p124 = por %p122, %p123
      %p125 = scmp.ne.s32.totalorder %s113, %s114
      %p126 = scmp.eq.s32.totalorder %s31, 1
      %p127 = por %p125, %p126
      %p129 = scmp.ne.s32.totalorder %s114, %s128
      %p130 = scmp.eq.s32.totalorder %s31, 0
      %p131 = por %p129, %p130
      %s133 = sadd.s32 %s132, 1
      %p136 = scmp.eq.s32.totalorder %s25, 1
      %p137 = scmp.ne.s32.totalorder %s132, %s134
      %p138 = scmp.eq.s32.totalorder %s25, 0
      %p139 = por %p137, %p138
      %p140 = scmp.ne.s32.totalorder %s132, %s134
      %p141 = scmp.eq.s32.totalorder %s30, 1
      %p142 = por %p140, %p141
      %p143 = scmp.ne.s32.totalorder %s134, %s135
      %p144 = scmp.eq.s32.totalorder %s30, 0
      %p145 = por %p143, %p144
      %p146 = scmp.ne.s32.totalorder %s134, %s135
      %p147 = scmp.eq.s32.totalorder %s31, 1
      %p148 = por %p146, %p147
      %p150 = scmp.ne.s32.totalorder %s135, %s149
      %p151 = scmp.eq.s32.totalorder %s31, 0
      %p152 = por %p150, %p151
      %s154 = sadd.s32 %s153, 1
      %p157 = scmp.eq.s32.totalorder %s25, 1
      %p158 = scmp.ne.s32.totalorder %s153, %s155
      %p159 = scmp.eq.s32.totalorder %s25, 0
      %p160 = por %p158, %p159
      %p161 = scmp.ne.s32.totalorder %s153, %s155
      %p162 = scmp.eq.s32.totalorder %s30, 1
      %p163 = por %p161, %p162
      %p164 = scmp.ne.s32.totalorder %s155, %s156
      %p165 = scmp.eq.s32.totalorder %s30, 0
      %p166 = por %p164, %p165
      %p167 = scmp.ne.s32.totalorder %s155, %s156
      %p168 = scmp.eq.s32.totalorder %s31, 1
      %p169 = por %p167, %p168
      %p171 = scmp.ne.s32.totalorder %s156, %s170
      %p172 = scmp.eq.s32.totalorder %s31, 0
      %p173 = por %p171, %p172
      %s175 = sadd.s32 %s174, 1
      %p178 = scmp.eq.s32.totalorder %s25, 1
      %p179 = scmp.ne.s32.totalorder %s174, %s176
      %p180 = scmp.eq.s32.totalorder %s25, 0
      %p181 = por %p179, %p180
      %p182 = scmp.ne.s32.totalorder %s174, %s176
      %p183 = scmp.eq.s32.totalorder %s30, 1
      %p184 = por %p182, %p183
      %p185 = scmp.ne.s32.totalorder %s176, %s177
      %p186 = scmp.eq.s32.totalorder %s30, 0
      %p187 = por %p185, %p186
      %p188 = scmp.ne.s32.totalorder %s176, %s177
      %p189 = scmp.eq.s32.totalorder %s31, 1
      %p190 = por %p188, %p189
      %p192 = scmp.ne.s32.totalorder %s177, %s191
      %p193 = scmp.eq.s32.totalorder %s31, 0
      %p194 = por %p192, %p193
      %s196 = sadd.s32 %s195, 1
      %p199 = scmp.eq.s32.totalorder %s25, 1
      %p200 = scmp.ne.s32.totalorder %s195, %s197
      %p201 = scmp.eq.s32.totalorder %s25, 0
      %p202 = por %p200, %p201
      %p203 = scmp.ne.s32.totalorder %s195, %s197
      %p204 = scmp.eq.s32.totalorder %s30, 1
      %p205 = por %p203, %p204
      %p206 = scmp.ne.s32.totalorder %s197, %s198
      %p207 = scmp.eq.s32.totalorder %s30, 0
      %p208 = por %p206, %p207
      %p209 = scmp.ne.s32.totalorder %s197, %s198
      %p210 = scmp.eq.s32.totalorder %s31, 1
      %p211 = por %p209, %p210
      %p213 = scmp.ne.s32.totalorder %s198, %s212
      %p214 = scmp.eq.s32.totalorder %s31, 0
      %p215 = por %p213, %p214
      %s217 = sadd.s32 %s216, 1
      %p220 = scmp.eq.s32.totalorder %s25, 1
      %p221 = scmp.ne.s32.totalorder %s216, %s218
      %p222 = scmp.eq.s32.totalorder %s25, 0
      %p223 = por %p221, %p222
      %p224 = scmp.ne.s32.totalorder %s216, %s218
      %p225 = scmp.eq.s32.totalorder %s30, 1
      %p226 = por %p224, %p225
      %p227 = scmp.ne.s32.totalorder %s218, %s219
      %p228 = scmp.eq.s32.totalorder %s30, 0
      %p229 = por %p227, %p228
      %p230 = scmp.ne.s32.totalorder %s218, %s219
      %p231 = scmp.eq.s32.totalorder %s31, 1
      %p232 = por %p230, %p231
      %p234 = scmp.ne.s32.totalorder %s219, %s233
      %p235 = scmp.eq.s32.totalorder %s31, 0
      %p236 = por %p234, %p235
      %s238 = sadd.s32 %s237, 1
      %p241 = scmp.eq.s32.totalorder %s25, 1
      %p242 = scmp.ne.s32.totalorder %s237, %s239
      %p243 = scmp.eq.s32.totalorder %s25, 0
      %p244 = por %p242, %p243
      %p245 = scmp.ne.s32.totalorder %s237, %s239
      %p246 = scmp.eq.s32.totalorder %s30, 1
      %p247 = por %p245, %p246
      %p248 = scmp.ne.s32.totalorder %s239, %s240
      %p249 = scmp.eq.s32.totalorder %s30, 0
      %p250 = por %p248, %p249
      %p251 = scmp.ne.s32.totalorder %s239, %s240
      %p252 = scmp.eq.s32.totalorder %s31, 1
      %p253 = por %p251, %p252
      %p255 = scmp.ne.s32.totalorder %s240, %s254
      %p256 = scmp.eq.s32.totalorder %s31, 0
      %p257 = por %p255, %p256
      %s259 = sadd.s32 %s258, 1
      %p262 = scmp.eq.s32.totalorder %s25, 1
      %p263 = scmp.ne.s32.totalorder %s258, %s260
      %p264 = scmp.eq.s32.totalorder %s25, 0
      %p265 = por %p263, %p264
      %p266 = scmp.ne.s32.totalorder %s258, %s260
      %p267 = scmp.eq.s32.totalorder %s30, 1
      %p268 = por %p266, %p267
      %p269 = scmp.ne.s32.totalorder %s260, %s261
      %p270 = scmp.eq.s32.totalorder %s30, 0
      %p271 = por %p269, %p270
      %p272 = scmp.ne.s32.totalorder %s260, %s261
      %p273 = scmp.eq.s32.totalorder %s31, 1
      %p274 = por %p272, %p273
      %p276 = scmp.ne.s32.totalorder %s261, %s275
      %p277 = scmp.eq.s32.totalorder %s31, 0
      %p278 = por %p276, %p277
      %s280 = sadd.s32 %s279, 1
      %p283 = scmp.eq.s32.totalorder %s25, 1
      %p284 = scmp.ne.s32.totalorder %s279, %s281
      %p285 = scmp.eq.s32.totalorder %s25, 0
      %p286 = por %p284, %p285
      %p287 = scmp.ne.s32.totalorder %s279, %s281
      %p288 = scmp.eq.s32.totalorder %s30, 1
      %p289 = por %p287, %p288
      %p290 = scmp.ne.s32.totalorder %s281, %s282
      %p291 = scmp.eq.s32.totalorder %s30, 0
      %p292 = por %p290, %p291
      %p293 = scmp.ne.s32.totalorder %s281, %s282
      %p294 = scmp.eq.s32.totalorder %s31, 1
      %p295 = por %p293, %p294
      %p297 = scmp.ne.s32.totalorder %s282, %s296
      %p298 = scmp.eq.s32.totalorder %s31, 0
      %p299 = por %p297, %p298
      %s301 = sadd.s32 %s300, 1
      %p304 = scmp.eq.s32.totalorder %s25, 1
      %p305 = scmp.ne.s32.totalorder %s300, %s302
      %p306 = scmp.eq.s32.totalorder %s25, 0
      %p307 = por %p305, %p306
      %p308 = scmp.ne.s32.totalorder %s300, %s302
      %p309 = scmp.eq.s32.totalorder %s30, 1
      %p310 = por %p308, %p309
      %p311 = scmp.ne.s32.totalorder %s302, %s303
      %p312 = scmp.eq.s32.totalorder %s30, 0
      %p313 = por %p311, %p312
      %p314 = scmp.ne.s32.totalorder %s302, %s303
      %p315 = scmp.eq.s32.totalorder %s31, 1
      %p316 = por %p314, %p315
      %p318 = scmp.ne.s32.totalorder %s303, %s317
      %p319 = scmp.eq.s32.totalorder %s31, 0
      %p320 = por %p318, %p319
      %s321 = ssub.s32 %s25, %s32
      %p322 = scmp.eq.s32.totalorder %s321, 0
      %s324 = sadd.s32 %s323, 1
      %s325 = scalar_select %p322, %s323, %s324
      %p328 = pneg %p322
      %p329 = scmp.eq.s32.totalorder %s25, 1
      %p330 = por %p328, %p329
      %p331 = scmp.ne.s32.totalorder %s323, %s326
      %p332 = scmp.eq.s32.totalorder %s25, 0
      %p333 = por %p331, %p332
      %p334 = scmp.ne.s32.totalorder %s323, %s326
      %p335 = scmp.eq.s32.totalorder %s30, 1
      %p336 = por %p334, %p335
      %p337 = scmp.ne.s32.totalorder %s326, %s327
      %p338 = scmp.eq.s32.totalorder %s30, 0
      %p339 = por %p337, %p338
      %p340 = scmp.ne.s32.totalorder %s326, %s327
      %p341 = scmp.eq.s32.totalorder %s31, 1
      %p342 = por %p340, %p341
      %p344 = scmp.ne.s32.totalorder %s327, %s343
      %p345 = scmp.eq.s32.totalorder %s31, 0
      %p346 = por %p344, %p345
      %s347 = ssub.s32 %s25, %s32
      %p348 = scmp.eq.s32.totalorder %s347, 0
      %s350 = sadd.s32 %s349, 1
      %s351 = scalar_select %p348, %s349, %s350
      %p354 = pneg %p348
      %p355 = scmp.eq.s32.totalorder %s25, 1
      %p356 = por %p354, %p355
      %p357 = scmp.ne.s32.totalorder %s349, %s352
      %p358 = scmp.eq.s32.totalorder %s25, 0
      %p359 = por %p357, %p358
      %p360 = scmp.ne.s32.totalorder %s349, %s352
      %p361 = scmp.eq.s32.totalorder %s30, 1
      %p362 = por %p360, %p361
      %p363 = scmp.ne.s32.totalorder %s352, %s353
      %p364 = scmp.eq.s32.totalorder %s30, 0
      %p365 = por %p363, %p364
      %p366 = scmp.ne.s32.totalorder %s352, %s353
      %p367 = scmp.eq.s32.totalorder %s31, 1
      %p368 = por %p366, %p367
      %p370 = scmp.ne.s32.totalorder %s353, %s369
      %p371 = scmp.eq.s32.totalorder %s31, 0
      %p372 = por %p370, %p371
      %s373 = ssub.s32 %s25, %s32
      %p374 = scmp.eq.s32.totalorder %s373, 0
      %s376 = sadd.s32 %s375, 1
      %s377 = scalar_select %p374, %s375, %s376
      %p380 = pneg %p374
      %p381 = scmp.eq.s32.totalorder %s25, 1
      %p382 = por %p380, %p381
      %p383 = scmp.ne.s32.totalorder %s375, %s378
      %p384 = scmp.eq.s32.totalorder %s25, 0
      %p385 = por %p383, %p384
      %p386 = scmp.ne.s32.totalorder %s375, %s378
      %p387 = scmp.eq.s32.totalorder %s30, 1
      %p388 = por %p386, %p387
      %p389 = scmp.ne.s32.totalorder %s378, %s379
      %p390 = scmp.eq.s32.totalorder %s30, 0
      %p391 = por %p389, %p390
      %p392 = scmp.ne.s32.totalorder %s378, %s379
      %p393 = scmp.eq.s32.totalorder %s31, 1
      %p394 = por %p392, %p393
      %p396 = scmp.ne.s32.totalorder %s379, %s395
      %p397 = scmp.eq.s32.totalorder %s31, 0
      %p398 = por %p396, %p397
      %p399 = scmp.le.s32.totalorder 1, %s25
      %p400 = scmp.lt.s32.totalorder %s25, 3
      %p401 = pnand %p399, %p400
      %p402 = pneg %p401
      // Predicated region
      $region9: #{tpu_custom_call.1} parent=5 // pred_check
        _
      $region10: #{tpu_custom_call.1} parent=5 // pred_check_branch
        %404 = sbr.rel (%p401) target = $region12
      $region11: #{tpu_custom_call.1} parent=5 // pred_region
        %s405 = ssub.s32 %s25, 1
        // Predicated region
        $region13: #{tpu_custom_call.1} parent=11 // pred_check
          %p406 = pneg %p124
        $region14: #{tpu_custom_call.1} parent=11 // pred_check_branch
          %408 = sbr.rel (%p406) target = $region16
        $region15: #{tpu_custom_call.1} parent=11 // pred_region
          _
        $region16: #{tpu_custom_call.1} parent=11 // pred_fallthru
          _
        // Predicated region
        $region17: #{tpu_custom_call.1} parent=11 // pred_check
          %p409 = pneg %p145
        $region18: #{tpu_custom_call.1} parent=11 // pred_check_branch
          %411 = sbr.rel (%p409) target = $region20
        $region19: #{tpu_custom_call.1} parent=11 // pred_region
          _
        $region20: #{tpu_custom_call.1} parent=11 // pred_fallthru
          _
        // Predicated region
        $region21: #{tpu_custom_call.1} parent=11 // pred_check
          %p412 = pneg %p166
        $region22: #{tpu_custom_call.1} parent=11 // pred_check_branch
          %414 = sbr.rel (%p412) target = $region24
        $region23: #{tpu_custom_call.1} parent=11 // pred_region
          _
        $region24: #{tpu_custom_call.1} parent=11 // pred_fallthru
          _
        // Predicated region
        $region25: #{tpu_custom_call.1} parent=11 // pred_check
          %p415 = pneg %p187
        $region26: #{tpu_custom_call.1} parent=11 // pred_check_branch
          %417 = sbr.rel (%p415) target = $region28
        $region27: #{tpu_custom_call.1} parent=11 // pred_region
          _
        $region28: #{tpu_custom_call.1} parent=11 // pred_fallthru
          _
        // Predicated region
        $region29: #{tpu_custom_call.1} parent=11 // pred_check
          %p418 = pneg %p208
        $region30: #{tpu_custom_call.1} parent=11 // pred_check_branch
          %420 = sbr.rel (%p418) target = $region32
        $region31: #{tpu_custom_call.1} parent=11 // pred_region
          _
        $region32: #{tpu_custom_call.1} parent=11 // pred_fallthru
          _
        // Predicated region
        $region33: #{tpu_custom_call.1} parent=11 // pred_check
          %p421 = pneg %p229
        $region34: #{tpu_custom_call.1} parent=11 // pred_check_branch
          %423 = sbr.rel (%p421) target = $region36
        $region35: #{tpu_custom_call.1} parent=11 // pred_region
          _
        $region36: #{tpu_custom_call.1} parent=11 // pred_fallthru
          _
        // Predicated region
        $region37: #{tpu_custom_call.1} parent=11 // pred_check
          %p424 = pneg %p250
        $region38: #{tpu_custom_call.1} parent=11 // pred_check_branch
          %426 = sbr.rel (%p424) target = $region40
        $region39: #{tpu_custom_call.1} parent=11 // pred_region
          _
        $region40: #{tpu_custom_call.1} parent=11 // pred_fallthru
          _
        // Predicated region
        $region41: #{tpu_custom_call.1} parent=11 // pred_check
          %p427 = pneg %p271
        $region42: #{tpu_custom_call.1} parent=11 // pred_check_branch
          %429 = sbr.rel (%p427) target = $region44
        $region43: #{tpu_custom_call.1} parent=11 // pred_region
          _
        $region44: #{tpu_custom_call.1} parent=11 // pred_fallthru
          _
        // Predicated region
        $region45: #{tpu_custom_call.1} parent=11 // pred_check
          %p430 = pneg %p292
        $region46: #{tpu_custom_call.1} parent=11 // pred_check_branch
          %432 = sbr.rel (%p430) target = $region48
        $region47: #{tpu_custom_call.1} parent=11 // pred_region
          _
        $region48: #{tpu_custom_call.1} parent=11 // pred_fallthru
          _
        // Predicated region
        $region49: #{tpu_custom_call.1} parent=11 // pred_check
          %p433 = pneg %p313
        $region50: #{tpu_custom_call.1} parent=11 // pred_check_branch
          %435 = sbr.rel (%p433) target = $region52
        $region51: #{tpu_custom_call.1} parent=11 // pred_region
          _
        $region52: #{tpu_custom_call.1} parent=11 // pred_fallthru
          _
      $region12: #{tpu_custom_call.1} parent=5 // pred_fallthru
        _
      %p436 = scmp.lt.s32.totalorder %s25, 2
      // Predicated region
      $region53: #{tpu_custom_call.1} parent=5 // pred_check
        %p437 = pneg %p436
      $region54: #{tpu_custom_call.1} parent=5 // pred_check_branch
        %439 = sbr.rel (%p437) target = $region56
      $region55: #{tpu_custom_call.1} parent=5 // pred_region
        // Predicated region
        $region57: #{tpu_custom_call.1} parent=55 // pred_check
          %p440 = pneg %p45
        $region58: #{tpu_custom_call.1} parent=55 // pred_check_branch
          %442 = sbr.rel (%p440) target = $region60
        $region59: #{tpu_custom_call.1} parent=55 // pred_region
          %s443 = smul.u32 36, %s25
          %p444 = scmp.lt.s32.totalorder %s443, 71
          %s445 = scalar_select %p444, %s443, 71
          %s446 = smul.addr %s445, 2
          %s447 = smul.addr %s446, 4
          %s448 = scalar_lea.vmem %s0, %s447
          %s449 = smul.u32 36, %s25
        $region60: #{tpu_custom_call.1} parent=55 // pred_fallthru
          _
        // Predicated region
        $region61: #{tpu_custom_call.1} parent=55 // pred_check
          %p450 = pneg %p71
        $region62: #{tpu_custom_call.1} parent=55 // pred_check_branch
          %452 = sbr.rel (%p450) target = $region64
        $region63: #{tpu_custom_call.1} parent=55 // pred_region
          %s453 = smul.u32 4, %s25
          %p454 = scmp.lt.s32.totalorder %s453, 7
          %s455 = scalar_select %p454, %s453, 7
          %s456 = smul.addr %s455, 2
          %s457 = smul.addr %s456, 4
          %s458 = scalar_lea.vmem %s1, %s457
          %s459 = smul.u32 4, %s25
        $region64: #{tpu_custom_call.1} parent=55 // pred_fallthru
          _
        // Predicated region
        $region65: #{tpu_custom_call.1} parent=55 // pred_check
          %p460 = pneg %p97
        $region66: #{tpu_custom_call.1} parent=55 // pred_check_branch
          %462 = sbr.rel (%p460) target = $region68
        $region67: #{tpu_custom_call.1} parent=55 // pred_region
          %s463 = smul.u32 4, %s25
          %p464 = scmp.lt.s32.totalorder %s463, 7
          %s465 = scalar_select %p464, %s463, 7
          %s466 = smul.addr %s465, 4
          %s467 = scalar_lea.vmem %s2, %s466
          %s468 = smul.u32 4, %s25
        $region68: #{tpu_custom_call.1} parent=55 // pred_fallthru
          _
      $region56: #{tpu_custom_call.1} parent=5 // pred_fallthru
        _
      %p469 = scmp.le.s32.totalorder 1, %s25
      %p470 = scmp.lt.s32.totalorder %s25, 3
      %p471 = pnand %p469, %p470
      %p472 = pneg %p471
      // Predicated region
      $region69: #{tpu_custom_call.1} parent=5 // pred_check
        _
      $region70: #{tpu_custom_call.1} parent=5 // pred_check_branch
        %474 = sbr.rel (%p471) target = $region72
      $region71: #{tpu_custom_call.1} parent=5 // pred_region
        %s475 = ssub.s32 %s25, 1
        %s476 = smul.u32 36, %s30
        %p477 = scmp.lt.s32.totalorder %s476, 71
        %s478 = scalar_select %p477, %s476, 71
        %s479 = smul.addr %s478, 2
        %s480 = smul.addr %s479, 4
        %s481 = scalar_lea.vmem %s0, %s480
        %p482 = pneg %p51
        %p483 = pneg %p48
        %s484 = smul.u32 4, %s30
        %p485 = scmp.lt.s32.totalorder %s484, 7
        %s486 = scalar_select %p485, %s484, 7
        %s487 = smul.addr %s486, 2
        %s488 = smul.addr %s487, 4
        %s489 = scalar_lea.vmem %s1, %s488
        %p490 = pneg %p77
        %p491 = pneg %p74
        %s492 = smul.u32 4, %s30
        %p493 = scmp.lt.s32.totalorder %s492, 7
        %s494 = scalar_select %p493, %s492, 7
        %s495 = smul.addr %s494, 4
        %s496 = scalar_lea.vmem %s2, %s495
        %p497 = pneg %p103
        %p498 = pneg %p100
        %p499 = pneg %p124
        %p500 = pneg %p121
        %p501 = pneg %p145
        %p502 = pneg %p142
        %p503 = pneg %p166
        %p504 = pneg %p163
        %p505 = pneg %p187
        %p506 = pneg %p184
        %p507 = pneg %p208
        %p508 = pneg %p205
        %p509 = pneg %p229
        %p510 = pneg %p226
        %p511 = pneg %p250
        %p512 = pneg %p247
        %p513 = pneg %p271
        %p514 = pneg %p268
        %p515 = pneg %p292
        %p516 = pneg %p289
        %p517 = pneg %p313
        %p518 = pneg %p310
        %p519 = pneg %p339
        %p520 = pneg %p336
        %s521 = smul.u32 36, %s30
        %p522 = scmp.lt.s32.totalorder %s521, 71
        %s523 = scalar_select %p522, %s521, 71
        %s524 = smul.addr %s523, 2
        %s525 = smul.addr %s524, 4
        %s526 = scalar_lea.vmem %s13, %s525
        %p527 = pneg %p365
        %p528 = pneg %p362
        %s529 = sand.u32 %s352, 1
        %s530 = scalar_lea.sflag [#allocation3], %s529
        %s531 = sand.u32 %s352, 1
        %s532 = smul.addr %s531, 32
        %s533 = scalar_lea.vmem [#allocation2], %s532
        %p534 = pneg %p391
        %p535 = pneg %p388
        %s536 = smul.u32 4, %s30
        %p537 = scmp.lt.s32.totalorder %s536, 7
        %s538 = scalar_select %p537, %s536, 7
        %s539 = smul.addr %s538, 4
        %s540 = scalar_lea.vmem %s15, %s539
        %s541 = smul.u32 36, %s30
        %p542 = scmp.lt.s32.totalorder %s541, 71
        %s543 = scalar_select %p542, %s541, 71
        %s544 = smul.addr %s543, 2
        %s545 = smul.addr %s544, 4
        %s546 = scalar_lea.vmem %s0, %s545
        %s547 = smul.u32 36, %s30
        %s548 = smul.u32 4, %s30
        %p549 = scmp.lt.s32.totalorder %s548, 7
        %s550 = scalar_select %p549, %s548, 7
        %s551 = smul.addr %s550, 2
        %s552 = smul.addr %s551, 4
        %s553 = scalar_lea.vmem %s1, %s552
        %s554 = smul.u32 4, %s30
        %s555 = smul.u32 4, %s30
        %p556 = scmp.lt.s32.totalorder %s555, 7
        %s557 = scalar_select %p556, %s555, 7
        %s558 = smul.addr %s557, 4
        %s559 = scalar_lea.vmem %s2, %s558
        %s560 = smul.u32 4, %s30
        %s561 = smul.u32 36, %s30
        %p562 = scmp.lt.s32.totalorder %s561, 71
        %s563 = scalar_select %p562, %s561, 71
        %s564 = smul.addr %s563, 2
        %s565 = smul.addr %s564, 4
        %s566 = scalar_lea.vmem %s13, %s565
        %s567 = smul.u32 36, %s30
        %s568 = smul.u32 4, %s30
        %s569 = smul.u32 4, %s30
        %p570 = scmp.lt.s32.totalorder %s569, 7
        %s571 = scalar_select %p570, %s569, 7
        %s572 = smul.addr %s571, 4
        %s573 = scalar_lea.vmem %s15, %s572
        %s574 = smul.u32 4, %s30
        %v576 = vld [vmem:[%s546] sm:$0xff]
        %v577 = vld [vmem:[%s546 + $0x8] sm:$0xff]
        %v578 = vld [vmem:[%s546 + $0x10] sm:$0xff]
        %v579 = vld [vmem:[%s546 + $0x18] sm:$0xff]
        %v580 = vld [vmem:[%s546 + $0x20] sm:$0xff]
        %v581 = vld [vmem:[%s546 + $0x28] sm:$0xff]
        %v582 = vld [vmem:[%s546 + $0x30] sm:$0xff]
        %v583 = vld [vmem:[%s546 + $0x38] sm:$0xff]
        %v584 = vld [vmem:[%s546 + $0x40] sm:$0xff]
        %v585 = vld [vmem:[%s546 + $0x48] sm:$0xff]
        %v586 = vld [vmem:[%s546 + $0x50] sm:$0xff]
        %v587 = vld [vmem:[%s546 + $0x58] sm:$0xff]
        %v588 = vld [vmem:[%s546 + $0x60] sm:$0xff]
        %v589 = vld [vmem:[%s546 + $0x68] sm:$0xff]
        %v590 = vld [vmem:[%s546 + $0x70] sm:$0xff]
        %v591 = vld [vmem:[%s546 + $0x78] sm:$0xff]
        %v592 = vld [vmem:[%s546 + $0x80] sm:$0xff]
        %v593 = vld [vmem:[%s546 + $0x88] sm:$0xff]
        %v594 = vld [vmem:[%s546 + $0x90] sm:$0xff]
        %v595 = vld [vmem:[%s546 + $0x98] sm:$0xff]
        %v596 = vld [vmem:[%s546 + $0xa0] sm:$0xff]
        %v597 = vld [vmem:[%s546 + $0xa8] sm:$0xff]
        %v598 = vld [vmem:[%s546 + $0xb0] sm:$0xff]
        %v599 = vld [vmem:[%s546 + $0xb8] sm:$0xff]
        %v600 = vld [vmem:[%s546 + $0xc0] sm:$0xff]
        %v601 = vld [vmem:[%s546 + $0xc8] sm:$0xff]
        %v602 = vld [vmem:[%s546 + $0xd0] sm:$0xff]
        %v603 = vld [vmem:[%s546 + $0xd8] sm:$0xff]
        %v604 = vld [vmem:[%s546 + $0xe0] sm:$0xff]
        %v605 = vld [vmem:[%s546 + $0xe8] sm:$0xff]
        %v606 = vld [vmem:[%s546 + $0xf0] sm:$0xff]
        %v607 = vld [vmem:[%s546 + $0xf8] sm:$0xff]
        %v608 = vld [vmem:[%s546 + $0x100] sm:$0xff]
        %v609 = vld [vmem:[%s546 + $0x108] sm:$0xff]
        %v610 = vld [vmem:[%s546 + $0x110] sm:$0xff]
        %v611 = vld [vmem:[%s546 + $0x118] sm:$0xff]
        %v612 = vld [vmem:[%s553] sm:$0xff]
        %v613 = vld [vmem:[%s553 + $0x8] sm:$0xff]
        %v614 = vld [vmem:[%s553 + $0x10] sm:$0xff]
        %v615 = vld [vmem:[%s553 + $0x18] sm:$0xff]
        %v616 = vld [vmem:[%s559] sm:$0xf]
        %v617 = vld [vmem:[%s559 + $0x4] sm:$0xf]
        %v618 = vld [vmem:[%s559 + $0x8] sm:$0xf]
        %v619 = vld [vmem:[%s559 + $0xc] sm:$0xf]
        %v620 = vld [vmem:[%s3] sm:$0xff]
        %v621 = vld [vmem:[%s3 + $0x8] sm:$0xff]
        %v622 = vld [vmem:[%s3 + $0x10] sm:$0xff]
        %v623 = vld [vmem:[%s3 + $0x18] sm:$0xff]
        %v624 = vld [vmem:[%s3 + $0x20] sm:$0xff]
        %v625 = vld [vmem:[%s3 + $0x28] sm:$0xff]
        %v626 = vld [vmem:[%s3 + $0x30] sm:$0xff]
        %v627 = vld [vmem:[%s3 + $0x38] sm:$0xff]
        %v628 = vld [vmem:[%s3 + $0x40] sm:$0xff]
        %v629 = vld [vmem:[%s3 + $0x48] sm:$0xff]
        %v630 = vld [vmem:[%s3 + $0x50] sm:$0xff]
        %v631 = vld [vmem:[%s3 + $0x58] sm:$0xff]
        %v632 = vld [vmem:[%s3 + $0x60] sm:$0xff]
        %v633 = vld [vmem:[%s3 + $0x68] sm:$0xff]
        %v634 = vld [vmem:[%s3 + $0x70] sm:$0xff]
        %v635 = vld [vmem:[%s3 + $0x78] sm:$0xff]
        %v636 = vld [vmem:[%s3 + $0x80] sm:$0xff]
        %v637 = vld [vmem:[%s3 + $0x88] sm:$0xff]
        %v638 = vld [vmem:[%s12] ss:$8 sm:$0x3]
        %v640 = vlaneseq
        %v641 = vshrl.u32 %v640, 7
        %v642 = vsub.s32 0, %v641
        %v643 = vrot.slane %v638, %v642
        %v644 = vlaneseq
        %v645 = vshrl.u32 %v644, 7
        %v646 = vsub.s32 1, %v645
        %v647 = vrot.slane %v638, %v646
        %v686 = vunpack.c.l.b16 %v576
        %v687 = vunpack.c.h.b16 %v576
        %v688 = vunpack.c.l.b16 %v577
        %v689 = vunpack.c.h.b16 %v577
        %v690 = vunpack.c.l.b16 %v578
        %v691 = vunpack.c.h.b16 %v578
        %v692 = vunpack.c.l.b16 %v579
        %v693 = vunpack.c.h.b16 %v579
        %v694 = vunpack.c.l.b16 %v580
        %v695 = vunpack.c.h.b16 %v580
        %v696 = vunpack.c.l.b16 %v581
        %v697 = vunpack.c.h.b16 %v581
        %v698 = vunpack.c.l.b16 %v582
        %v699 = vunpack.c.h.b16 %v582
        %v700 = vunpack.c.l.b16 %v583
        %v701 = vunpack.c.h.b16 %v583
        %v702 = vunpack.c.l.b16 %v584
        %v703 = vunpack.c.h.b16 %v584
        %v704 = vunpack.c.l.b16 %v585
        %v705 = vunpack.c.h.b16 %v585
        %v706 = vunpack.c.l.b16 %v586
        %v707 = vunpack.c.h.b16 %v586
        %v708 = vunpack.c.l.b16 %v587
        %v709 = vunpack.c.h.b16 %v587
        %v710 = vunpack.c.l.b16 %v588
        %v711 = vunpack.c.h.b16 %v588
        %v712 = vunpack.c.l.b16 %v589
        %v713 = vunpack.c.h.b16 %v589
        %v714 = vunpack.c.l.b16 %v590
        %v715 = vunpack.c.h.b16 %v590
        %v716 = vunpack.c.l.b16 %v591
        %v717 = vunpack.c.h.b16 %v591
        %v718 = vunpack.c.l.b16 %v592
        %v719 = vunpack.c.h.b16 %v592
        %v720 = vunpack.c.l.b16 %v593
        %v721 = vunpack.c.h.b16 %v593
        %v722 = vunpack.c.l.b16 %v594
        %v723 = vunpack.c.h.b16 %v594
        %v724 = vunpack.c.l.b16 %v595
        %v725 = vunpack.c.h.b16 %v595
        %v726 = vunpack.c.l.b16 %v596
        %v727 = vunpack.c.h.b16 %v596
        %v728 = vunpack.c.l.b16 %v597
        %v729 = vunpack.c.h.b16 %v597
        %v730 = vunpack.c.l.b16 %v598
        %v731 = vunpack.c.h.b16 %v598
        %v732 = vunpack.c.l.b16 %v599
        %v733 = vunpack.c.h.b16 %v599
        %v734 = vunpack.c.l.b16 %v600
        %v735 = vunpack.c.h.b16 %v600
        %v736 = vunpack.c.l.b16 %v601
        %v737 = vunpack.c.h.b16 %v601
        %v738 = vunpack.c.l.b16 %v602
        %v739 = vunpack.c.h.b16 %v602
        %v740 = vunpack.c.l.b16 %v603
        %v741 = vunpack.c.h.b16 %v603
        %v742 = vunpack.c.l.b16 %v604
        %v743 = vunpack.c.h.b16 %v604
        %v744 = vunpack.c.l.b16 %v605
        %v745 = vunpack.c.h.b16 %v605
        %v746 = vunpack.c.l.b16 %v606
        %v747 = vunpack.c.h.b16 %v606
        %v748 = vunpack.c.l.b16 %v607
        %v749 = vunpack.c.h.b16 %v607
        %v750 = vunpack.c.l.b16 %v608
        %v751 = vunpack.c.h.b16 %v608
        %v752 = vunpack.c.l.b16 %v609
        %v753 = vunpack.c.h.b16 %v609
        %v754 = vunpack.c.l.b16 %v610
        %v755 = vunpack.c.h.b16 %v610
        %v756 = vunpack.c.l.b16 %v611
        %v757 = vunpack.c.h.b16 %v611
        %v758 = vpack.c.b16 %v688, %v686
        %v759 = vpack.c.b16 %v689, %v687
        %v760 = vpack.c.b16 %v692, %v690
        %v761 = vpack.c.b16 %v693, %v691
        %v762 = vpack.c.b16 %v696, %v694
        %v763 = vpack.c.b16 %v697, %v695
        %v764 = vpack.c.b16 %v700, %v698
        %v765 = vpack.c.b16 %v701, %v699
        %v766 = vpack.c.b16 %v704, %v702
        %v767 = vpack.c.b16 %v705, %v703
        %v768 = vpack.c.b16 %v708, %v706
        %v769 = vpack.c.b16 %v709, %v707
        %v770 = vpack.c.b16 %v712, %v710
        %v771 = vpack.c.b16 %v713, %v711
        %v772 = vpack.c.b16 %v716, %v714
        %v773 = vpack.c.b16 %v717, %v715
        %v774 = vpack.c.b16 %v720, %v718
        %v775 = vpack.c.b16 %v721, %v719
        %v776 = vpack.c.b16 %v724, %v722
        %v777 = vpack.c.b16 %v725, %v723
        %v778 = vpack.c.b16 %v728, %v726
        %v779 = vpack.c.b16 %v729, %v727
        %v780 = vpack.c.b16 %v732, %v730
        %v781 = vpack.c.b16 %v733, %v731
        %v782 = vpack.c.b16 %v736, %v734
        %v783 = vpack.c.b16 %v737, %v735
        %v784 = vpack.c.b16 %v740, %v738
        %v785 = vpack.c.b16 %v741, %v739
        %v786 = vpack.c.b16 %v744, %v742
        %v787 = vpack.c.b16 %v745, %v743
        %v788 = vpack.c.b16 %v748, %v746
        %v789 = vpack.c.b16 %v749, %v747
        %v790 = vpack.c.b16 %v752, %v750
        %v791 = vpack.c.b16 %v753, %v751
        %v792 = vpack.c.b16 %v756, %v754
        %v793 = vpack.c.b16 %v757, %v755
        %v830 = vunpack.c.l.b16 %v620
        %v831 = vunpack.c.h.b16 %v620
        %v832 = vunpack.c.l.b16 %v621
        %v833 = vunpack.c.h.b16 %v621
        %v834 = vunpack.c.l.b16 %v622
        %v835 = vunpack.c.h.b16 %v622
        %v836 = vunpack.c.l.b16 %v623
        %v837 = vunpack.c.h.b16 %v623
        %v838 = vunpack.c.l.b16 %v624
        %v839 = vunpack.c.h.b16 %v624
        %v840 = vunpack.c.l.b16 %v625
        %v841 = vunpack.c.h.b16 %v625
        %v842 = vunpack.c.l.b16 %v626
        %v843 = vunpack.c.h.b16 %v626
        %v844 = vunpack.c.l.b16 %v627
        %v845 = vunpack.c.h.b16 %v627
        %v846 = vunpack.c.l.b16 %v628
        %v847 = vunpack.c.h.b16 %v628
        %v848 = vunpack.c.l.b16 %v629
        %v849 = vunpack.c.h.b16 %v629
        %v850 = vunpack.c.l.b16 %v630
        %v851 = vunpack.c.h.b16 %v630
        %v852 = vunpack.c.l.b16 %v631
        %v853 = vunpack.c.h.b16 %v631
        %v854 = vunpack.c.l.b16 %v632
        %v855 = vunpack.c.h.b16 %v632
        %v856 = vunpack.c.l.b16 %v633
        %v857 = vunpack.c.h.b16 %v633
        %v858 = vunpack.c.l.b16 %v634
        %v859 = vunpack.c.h.b16 %v634
        %v860 = vunpack.c.l.b16 %v635
        %v861 = vunpack.c.h.b16 %v635
        %v862 = vunpack.c.l.b16 %v636
        %v863 = vunpack.c.h.b16 %v636
        %v864 = vunpack.c.l.b16 %v637
        %v865 = vunpack.c.h.b16 %v637
        %v866 = vpack.c.b16 %v832, %v830
        %v867 = vpack.c.b16 %v833, %v831
        %v868 = vpack.c.b16 %v836, %v834
        %v869 = vpack.c.b16 %v837, %v835
        %v870 = vpack.c.b16 %v840, %v838
        %v871 = vpack.c.b16 %v841, %v839
        %v872 = vpack.c.b16 %v844, %v842
        %v873 = vpack.c.b16 %v845, %v843
        %v874 = vpack.c.b16 %v848, %v846
        %v875 = vpack.c.b16 %v849, %v847
        %v876 = vpack.c.b16 %v852, %v850
        %v877 = vpack.c.b16 %v853, %v851
        %v878 = vpack.c.b16 %v856, %v854
        %v879 = vpack.c.b16 %v857, %v855
        %v880 = vpack.c.b16 %v860, %v858
        %v881 = vpack.c.b16 %v861, %v859
        %v882 = vpack.c.b16 %v864, %v862
        %v883 = vpack.c.b16 %v865, %v863
        %vm902 = vcmask 130048
        %v904 = vsel %vm902, %v759, 0
        %v907 = vsel %vm902, %v761, 0
        %v910 = vsel %vm902, %v763, 0
        %v913 = vsel %vm902, %v765, 0
        %v916 = vsel %vm902, %v767, 0
        %v919 = vsel %vm902, %v769, 0
        %v922 = vsel %vm902, %v771, 0
        %v925 = vsel %vm902, %v773, 0
        %v928 = vsel %vm902, %v775, 0
        %v931 = vsel %vm902, %v777, 0
        %v934 = vsel %vm902, %v779, 0
        %v937 = vsel %vm902, %v781, 0
        %v940 = vsel %vm902, %v783, 0
        %v943 = vsel %vm902, %v785, 0
        %v946 = vsel %vm902, %v787, 0
        %v949 = vsel %vm902, %v789, 0
        %v952 = vsel %vm902, %v791, 0
        %v955 = vsel %vm902, %v793, 0
        %957 = vmatprep.subr.bf16.mxu0 %v881
        %958 = vmatpush1.bf16.msra.mxu0 %v880
        %959 = vmatprep.subr.bf16.mxu0 %v879
        %960 = vmatpush1.bf16.msra.mxu0 %v878
        %961 = vmatprep.subr.bf16.mxu0 %v877
        %962 = vmatpush1.bf16.msra.mxu0 %v876
        %963 = vmatprep.subr.bf16.mxu0 %v875
        %964 = vmatpush1.bf16.msra.mxu0 %v874
        %965 = vmatprep.subr.bf16.mxu0 %v873
        %966 = vmatpush1.bf16.msra.mxu0 %v872
        %967 = vmatprep.subr.bf16.mxu0 %v871
        %968 = vmatpush1.bf16.msra.mxu0 %v870
        %969 = vmatprep.subr.bf16.mxu0 %v869
        %970 = vmatpush1.bf16.msra.mxu0 %v868
        %971 = vmatprep.subr.bf16.mxu0 %v867
        %972 = vmatpush1.bf16.msra.mxu0 %v866
        %973 = vmatprep.subr.bf16.mxu0 0
        %974 = vmatpush2.bf16.msra.mxu0 0
        %975 = vmatprep.subr.bf16.mxu0 0
        %976 = vmatpush2.bf16.msra.mxu0 0
        %977 = vmatprep.subr.bf16.mxu0 0
        %978 = vmatpush2.bf16.msra.mxu0 0
        %979 = vmatprep.subr.bf16.mxu0 0
        %980 = vmatpush2.bf16.msra.mxu0 0
        %981 = vmatprep.subr.bf16.mxu0 0
        %982 = vmatpush2.bf16.msra.mxu0 0
        %983 = vmatprep.subr.bf16.mxu0 0
        %984 = vmatpush2.bf16.msra.mxu0 0
        %985 = vmatprep.subr.bf16.mxu0 0
        %986 = vmatpush2.bf16.msra.mxu0 0
        %987 = vmatprep.subr.bf16.mxu0 %v883
        %988 = vmatpush2.bf16.msra.mxu0 %v882
        %989 = vmatprep.mubr.bf16.mxu0 %v904
        %990 = vmatmul.mubr.bf16.gmra.mxu0 %v758
        %v991 = vpop.f32.mrf.mxu0
        %v992 = vadd.f32 %v643, %v991
        %v993 = vpop.f32.mrf.mxu0
        %v994 = vadd.f32 %v647, %v993
        %v995 = vpop.f32.mrf.mxu0
        %v996 = vadd.f32 %v643, %v995
        %v997 = vpop.f32.mrf.mxu0
        %v998 = vadd.f32 %v647, %v997
        %999 = vmatprep.mubr.bf16.mxu0 %v907
        %1000 = vmatmul.mubr.bf16.gmra.mxu0 %v760
        %v1001 = vpop.f32.mrf.mxu0
        %v1002 = vadd.f32 %v643, %v1001
        %v1003 = vpop.f32.mrf.mxu0
        %v1004 = vadd.f32 %v647, %v1003
        %v1005 = vpop.f32.mrf.mxu0
        %v1006 = vadd.f32 %v643, %v1005
        %v1007 = vpop.f32.mrf.mxu0
        %v1008 = vadd.f32 %v647, %v1007
        %1009 = vmatprep.mubr.bf16.mxu0 %v910
        %1010 = vmatmul.mubr.bf16.gmra.mxu0 %v762
        %v1011 = vpop.f32.mrf.mxu0
        %v1012 = vadd.f32 %v643, %v1011
        %v1013 = vpop.f32.mrf.mxu0
        %v1014 = vadd.f32 %v647, %v1013
        %v1015 = vpop.f32.mrf.mxu0
        %v1016 = vadd.f32 %v643, %v1015
        %v1017 = vpop.f32.mrf.mxu0
        %v1018 = vadd.f32 %v647, %v1017
        %1019 = vmatprep.mubr.bf16.mxu0 %v913
        %1020 = vmatmul.mubr.bf16.gmra.mxu0 %v764
        %v1021 = vpop.f32.mrf.mxu0
        %v1022 = vadd.f32 %v643, %v1021
        %v1023 = vpop.f32.mrf.mxu0
        %v1024 = vadd.f32 %v647, %v1023
        %v1025 = vpop.f32.mrf.mxu0
        %v1026 = vadd.f32 %v643, %v1025
        %v1027 = vpop.f32.mrf.mxu0
        %v1028 = vadd.f32 %v647, %v1027
        %1029 = vmatprep.mubr.bf16.mxu0 %v916
        %1030 = vmatmul.mubr.bf16.gmra.mxu0 %v766
        %v1031 = vpop.f32.mrf.mxu0
        %v1032 = vadd.f32 %v643, %v1031
        %v1033 = vpop.f32.mrf.mxu0
        %v1034 = vadd.f32 %v647, %v1033
        %v1035 = vpop.f32.mrf.mxu0
        %v1036 = vadd.f32 %v643, %v1035
        %v1037 = vpop.f32.mrf.mxu0
        %v1038 = vadd.f32 %v647, %v1037
        %1039 = vmatprep.mubr.bf16.mxu0 %v919
        %1040 = vmatmul.mubr.bf16.gmra.mxu0 %v768
        %v1041 = vpop.f32.mrf.mxu0
        %v1042 = vadd.f32 %v643, %v1041
        %v1043 = vpop.f32.mrf.mxu0
        %v1044 = vadd.f32 %v647, %v1043
        %v1045 = vpop.f32.mrf.mxu0
        %v1046 = vadd.f32 %v643, %v1045
        %v1047 = vpop.f32.mrf.mxu0
        %v1048 = vadd.f32 %v647, %v1047
        %1049 = vmatprep.mubr.bf16.mxu0 %v922
        %1050 = vmatmul.mubr.bf16.gmra.mxu0 %v770
        %v1051 = vpop.f32.mrf.mxu0
        %v1052 = vadd.f32 %v643, %v1051
        %v1053 = vpop.f32.mrf.mxu0
        %v1054 = vadd.f32 %v647, %v1053
        %v1055 = vpop.f32.mrf.mxu0
        %v1056 = vadd.f32 %v643, %v1055
        %v1057 = vpop.f32.mrf.mxu0
        %v1058 = vadd.f32 %v647, %v1057
        %1059 = vmatprep.mubr.bf16.mxu0 %v925
        %1060 = vmatmul.mubr.bf16.gmra.mxu0 %v772
        %v1061 = vpop.f32.mrf.mxu0
        %v1062 = vadd.f32 %v643, %v1061
        %v1063 = vpop.f32.mrf.mxu0
        %v1064 = vadd.f32 %v647, %v1063
        %v1065 = vpop.f32.mrf.mxu0
        %v1066 = vadd.f32 %v643, %v1065
        %v1067 = vpop.f32.mrf.mxu0
        %v1068 = vadd.f32 %v647, %v1067
        %1069 = vmatprep.mubr.bf16.mxu0 %v928
        %1070 = vmatmul.mubr.bf16.gmra.mxu0 %v774
        %v1071 = vpop.f32.mrf.mxu0
        %v1072 = vadd.f32 %v643, %v1071
        %v1073 = vpop.f32.mrf.mxu0
        %v1074 = vadd.f32 %v647, %v1073
        %v1075 = vpop.f32.mrf.mxu0
        %v1076 = vadd.f32 %v643, %v1075
        %v1077 = vpop.f32.mrf.mxu0
        %v1078 = vadd.f32 %v647, %v1077
        %1079 = vmatprep.mubr.bf16.mxu0 %v931
        %1080 = vmatmul.mubr.bf16.gmra.mxu0 %v776
        %v1081 = vpop.f32.mrf.mxu0
        %v1082 = vadd.f32 %v643, %v1081
        %v1083 = vpop.f32.mrf.mxu0
        %v1084 = vadd.f32 %v647, %v1083
        %v1085 = vpop.f32.mrf.mxu0
        %v1086 = vadd.f32 %v643, %v1085
        %v1087 = vpop.f32.mrf.mxu0
        %v1088 = vadd.f32 %v647, %v1087
        %1089 = vmatprep.mubr.bf16.mxu0 %v934
        %1090 = vmatmul.mubr.bf16.gmra.mxu0 %v778
        %v1091 = vpop.f32.mrf.mxu0
        %v1092 = vadd.f32 %v643, %v1091
        %v1093 = vpop.f32.mrf.mxu0
        %v1094 = vadd.f32 %v647, %v1093
        %v1095 = vpop.f32.mrf.mxu0
        %v1096 = vadd.f32 %v643, %v1095
        %v1097 = vpop.f32.mrf.mxu0
        %v1098 = vadd.f32 %v647, %v1097
        %1099 = vmatprep.mubr.bf16.mxu0 %v937
        %1100 = vmatmul.mubr.bf16.gmra.mxu0 %v780
        %v1101 = vpop.f32.mrf.mxu0
        %v1102 = vadd.f32 %v643, %v1101
        %v1103 = vpop.f32.mrf.mxu0
        %v1104 = vadd.f32 %v647, %v1103
        %v1105 = vpop.f32.mrf.mxu0
        %v1106 = vadd.f32 %v643, %v1105
        %v1107 = vpop.f32.mrf.mxu0
        %v1108 = vadd.f32 %v647, %v1107
        %1109 = vmatprep.mubr.bf16.mxu0 %v940
        %1110 = vmatmul.mubr.bf16.gmra.mxu0 %v782
        %v1111 = vpop.f32.mrf.mxu0
        %v1112 = vadd.f32 %v643, %v1111
        %v1113 = vpop.f32.mrf.mxu0
        %v1114 = vadd.f32 %v647, %v1113
        %v1115 = vpop.f32.mrf.mxu0
        %v1116 = vadd.f32 %v643, %v1115
        %v1117 = vpop.f32.mrf.mxu0
        %v1118 = vadd.f32 %v647, %v1117
        %1119 = vmatprep.mubr.bf16.mxu0 %v943
        %1120 = vmatmul.mubr.bf16.gmra.mxu0 %v784
        %v1121 = vpop.f32.mrf.mxu0
        %v1122 = vadd.f32 %v643, %v1121
        %v1123 = vpop.f32.mrf.mxu0
        %v1124 = vadd.f32 %v647, %v1123
        %v1125 = vpop.f32.mrf.mxu0
        %v1126 = vadd.f32 %v643, %v1125
        %v1127 = vpop.f32.mrf.mxu0
        %v1128 = vadd.f32 %v647, %v1127
        %1129 = vmatprep.mubr.bf16.mxu0 %v946
        %1130 = vmatmul.mubr.bf16.gmra.mxu0 %v786
        %v1131 = vpop.f32.mrf.mxu0
        %v1132 = vadd.f32 %v643, %v1131
        %v1133 = vpop.f32.mrf.mxu0
        %v1134 = vadd.f32 %v647, %v1133
        %v1135 = vpop.f32.mrf.mxu0
        %v1136 = vadd.f32 %v643, %v1135
        %v1137 = vpop.f32.mrf.mxu0
        %v1138 = vadd.f32 %v647, %v1137
        %1139 = vmatprep.mubr.bf16.mxu0 %v949
        %1140 = vmatmul.mubr.bf16.gmra.mxu0 %v788
        %v1141 = vpop.f32.mrf.mxu0
        %v1142 = vadd.f32 %v643, %v1141
        %v1143 = vpop.f32.mrf.mxu0
        %v1144 = vadd.f32 %v647, %v1143
        %v1145 = vpop.f32.mrf.mxu0
        %v1146 = vadd.f32 %v643, %v1145
        %v1147 = vpop.f32.mrf.mxu0
        %v1148 = vadd.f32 %v647, %v1147
        %1149 = vmatprep.mubr.bf16.mxu0 %v952
        %1150 = vmatmul.mubr.bf16.gmra.mxu0 %v790
        %v1151 = vpop.f32.mrf.mxu0
        %v1152 = vadd.f32 %v643, %v1151
        %v1153 = vpop.f32.mrf.mxu0
        %v1154 = vadd.f32 %v647, %v1153
        %v1155 = vpop.f32.mrf.mxu0
        %v1156 = vadd.f32 %v643, %v1155
        %v1157 = vpop.f32.mrf.mxu0
        %v1158 = vadd.f32 %v647, %v1157
        %1159 = vmatprep.mubr.bf16.mxu0 %v955
        %1160 = vmatmul.mubr.bf16.gmra.mxu0 %v792
        %v1161 = vpop.f32.mrf.mxu0
        %v1162 = vadd.f32 %v643, %v1161
        %v1163 = vpop.f32.mrf.mxu0
        %v1164 = vadd.f32 %v647, %v1163
        %v1165 = vpop.f32.mrf.mxu0
        %v1166 = vadd.f32 %v643, %v1165
        %v1167 = vpop.f32.mrf.mxu0
        %v1168 = vadd.f32 %v647, %v1167
        %1169 = vdwg.mxu0
        %v1170 = vmax.f32 %v992, 0.0
        %v1171 = vmax.f32 %v994, 0.0
        %v1172 = vmax.f32 %v996, 0.0
        %v1173 = vmax.f32 %v998, 0.0
        %v1174 = vmax.f32 %v1002, 0.0
        %v1175 = vmax.f32 %v1004, 0.0
        %v1176 = vmax.f32 %v1006, 0.0
        %v1177 = vmax.f32 %v1008, 0.0
        %v1178 = vmax.f32 %v1012, 0.0
        %v1179 = vmax.f32 %v1014, 0.0
        %v1180 = vmax.f32 %v1016, 0.0
        %v1181 = vmax.f32 %v1018, 0.0
        %v1182 = vmax.f32 %v1022, 0.0
        %v1183 = vmax.f32 %v1024, 0.0
        %v1184 = vmax.f32 %v1026, 0.0
        %v1185 = vmax.f32 %v1028, 0.0
        %v1186 = vmax.f32 %v1032, 0.0
        %v1187 = vmax.f32 %v1034, 0.0
        %v1188 = vmax.f32 %v1036, 0.0
        %v1189 = vmax.f32 %v1038, 0.0
        %v1190 = vmax.f32 %v1042, 0.0
        %v1191 = vmax.f32 %v1044, 0.0
        %v1192 = vmax.f32 %v1046, 0.0
        %v1193 = vmax.f32 %v1048, 0.0
        %v1194 = vmax.f32 %v1052, 0.0
        %v1195 = vmax.f32 %v1054, 0.0
        %v1196 = vmax.f32 %v1056, 0.0
        %v1197 = vmax.f32 %v1058, 0.0
        %v1198 = vmax.f32 %v1062, 0.0
        %v1199 = vmax.f32 %v1064, 0.0
        %v1200 = vmax.f32 %v1066, 0.0
        %v1201 = vmax.f32 %v1068, 0.0
        %v1202 = vmax.f32 %v1072, 0.0
        %v1203 = vmax.f32 %v1074, 0.0
        %v1204 = vmax.f32 %v1076, 0.0
        %v1205 = vmax.f32 %v1078, 0.0
        %v1206 = vmax.f32 %v1082, 0.0
        %v1207 = vmax.f32 %v1084, 0.0
        %v1208 = vmax.f32 %v1086, 0.0
        %v1209 = vmax.f32 %v1088, 0.0
        %v1210 = vmax.f32 %v1092, 0.0
        %v1211 = vmax.f32 %v1094, 0.0
        %v1212 = vmax.f32 %v1096, 0.0
        %v1213 = vmax.f32 %v1098, 0.0
        %v1214 = vmax.f32 %v1102, 0.0
        %v1215 = vmax.f32 %v1104, 0.0
        %v1216 = vmax.f32 %v1106, 0.0
        %v1217 = vmax.f32 %v1108, 0.0
        %v1218 = vmax.f32 %v1112, 0.0
        %v1219 = vmax.f32 %v1114, 0.0
        %v1220 = vmax.f32 %v1116, 0.0
        %v1221 = vmax.f32 %v1118, 0.0
        %v1222 = vmax.f32 %v1122, 0.0
        %v1223 = vmax.f32 %v1124, 0.0
        %v1224 = vmax.f32 %v1126, 0.0
        %v1225 = vmax.f32 %v1128, 0.0
        %v1226 = vmax.f32 %v1132, 0.0
        %v1227 = vmax.f32 %v1134, 0.0
        %v1228 = vmax.f32 %v1136, 0.0
        %v1229 = vmax.f32 %v1138, 0.0
        %v1230 = vmax.f32 %v1142, 0.0
        %v1231 = vmax.f32 %v1144, 0.0
        %v1232 = vmax.f32 %v1146, 0.0
        %v1233 = vmax.f32 %v1148, 0.0
        %v1234 = vmax.f32 %v1152, 0.0
        %v1235 = vmax.f32 %v1154, 0.0
        %v1236 = vmax.f32 %v1156, 0.0
        %v1237 = vmax.f32 %v1158, 0.0
        %v1238 = vmax.f32 %v1162, 0.0
        %v1239 = vmax.f32 %v1164, 0.0
        %v1240 = vmax.f32 %v1166, 0.0
        %v1241 = vmax.f32 %v1168, 0.0
        %v1242 = vpack.c.bf16 %v1172, %v1170
        %v1243 = vpack.c.bf16 %v1173, %v1171
        %v1244 = vpack.c.bf16 %v1176, %v1174
        %v1245 = vpack.c.bf16 %v1177, %v1175
        %v1246 = vpack.c.bf16 %v1180, %v1178
        %v1247 = vpack.c.bf16 %v1181, %v1179
        %v1248 = vpack.c.bf16 %v1184, %v1182
        %v1249 = vpack.c.bf16 %v1185, %v1183
        %v1250 = vpack.c.bf16 %v1188, %v1186
        %v1251 = vpack.c.bf16 %v1189, %v1187
        %v1252 = vpack.c.bf16 %v1192, %v1190
        %v1253 = vpack.c.bf16 %v1193, %v1191
        %v1254 = vpack.c.bf16 %v1196, %v1194
        %v1255 = vpack.c.bf16 %v1197, %v1195
        %v1256 = vpack.c.bf16 %v1200, %v1198
        %v1257 = vpack.c.bf16 %v1201, %v1199
        %v1258 = vpack.c.bf16 %v1204, %v1202
        %v1259 = vpack.c.bf16 %v1205, %v1203
        %v1260 = vpack.c.bf16 %v1208, %v1206
        %v1261 = vpack.c.bf16 %v1209, %v1207
        %v1262 = vpack.c.bf16 %v1212, %v1210
        %v1263 = vpack.c.bf16 %v1213, %v1211
        %v1264 = vpack.c.bf16 %v1216, %v1214
        %v1265 = vpack.c.bf16 %v1217, %v1215
        %v1266 = vpack.c.bf16 %v1220, %v1218
        %v1267 = vpack.c.bf16 %v1221, %v1219
        %v1268 = vpack.c.bf16 %v1224, %v1222
        %v1269 = vpack.c.bf16 %v1225, %v1223
        %v1270 = vpack.c.bf16 %v1228, %v1226
        %v1271 = vpack.c.bf16 %v1229, %v1227
        %v1272 = vpack.c.bf16 %v1232, %v1230
        %v1273 = vpack.c.bf16 %v1233, %v1231
        %v1274 = vpack.c.bf16 %v1236, %v1234
        %v1275 = vpack.c.bf16 %v1237, %v1235
        %v1276 = vpack.c.bf16 %v1240, %v1238
        %v1277 = vpack.c.bf16 %v1241, %v1239
        %v1278 = vld [vmem:[%s4] sm:$0xff]
        %v1279 = vld [vmem:[%s4 + $0x8] sm:$0xff]
        %v1280 = vld [vmem:[%s4 + $0x10] sm:$0xff]
        %v1281 = vld [vmem:[%s4 + $0x18] sm:$0xff]
        %v1282 = vld [vmem:[%s4 + $0x20] sm:$0xff]
        %v1283 = vld [vmem:[%s4 + $0x28] sm:$0xff]
        %v1284 = vld [vmem:[%s4 + $0x30] sm:$0xff]
        %v1285 = vld [vmem:[%s4 + $0x38] sm:$0xff]
        %v1286 = vld [vmem:[%s4 + $0x40] sm:$0xff]
        %v1287 = vld [vmem:[%s4 + $0x48] sm:$0xff]
        %v1288 = vld [vmem:[%s4 + $0x50] sm:$0xff]
        %v1289 = vld [vmem:[%s4 + $0x58] sm:$0xff]
        %v1290 = vld [vmem:[%s4 + $0x60] sm:$0xff]
        %v1291 = vld [vmem:[%s4 + $0x68] sm:$0xff]
        %v1292 = vld [vmem:[%s4 + $0x70] sm:$0xff]
        %v1293 = vld [vmem:[%s4 + $0x78] sm:$0xff]
        %v1294 = vld [vmem:[%s4 + $0x80] sm:$0xff]
        %v1295 = vld [vmem:[%s4 + $0x88] sm:$0xff]
        %s1296 = scalar_lea.vmem %s12, 1
        %v1297 = vld [vmem:[%s1296] ss:$8 sm:$0x3]
        %v1299 = vlaneseq
        %v1300 = vshrl.u32 %v1299, 7
        %v1301 = vsub.s32 0, %v1300
        %v1302 = vrot.slane %v1297, %v1301
        %v1303 = vlaneseq
        %v1304 = vshrl.u32 %v1303, 7
        %v1305 = vsub.s32 1, %v1304
        %v1306 = vrot.slane %v1297, %v1305
        %v1327 = vunpack.c.l.b16 %v1278
        %v1328 = vunpack.c.h.b16 %v1278
        %v1329 = vunpack.c.l.b16 %v1279
        %v1330 = vunpack.c.h.b16 %v1279
        %v1331 = vunpack.c.l.b16 %v1280
        %v1332 = vunpack.c.h.b16 %v1280
        %v1333 = vunpack.c.l.b16 %v1281
        %v1334 = vunpack.c.h.b16 %v1281
        %v1335 = vunpack.c.l.b16 %v1282
        %v1336 = vunpack.c.h.b16 %v1282
        %v1337 = vunpack.c.l.b16 %v1283
        %v1338 = vunpack.c.h.b16 %v1283
        %v1339 = vunpack.c.l.b16 %v1284
        %v1340 = vunpack.c.h.b16 %v1284
        %v1341 = vunpack.c.l.b16 %v1285
        %v1342 = vunpack.c.h.b16 %v1285
        %v1343 = vunpack.c.l.b16 %v1286
        %v1344 = vunpack.c.h.b16 %v1286
        %v1345 = vunpack.c.l.b16 %v1287
        %v1346 = vunpack.c.h.b16 %v1287
        %v1347 = vunpack.c.l.b16 %v1288
        %v1348 = vunpack.c.h.b16 %v1288
        %v1349 = vunpack.c.l.b16 %v1289
        %v1350 = vunpack.c.h.b16 %v1289
        %v1351 = vunpack.c.l.b16 %v1290
        %v1352 = vunpack.c.h.b16 %v1290
        %v1353 = vunpack.c.l.b16 %v1291
        %v1354 = vunpack.c.h.b16 %v1291
        %v1355 = vunpack.c.l.b16 %v1292
        %v1356 = vunpack.c.h.b16 %v1292
        %v1357 = vunpack.c.l.b16 %v1293
        %v1358 = vunpack.c.h.b16 %v1293
        %v1359 = vunpack.c.l.b16 %v1294
        %v1360 = vunpack.c.h.b16 %v1294
        %v1361 = vunpack.c.l.b16 %v1295
        %v1362 = vunpack.c.h.b16 %v1295
        %v1363 = vpack.c.b16 %v1329, %v1327
        %v1364 = vpack.c.b16 %v1330, %v1328
        %v1365 = vpack.c.b16 %v1333, %v1331
        %v1366 = vpack.c.b16 %v1334, %v1332
        %v1367 = vpack.c.b16 %v1337, %v1335
        %v1368 = vpack.c.b16 %v1338, %v1336
        %v1369 = vpack.c.b16 %v1341, %v1339
        %v1370 = vpack.c.b16 %v1342, %v1340
        %v1371 = vpack.c.b16 %v1345, %v1343
        %v1372 = vpack.c.b16 %v1346, %v1344
        %v1373 = vpack.c.b16 %v1349, %v1347
        %v1374 = vpack.c.b16 %v1350, %v1348
        %v1375 = vpack.c.b16 %v1353, %v1351
        %v1376 = vpack.c.b16 %v1354, %v1352
        %v1377 = vpack.c.b16 %v1357, %v1355
        %v1378 = vpack.c.b16 %v1358, %v1356
        %v1379 = vpack.c.b16 %v1361, %v1359
        %v1380 = vpack.c.b16 %v1362, %v1360
        %v1400 = vsel %vm902, %v1243, 0
        %v1403 = vsel %vm902, %v1245, 0
        %v1406 = vsel %vm902, %v1247, 0
        %v1409 = vsel %vm902, %v1249, 0
        %v1412 = vsel %vm902, %v1251, 0
        %v1415 = vsel %vm902, %v1253, 0
        %v1418 = vsel %vm902, %v1255, 0
        %v1421 = vsel %vm902, %v1257, 0
        %v1424 = vsel %vm902, %v1259, 0
        %v1427 = vsel %vm902, %v1261, 0
        %v1430 = vsel %vm902, %v1263, 0
        %v1433 = vsel %vm902, %v1265, 0
        %v1436 = vsel %vm902, %v1267, 0
        %v1439 = vsel %vm902, %v1269, 0
        %v1442 = vsel %vm902, %v1271, 0
        %v1445 = vsel %vm902, %v1273, 0
        %v1448 = vsel %vm902, %v1275, 0
        %v1451 = vsel %vm902, %v1277, 0
        %1453 = vmatprep.subr.bf16.mxu0 %v1378
        %1454 = vmatpush1.bf16.msra.mxu0 %v1377
        %1455 = vmatprep.subr.bf16.mxu0 %v1376
        %1456 = vmatpush1.bf16.msra.mxu0 %v1375
        %1457 = vmatprep.subr.bf16.mxu0 %v1374
        %1458 = vmatpush1.bf16.msra.mxu0 %v1373
        %1459 = vmatprep.subr.bf16.mxu0 %v1372
        %1460 = vmatpush1.bf16.msra.mxu0 %v1371
        %1461 = vmatprep.subr.bf16.mxu0 %v1370
        %1462 = vmatpush1.bf16.msra.mxu0 %v1369
        %1463 = vmatprep.subr.bf16.mxu0 %v1368
        %1464 = vmatpush1.bf16.msra.mxu0 %v1367
        %1465 = vmatprep.subr.bf16.mxu0 %v1366
        %1466 = vmatpush1.bf16.msra.mxu0 %v1365
        %1467 = vmatprep.subr.bf16.mxu0 %v1364
        %1468 = vmatpush1.bf16.msra.mxu0 %v1363
        %1469 = vmatprep.subr.bf16.mxu0 0
        %1470 = vmatpush2.bf16.msra.mxu0 0
        %1471 = vmatprep.subr.bf16.mxu0 0
        %1472 = vmatpush2.bf16.msra.mxu0 0
        %1473 = vmatprep.subr.bf16.mxu0 0
        %1474 = vmatpush2.bf16.msra.mxu0 0
        %1475 = vmatprep.subr.bf16.mxu0 0
        %1476 = vmatpush2.bf16.msra.mxu0 0
        %1477 = vmatprep.subr.bf16.mxu0 0
        %1478 = vmatpush2.bf16.msra.mxu0 0
        %1479 = vmatprep.subr.bf16.mxu0 0
        %1480 = vmatpush2.bf16.msra.mxu0 0
        %1481 = vmatprep.subr.bf16.mxu0 0
        %1482 = vmatpush2.bf16.msra.mxu0 0
        %1483 = vmatprep.subr.bf16.mxu0 %v1380
        %1484 = vmatpush2.bf16.msra.mxu0 %v1379
        %1485 = vmatprep.mubr.bf16.mxu0 %v1400
        %1486 = vmatmul.mubr.bf16.gmra.mxu0 %v1242
        %v1487 = vpop.f32.mrf.mxu0
        %v1488 = vadd.f32 %v1302, %v1487
        %v1489 = vpop.f32.mrf.mxu0
        %v1490 = vadd.f32 %v1306, %v1489
        %v1491 = vpop.f32.mrf.mxu0
        %v1492 = vadd.f32 %v1302, %v1491
        %v1493 = vpop.f32.mrf.mxu0
        %v1494 = vadd.f32 %v1306, %v1493
        %1495 = vmatprep.mubr.bf16.mxu0 %v1403
        %1496 = vmatmul.mubr.bf16.gmra.mxu0 %v1244
        %v1497 = vpop.f32.mrf.mxu0
        %v1498 = vadd.f32 %v1302, %v1497
        %v1499 = vpop.f32.mrf.mxu0
        %v1500 = vadd.f32 %v1306, %v1499
        %v1501 = vpop.f32.mrf.mxu0
        %v1502 = vadd.f32 %v1302, %v1501
        %v1503 = vpop.f32.mrf.mxu0
        %v1504 = vadd.f32 %v1306, %v1503
        %1505 = vmatprep.mubr.bf16.mxu0 %v1406
        %1506 = vmatmul.mubr.bf16.gmra.mxu0 %v1246
        %v1507 = vpop.f32.mrf.mxu0
        %v1508 = vadd.f32 %v1302, %v1507
        %v1509 = vpop.f32.mrf.mxu0
        %v1510 = vadd.f32 %v1306, %v1509
        %v1511 = vpop.f32.mrf.mxu0
        %v1512 = vadd.f32 %v1302, %v1511
        %v1513 = vpop.f32.mrf.mxu0
        %v1514 = vadd.f32 %v1306, %v1513
        %1515 = vmatprep.mubr.bf16.mxu0 %v1409
        %1516 = vmatmul.mubr.bf16.gmra.mxu0 %v1248
        %v1517 = vpop.f32.mrf.mxu0
        %v1518 = vadd.f32 %v1302, %v1517
        %v1519 = vpop.f32.mrf.mxu0
        %v1520 = vadd.f32 %v1306, %v1519
        %v1521 = vpop.f32.mrf.mxu0
        %v1522 = vadd.f32 %v1302, %v1521
        %v1523 = vpop.f32.mrf.mxu0
        %v1524 = vadd.f32 %v1306, %v1523
        %1525 = vmatprep.mubr.bf16.mxu0 %v1412
        %1526 = vmatmul.mubr.bf16.gmra.mxu0 %v1250
        %v1527 = vpop.f32.mrf.mxu0
        %v1528 = vadd.f32 %v1302, %v1527
        %v1529 = vpop.f32.mrf.mxu0
        %v1530 = vadd.f32 %v1306, %v1529
        %v1531 = vpop.f32.mrf.mxu0
        %v1532 = vadd.f32 %v1302, %v1531
        %v1533 = vpop.f32.mrf.mxu0
        %v1534 = vadd.f32 %v1306, %v1533
        %1535 = vmatprep.mubr.bf16.mxu0 %v1415
        %1536 = vmatmul.mubr.bf16.gmra.mxu0 %v1252
        %v1537 = vpop.f32.mrf.mxu0
        %v1538 = vadd.f32 %v1302, %v1537
        %v1539 = vpop.f32.mrf.mxu0
        %v1540 = vadd.f32 %v1306, %v1539
        %v1541 = vpop.f32.mrf.mxu0
        %v1542 = vadd.f32 %v1302, %v1541
        %v1543 = vpop.f32.mrf.mxu0
        %v1544 = vadd.f32 %v1306, %v1543
        %1545 = vmatprep.mubr.bf16.mxu0 %v1418
        %1546 = vmatmul.mubr.bf16.gmra.mxu0 %v1254
        %v1547 = vpop.f32.mrf.mxu0
        %v1548 = vadd.f32 %v1302, %v1547
        %v1549 = vpop.f32.mrf.mxu0
        %v1550 = vadd.f32 %v1306, %v1549
        %v1551 = vpop.f32.mrf.mxu0
        %v1552 = vadd.f32 %v1302, %v1551
        %v1553 = vpop.f32.mrf.mxu0
        %v1554 = vadd.f32 %v1306, %v1553
        %1555 = vmatprep.mubr.bf16.mxu0 %v1421
        %1556 = vmatmul.mubr.bf16.gmra.mxu0 %v1256
        %v1557 = vpop.f32.mrf.mxu0
        %v1558 = vadd.f32 %v1302, %v1557
        %v1559 = vpop.f32.mrf.mxu0
        %v1560 = vadd.f32 %v1306, %v1559
        %v1561 = vpop.f32.mrf.mxu0
        %v1562 = vadd.f32 %v1302, %v1561
        %v1563 = vpop.f32.mrf.mxu0
        %v1564 = vadd.f32 %v1306, %v1563
        %1565 = vmatprep.mubr.bf16.mxu0 %v1424
        %1566 = vmatmul.mubr.bf16.gmra.mxu0 %v1258
        %v1567 = vpop.f32.mrf.mxu0
        %v1568 = vadd.f32 %v1302, %v1567
        %v1569 = vpop.f32.mrf.mxu0
        %v1570 = vadd.f32 %v1306, %v1569
        %v1571 = vpop.f32.mrf.mxu0
        %v1572 = vadd.f32 %v1302, %v1571
        %v1573 = vpop.f32.mrf.mxu0
        %v1574 = vadd.f32 %v1306, %v1573
        %1575 = vmatprep.mubr.bf16.mxu0 %v1427
        %1576 = vmatmul.mubr.bf16.gmra.mxu0 %v1260
        %v1577 = vpop.f32.mrf.mxu0
        %v1578 = vadd.f32 %v1302, %v1577
        %v1579 = vpop.f32.mrf.mxu0
        %v1580 = vadd.f32 %v1306, %v1579
        %v1581 = vpop.f32.mrf.mxu0
        %v1582 = vadd.f32 %v1302, %v1581
        %v1583 = vpop.f32.mrf.mxu0
        %v1584 = vadd.f32 %v1306, %v1583
        %1585 = vmatprep.mubr.bf16.mxu0 %v1430
        %1586 = vmatmul.mubr.bf16.gmra.mxu0 %v1262
        %v1587 = vpop.f32.mrf.mxu0
        %v1588 = vadd.f32 %v1302, %v1587
        %v1589 = vpop.f32.mrf.mxu0
        %v1590 = vadd.f32 %v1306, %v1589
        %v1591 = vpop.f32.mrf.mxu0
        %v1592 = vadd.f32 %v1302, %v1591
        %v1593 = vpop.f32.mrf.mxu0
        %v1594 = vadd.f32 %v1306, %v1593
        %1595 = vmatprep.mubr.bf16.mxu0 %v1433
        %1596 = vmatmul.mubr.bf16.gmra.mxu0 %v1264
        %v1597 = vpop.f32.mrf.mxu0
        %v1598 = vadd.f32 %v1302, %v1597
        %v1599 = vpop.f32.mrf.mxu0
        %v1600 = vadd.f32 %v1306, %v1599
        %v1601 = vpop.f32.mrf.mxu0
        %v1602 = vadd.f32 %v1302, %v1601
        %v1603 = vpop.f32.mrf.mxu0
        %v1604 = vadd.f32 %v1306, %v1603
        %1605 = vmatprep.mubr.bf16.mxu0 %v1436
        %1606 = vmatmul.mubr.bf16.gmra.mxu0 %v1266
        %v1607 = vpop.f32.mrf.mxu0
        %v1608 = vadd.f32 %v1302, %v1607
        %v1609 = vpop.f32.mrf.mxu0
        %v1610 = vadd.f32 %v1306, %v1609
        %v1611 = vpop.f32.mrf.mxu0
        %v1612 = vadd.f32 %v1302, %v1611
        %v1613 = vpop.f32.mrf.mxu0
        %v1614 = vadd.f32 %v1306, %v1613
        %1615 = vmatprep.mubr.bf16.mxu0 %v1439
        %1616 = vmatmul.mubr.bf16.gmra.mxu0 %v1268
        %v1617 = vpop.f32.mrf.mxu0
        %v1618 = vadd.f32 %v1302, %v1617
        %v1619 = vpop.f32.mrf.mxu0
        %v1620 = vadd.f32 %v1306, %v1619
        %v1621 = vpop.f32.mrf.mxu0
        %v1622 = vadd.f32 %v1302, %v1621
        %v1623 = vpop.f32.mrf.mxu0
        %v1624 = vadd.f32 %v1306, %v1623
        %1625 = vmatprep.mubr.bf16.mxu0 %v1442
        %1626 = vmatmul.mubr.bf16.gmra.mxu0 %v1270
        %v1627 = vpop.f32.mrf.mxu0
        %v1628 = vadd.f32 %v1302, %v1627
        %v1629 = vpop.f32.mrf.mxu0
        %v1630 = vadd.f32 %v1306, %v1629
        %v1631 = vpop.f32.mrf.mxu0
        %v1632 = vadd.f32 %v1302, %v1631
        %v1633 = vpop.f32.mrf.mxu0
        %v1634 = vadd.f32 %v1306, %v1633
        %1635 = vmatprep.mubr.bf16.mxu0 %v1445
        %1636 = vmatmul.mubr.bf16.gmra.mxu0 %v1272
        %v1637 = vpop.f32.mrf.mxu0
        %v1638 = vadd.f32 %v1302, %v1637
        %v1639 = vpop.f32.mrf.mxu0
        %v1640 = vadd.f32 %v1306, %v1639
        %v1641 = vpop.f32.mrf.mxu0
        %v1642 = vadd.f32 %v1302, %v1641
        %v1643 = vpop.f32.mrf.mxu0
        %v1644 = vadd.f32 %v1306, %v1643
        %1645 = vmatprep.mubr.bf16.mxu0 %v1448
        %1646 = vmatmul.mubr.bf16.gmra.mxu0 %v1274
        %v1647 = vpop.f32.mrf.mxu0
        %v1648 = vadd.f32 %v1302, %v1647
        %v1649 = vpop.f32.mrf.mxu0
        %v1650 = vadd.f32 %v1306, %v1649
        %v1651 = vpop.f32.mrf.mxu0
        %v1652 = vadd.f32 %v1302, %v1651
        %v1653 = vpop.f32.mrf.mxu0
        %v1654 = vadd.f32 %v1306, %v1653
        %1655 = vmatprep.mubr.bf16.mxu0 %v1451
        %1656 = vmatmul.mubr.bf16.gmra.mxu0 %v1276
        %v1657 = vpop.f32.mrf.mxu0
        %v1658 = vadd.f32 %v1302, %v1657
        %v1659 = vpop.f32.mrf.mxu0
        %v1660 = vadd.f32 %v1306, %v1659
        %v1661 = vpop.f32.mrf.mxu0
        %v1662 = vadd.f32 %v1302, %v1661
        %v1663 = vpop.f32.mrf.mxu0
        %v1664 = vadd.f32 %v1306, %v1663
        %1665 = vdwg.mxu0
        %v1666 = vmax.f32 %v1488, 0.0
        %v1667 = vmax.f32 %v1490, 0.0
        %v1668 = vmax.f32 %v1492, 0.0
        %v1669 = vmax.f32 %v1494, 0.0
        %v1670 = vmax.f32 %v1498, 0.0
        %v1671 = vmax.f32 %v1500, 0.0
        %v1672 = vmax.f32 %v1502, 0.0
        %v1673 = vmax.f32 %v1504, 0.0
        %v1674 = vmax.f32 %v1508, 0.0
        %v1675 = vmax.f32 %v1510, 0.0
        %v1676 = vmax.f32 %v1512, 0.0
        %v1677 = vmax.f32 %v1514, 0.0
        %v1678 = vmax.f32 %v1518, 0.0
        %v1679 = vmax.f32 %v1520, 0.0
        %v1680 = vmax.f32 %v1522, 0.0
        %v1681 = vmax.f32 %v1524, 0.0
        %v1682 = vmax.f32 %v1528, 0.0
        %v1683 = vmax.f32 %v1530, 0.0
        %v1684 = vmax.f32 %v1532, 0.0
        %v1685 = vmax.f32 %v1534, 0.0
        %v1686 = vmax.f32 %v1538, 0.0
        %v1687 = vmax.f32 %v1540, 0.0
        %v1688 = vmax.f32 %v1542, 0.0
        %v1689 = vmax.f32 %v1544, 0.0
        %v1690 = vmax.f32 %v1548, 0.0
        %v1691 = vmax.f32 %v1550, 0.0
        %v1692 = vmax.f32 %v1552, 0.0
        %v1693 = vmax.f32 %v1554, 0.0
        %v1694 = vmax.f32 %v1558, 0.0
        %v1695 = vmax.f32 %v1560, 0.0
        %v1696 = vmax.f32 %v1562, 0.0
        %v1697 = vmax.f32 %v1564, 0.0
        %v1698 = vmax.f32 %v1568, 0.0
        %v1699 = vmax.f32 %v1570, 0.0
        %v1700 = vmax.f32 %v1572, 0.0
        %v1701 = vmax.f32 %v1574, 0.0
        %v1702 = vmax.f32 %v1578, 0.0
        %v1703 = vmax.f32 %v1580, 0.0
        %v1704 = vmax.f32 %v1582, 0.0
        %v1705 = vmax.f32 %v1584, 0.0
        %v1706 = vmax.f32 %v1588, 0.0
        %v1707 = vmax.f32 %v1590, 0.0
        %v1708 = vmax.f32 %v1592, 0.0
        %v1709 = vmax.f32 %v1594, 0.0
        %v1710 = vmax.f32 %v1598, 0.0
        %v1711 = vmax.f32 %v1600, 0.0
        %v1712 = vmax.f32 %v1602, 0.0
        %v1713 = vmax.f32 %v1604, 0.0
        %v1714 = vmax.f32 %v1608, 0.0
        %v1715 = vmax.f32 %v1610, 0.0
        %v1716 = vmax.f32 %v1612, 0.0
        %v1717 = vmax.f32 %v1614, 0.0
        %v1718 = vmax.f32 %v1618, 0.0
        %v1719 = vmax.f32 %v1620, 0.0
        %v1720 = vmax.f32 %v1622, 0.0
        %v1721 = vmax.f32 %v1624, 0.0
        %v1722 = vmax.f32 %v1628, 0.0
        %v1723 = vmax.f32 %v1630, 0.0
        %v1724 = vmax.f32 %v1632, 0.0
        %v1725 = vmax.f32 %v1634, 0.0
        %v1726 = vmax.f32 %v1638, 0.0
        %v1727 = vmax.f32 %v1640, 0.0
        %v1728 = vmax.f32 %v1642, 0.0
        %v1729 = vmax.f32 %v1644, 0.0
        %v1730 = vmax.f32 %v1648, 0.0
        %v1731 = vmax.f32 %v1650, 0.0
        %v1732 = vmax.f32 %v1652, 0.0
        %v1733 = vmax.f32 %v1654, 0.0
        %v1734 = vmax.f32 %v1658, 0.0
        %v1735 = vmax.f32 %v1660, 0.0
        %v1736 = vmax.f32 %v1662, 0.0
        %v1737 = vmax.f32 %v1664, 0.0
        %v1738 = vunpack.c.l.bf16 %v576
        %v1739 = vunpack.c.h.bf16 %v576
        %v1740 = vunpack.c.l.bf16 %v577
        %v1741 = vunpack.c.h.bf16 %v577
        %v1742 = vunpack.c.l.bf16 %v578
        %v1743 = vunpack.c.h.bf16 %v578
        %v1744 = vunpack.c.l.bf16 %v579
        %v1745 = vunpack.c.h.bf16 %v579
        %v1746 = vunpack.c.l.bf16 %v580
        %v1747 = vunpack.c.h.bf16 %v580
        %v1748 = vunpack.c.l.bf16 %v581
        %v1749 = vunpack.c.h.bf16 %v581
        %v1750 = vunpack.c.l.bf16 %v582
        %v1751 = vunpack.c.h.bf16 %v582
        %v1752 = vunpack.c.l.bf16 %v583
        %v1753 = vunpack.c.h.bf16 %v583
        %v1754 = vunpack.c.l.bf16 %v584
        %v1755 = vunpack.c.h.bf16 %v584
        %v1756 = vunpack.c.l.bf16 %v585
        %v1757 = vunpack.c.h.bf16 %v585
        %v1758 = vunpack.c.l.bf16 %v586
        %v1759 = vunpack.c.h.bf16 %v586
        %v1760 = vunpack.c.l.bf16 %v587
        %v1761 = vunpack.c.h.bf16 %v587
        %v1762 = vunpack.c.l.bf16 %v588
        %v1763 = vunpack.c.h.bf16 %v588
        %v1764 = vunpack.c.l.bf16 %v589
        %v1765 = vunpack.c.h.bf16 %v589
        %v1766 = vunpack.c.l.bf16 %v590
        %v1767 = vunpack.c.h.bf16 %v590
        %v1768 = vunpack.c.l.bf16 %v591
        %v1769 = vunpack.c.h.bf16 %v591
        %v1770 = vunpack.c.l.bf16 %v592
        %v1771 = vunpack.c.h.bf16 %v592
        %v1772 = vunpack.c.l.bf16 %v593
        %v1773 = vunpack.c.h.bf16 %v593
        %v1774 = vunpack.c.l.bf16 %v594
        %v1775 = vunpack.c.h.bf16 %v594
        %v1776 = vunpack.c.l.bf16 %v595
        %v1777 = vunpack.c.h.bf16 %v595
        %v1778 = vunpack.c.l.bf16 %v596
        %v1779 = vunpack.c.h.bf16 %v596
        %v1780 = vunpack.c.l.bf16 %v597
        %v1781 = vunpack.c.h.bf16 %v597
        %v1782 = vunpack.c.l.bf16 %v598
        %v1783 = vunpack.c.h.bf16 %v598
        %v1784 = vunpack.c.l.bf16 %v599
        %v1785 = vunpack.c.h.bf16 %v599
        %v1786 = vunpack.c.l.bf16 %v600
        %v1787 = vunpack.c.h.bf16 %v600
        %v1788 = vunpack.c.l.bf16 %v601
        %v1789 = vunpack.c.h.bf16 %v601
        %v1790 = vunpack.c.l.bf16 %v602
        %v1791 = vunpack.c.h.bf16 %v602
        %v1792 = vunpack.c.l.bf16 %v603
        %v1793 = vunpack.c.h.bf16 %v603
        %v1794 = vunpack.c.l.bf16 %v604
        %v1795 = vunpack.c.h.bf16 %v604
        %v1796 = vunpack.c.l.bf16 %v605
        %v1797 = vunpack.c.h.bf16 %v605
        %v1798 = vunpack.c.l.bf16 %v606
        %v1799 = vunpack.c.h.bf16 %v606
        %v1800 = vunpack.c.l.bf16 %v607
        %v1801 = vunpack.c.h.bf16 %v607
        %v1802 = vunpack.c.l.bf16 %v608
        %v1803 = vunpack.c.h.bf16 %v608
        %v1804 = vunpack.c.l.bf16 %v609
        %v1805 = vunpack.c.h.bf16 %v609
        %v1806 = vunpack.c.l.bf16 %v610
        %v1807 = vunpack.c.h.bf16 %v610
        %v1808 = vunpack.c.l.bf16 %v611
        %v1809 = vunpack.c.h.bf16 %v611
        %v1810 = vadd.f32 %v1738, %v1666
        %v1811 = vadd.f32 %v1739, %v1667
        %v1812 = vadd.f32 %v1740, %v1668
        %v1813 = vadd.f32 %v1741, %v1669
        %v1814 = vadd.f32 %v1742, %v1670
        %v1815 = vadd.f32 %v1743, %v1671
        %v1816 = vadd.f32 %v1744, %v1672
        %v1817 = vadd.f32 %v1745, %v1673
        %v1818 = vadd.f32 %v1746, %v1674
        %v1819 = vadd.f32 %v1747, %v1675
        %v1820 = vadd.f32 %v1748, %v1676
        %v1821 = vadd.f32 %v1749, %v1677
        %v1822 = vadd.f32 %v1750, %v1678
        %v1823 = vadd.f32 %v1751, %v1679
        %v1824 = vadd.f32 %v1752, %v1680
        %v1825 = vadd.f32 %v1753, %v1681
        %v1826 = vadd.f32 %v1754, %v1682
        %v1827 = vadd.f32 %v1755, %v1683
        %v1828 = vadd.f32 %v1756, %v1684
        %v1829 = vadd.f32 %v1757, %v1685
        %v1830 = vadd.f32 %v1758, %v1686
        %v1831 = vadd.f32 %v1759, %v1687
        %v1832 = vadd.f32 %v1760, %v1688
        %v1833 = vadd.f32 %v1761, %v1689
        %v1834 = vadd.f32 %v1762, %v1690
        %v1835 = vadd.f32 %v1763, %v1691
        %v1836 = vadd.f32 %v1764, %v1692
        %v1837 = vadd.f32 %v1765, %v1693
        %v1838 = vadd.f32 %v1766, %v1694
        %v1839 = vadd.f32 %v1767, %v1695
        %v1840 = vadd.f32 %v1768, %v1696
        %v1841 = vadd.f32 %v1769, %v1697
        %v1842 = vadd.f32 %v1770, %v1698
        %v1843 = vadd.f32 %v1771, %v1699
        %v1844 = vadd.f32 %v1772, %v1700
        %v1845 = vadd.f32 %v1773, %v1701
        %v1846 = vadd.f32 %v1774, %v1702
        %v1847 = vadd.f32 %v1775, %v1703
        %v1848 = vadd.f32 %v1776, %v1704
        %v1849 = vadd.f32 %v1777, %v1705
        %v1850 = vadd.f32 %v1778, %v1706
        %v1851 = vadd.f32 %v1779, %v1707
        %v1852 = vadd.f32 %v1780, %v1708
        %v1853 = vadd.f32 %v1781, %v1709
        %v1854 = vadd.f32 %v1782, %v1710
        %v1855 = vadd.f32 %v1783, %v1711
        %v1856 = vadd.f32 %v1784, %v1712
        %v1857 = vadd.f32 %v1785, %v1713
        %v1858 = vadd.f32 %v1786, %v1714
        %v1859 = vadd.f32 %v1787, %v1715
        %v1860 = vadd.f32 %v1788, %v1716
        %v1861 = vadd.f32 %v1789, %v1717
        %v1862 = vadd.f32 %v1790, %v1718
        %v1863 = vadd.f32 %v1791, %v1719
        %v1864 = vadd.f32 %v1792, %v1720
        %v1865 = vadd.f32 %v1793, %v1721
        %v1866 = vadd.f32 %v1794, %v1722
        %v1867 = vadd.f32 %v1795, %v1723
        %v1868 = vadd.f32 %v1796, %v1724
        %v1869 = vadd.f32 %v1797, %v1725
        %v1870 = vadd.f32 %v1798, %v1726
        %v1871 = vadd.f32 %v1799, %v1727
        %v1872 = vadd.f32 %v1800, %v1728
        %v1873 = vadd.f32 %v1801, %v1729
        %v1874 = vadd.f32 %v1802, %v1730
        %v1875 = vadd.f32 %v1803, %v1731
        %v1876 = vadd.f32 %v1804, %v1732
        %v1877 = vadd.f32 %v1805, %v1733
        %v1878 = vadd.f32 %v1806, %v1734
        %v1879 = vadd.f32 %v1807, %v1735
        %v1880 = vadd.f32 %v1808, %v1736
        %v1881 = vadd.f32 %v1809, %v1737
        %v1882 = vpack.c.bf16 %v1812, %v1810
        %v1883 = vpack.c.bf16 %v1813, %v1811
        %v1884 = vpack.c.bf16 %v1816, %v1814
        %v1885 = vpack.c.bf16 %v1817, %v1815
        %v1886 = vpack.c.bf16 %v1820, %v1818
        %v1887 = vpack.c.bf16 %v1821, %v1819
        %v1888 = vpack.c.bf16 %v1824, %v1822
        %v1889 = vpack.c.bf16 %v1825, %v1823
        %v1890 = vpack.c.bf16 %v1828, %v1826
        %v1891 = vpack.c.bf16 %v1829, %v1827
        %v1892 = vpack.c.bf16 %v1832, %v1830
        %v1893 = vpack.c.bf16 %v1833, %v1831
        %v1894 = vpack.c.bf16 %v1836, %v1834
        %v1895 = vpack.c.bf16 %v1837, %v1835
        %v1896 = vpack.c.bf16 %v1840, %v1838
        %v1897 = vpack.c.bf16 %v1841, %v1839
        %v1898 = vpack.c.bf16 %v1844, %v1842
        %v1899 = vpack.c.bf16 %v1845, %v1843
        %v1900 = vpack.c.bf16 %v1848, %v1846
        %v1901 = vpack.c.bf16 %v1849, %v1847
        %v1902 = vpack.c.bf16 %v1852, %v1850
        %v1903 = vpack.c.bf16 %v1853, %v1851
        %v1904 = vpack.c.bf16 %v1856, %v1854
        %v1905 = vpack.c.bf16 %v1857, %v1855
        %v1906 = vpack.c.bf16 %v1860, %v1858
        %v1907 = vpack.c.bf16 %v1861, %v1859
        %v1908 = vpack.c.bf16 %v1864, %v1862
        %v1909 = vpack.c.bf16 %v1865, %v1863
        %v1910 = vpack.c.bf16 %v1868, %v1866
        %v1911 = vpack.c.bf16 %v1869, %v1867
        %v1912 = vpack.c.bf16 %v1872, %v1870
        %v1913 = vpack.c.bf16 %v1873, %v1871
        %v1914 = vpack.c.bf16 %v1876, %v1874
        %v1915 = vpack.c.bf16 %v1877, %v1875
        %v1916 = vpack.c.bf16 %v1880, %v1878
        %v1917 = vpack.c.bf16 %v1881, %v1879
        %v1954 = vunpack.c.l.b16 %v1882
        %v1955 = vunpack.c.l.b16 %v1883
        %v1956 = vunpack.c.h.b16 %v1882
        %v1957 = vunpack.c.h.b16 %v1883
        %v1958 = vunpack.c.l.b16 %v1884
        %v1959 = vunpack.c.l.b16 %v1885
        %v1960 = vunpack.c.h.b16 %v1884
        %v1961 = vunpack.c.h.b16 %v1885
        %v1962 = vunpack.c.l.b16 %v1886
        %v1963 = vunpack.c.l.b16 %v1887
        %v1964 = vunpack.c.h.b16 %v1886
        %v1965 = vunpack.c.h.b16 %v1887
        %v1966 = vunpack.c.l.b16 %v1888
        %v1967 = vunpack.c.l.b16 %v1889
        %v1968 = vunpack.c.h.b16 %v1888
        %v1969 = vunpack.c.h.b16 %v1889
        %v1970 = vunpack.c.l.b16 %v1890
        %v1971 = vunpack.c.l.b16 %v1891
        %v1972 = vunpack.c.h.b16 %v1890
        %v1973 = vunpack.c.h.b16 %v1891
        %v1974 = vunpack.c.l.b16 %v1892
        %v1975 = vunpack.c.l.b16 %v1893
        %v1976 = vunpack.c.h.b16 %v1892
        %v1977 = vunpack.c.h.b16 %v1893
        %v1978 = vunpack.c.l.b16 %v1894
        %v1979 = vunpack.c.l.b16 %v1895
        %v1980 = vunpack.c.h.b16 %v1894
        %v1981 = vunpack.c.h.b16 %v1895
        %v1982 = vunpack.c.l.b16 %v1896
        %v1983 = vunpack.c.l.b16 %v1897
        %v1984 = vunpack.c.h.b16 %v1896
        %v1985 = vunpack.c.h.b16 %v1897
        %v1986 = vunpack.c.l.b16 %v1898
        %v1987 = vunpack.c.l.b16 %v1899
        %v1988 = vunpack.c.h.b16 %v1898
        %v1989 = vunpack.c.h.b16 %v1899
        %v1990 = vunpack.c.l.b16 %v1900
        %v1991 = vunpack.c.l.b16 %v1901
        %v1992 = vunpack.c.h.b16 %v1900
        %v1993 = vunpack.c.h.b16 %v1901
        %v1994 = vunpack.c.l.b16 %v1902
        %v1995 = vunpack.c.l.b16 %v1903
        %v1996 = vunpack.c.h.b16 %v1902
        %v1997 = vunpack.c.h.b16 %v1903
        %v1998 = vunpack.c.l.b16 %v1904
        %v1999 = vunpack.c.l.b16 %v1905
        %v2000 = vunpack.c.h.b16 %v1904
        %v2001 = vunpack.c.h.b16 %v1905
        %v2002 = vunpack.c.l.b16 %v1906
        %v2003 = vunpack.c.l.b16 %v1907
        %v2004 = vunpack.c.h.b16 %v1906
        %v2005 = vunpack.c.h.b16 %v1907
        %v2006 = vunpack.c.l.b16 %v1908
        %v2007 = vunpack.c.l.b16 %v1909
        %v2008 = vunpack.c.h.b16 %v1908
        %v2009 = vunpack.c.h.b16 %v1909
        %v2010 = vunpack.c.l.b16 %v1910
        %v2011 = vunpack.c.l.b16 %v1911
        %v2012 = vunpack.c.h.b16 %v1910
        %v2013 = vunpack.c.h.b16 %v1911
        %v2014 = vunpack.c.l.b16 %v1912
        %v2015 = vunpack.c.l.b16 %v1913
        %v2016 = vunpack.c.h.b16 %v1912
        %v2017 = vunpack.c.h.b16 %v1913
        %v2018 = vunpack.c.l.b16 %v1914
        %v2019 = vunpack.c.l.b16 %v1915
        %v2020 = vunpack.c.h.b16 %v1914
        %v2021 = vunpack.c.h.b16 %v1915
        %v2022 = vunpack.c.l.b16 %v1916
        %v2023 = vunpack.c.l.b16 %v1917
        %v2024 = vunpack.c.h.b16 %v1916
        %v2025 = vunpack.c.h.b16 %v1917
        %v2026 = vpack.c.b16 %v1955, %v1954
        %v2027 = vpack.c.b16 %v1957, %v1956
        %v2028 = vpack.c.b16 %v1959, %v1958
        %v2029 = vpack.c.b16 %v1961, %v1960
        %v2030 = vpack.c.b16 %v1963, %v1962
        %v2031 = vpack.c.b16 %v1965, %v1964
        %v2032 = vpack.c.b16 %v1967, %v1966
        %v2033 = vpack.c.b16 %v1969, %v1968
        %v2034 = vpack.c.b16 %v1971, %v1970
        %v2035 = vpack.c.b16 %v1973, %v1972
        %v2036 = vpack.c.b16 %v1975, %v1974
        %v2037 = vpack.c.b16 %v1977, %v1976
        %v2038 = vpack.c.b16 %v1979, %v1978
        %v2039 = vpack.c.b16 %v1981, %v1980
        %v2040 = vpack.c.b16 %v1983, %v1982
        %v2041 = vpack.c.b16 %v1985, %v1984
        %v2042 = vpack.c.b16 %v1987, %v1986
        %v2043 = vpack.c.b16 %v1989, %v1988
        %v2044 = vpack.c.b16 %v1991, %v1990
        %v2045 = vpack.c.b16 %v1993, %v1992
        %v2046 = vpack.c.b16 %v1995, %v1994
        %v2047 = vpack.c.b16 %v1997, %v1996
        %v2048 = vpack.c.b16 %v1999, %v1998
        %v2049 = vpack.c.b16 %v2001, %v2000
        %v2050 = vpack.c.b16 %v2003, %v2002
        %v2051 = vpack.c.b16 %v2005, %v2004
        %v2052 = vpack.c.b16 %v2007, %v2006
        %v2053 = vpack.c.b16 %v2009, %v2008
        %v2054 = vpack.c.b16 %v2011, %v2010
        %v2055 = vpack.c.b16 %v2013, %v2012
        %v2056 = vpack.c.b16 %v2015, %v2014
        %v2057 = vpack.c.b16 %v2017, %v2016
        %v2058 = vpack.c.b16 %v2019, %v2018
        %v2059 = vpack.c.b16 %v2021, %v2020
        %v2060 = vpack.c.b16 %v2023, %v2022
        %v2061 = vpack.c.b16 %v2025, %v2024
        %vm2098 = vcmask 1043456
        %vm2099 = vcmask 130052
        %vm2100 = vmor %vm2099, %vm2098
        %2101 = vst.msk [vmem:[%s566] sm:$0xff] %vm2100, %v2026
        %2102 = vst.msk [vmem:[%s566 + $0x8] sm:$0xff] %vm2100, %v2027
        %2103 = vst.msk [vmem:[%s566 + $0x10] sm:$0xff] %vm2100, %v2028
        %2104 = vst.msk [vmem:[%s566 + $0x18] sm:$0xff] %vm2100, %v2029
        %2105 = vst.msk [vmem:[%s566 + $0x20] sm:$0xff] %vm2100, %v2030
        %2106 = vst.msk [vmem:[%s566 + $0x28] sm:$0xff] %vm2100, %v2031
        %2107 = vst.msk [vmem:[%s566 + $0x30] sm:$0xff] %vm2100, %v2032
        %2108 = vst.msk [vmem:[%s566 + $0x38] sm:$0xff] %vm2100, %v2033
        %2109 = vst.msk [vmem:[%s566 + $0x40] sm:$0xff] %vm2100, %v2034
        %2110 = vst.msk [vmem:[%s566 + $0x48] sm:$0xff] %vm2100, %v2035
        %2111 = vst.msk [vmem:[%s566 + $0x50] sm:$0xff] %vm2100, %v2036
        %2112 = vst.msk [vmem:[%s566 + $0x58] sm:$0xff] %vm2100, %v2037
        %2113 = vst.msk [vmem:[%s566 + $0x60] sm:$0xff] %vm2100, %v2038
        %2114 = vst.msk [vmem:[%s566 + $0x68] sm:$0xff] %vm2100, %v2039
        %2115 = vst.msk [vmem:[%s566 + $0x70] sm:$0xff] %vm2100, %v2040
        %2116 = vst.msk [vmem:[%s566 + $0x78] sm:$0xff] %vm2100, %v2041
        %2117 = vst.msk [vmem:[%s566 + $0x80] sm:$0xff] %vm2100, %v2042
        %2118 = vst.msk [vmem:[%s566 + $0x88] sm:$0xff] %vm2100, %v2043
        %2119 = vst.msk [vmem:[%s566 + $0x90] sm:$0xff] %vm2100, %v2044
        %2120 = vst.msk [vmem:[%s566 + $0x98] sm:$0xff] %vm2100, %v2045
        %2121 = vst.msk [vmem:[%s566 + $0xa0] sm:$0xff] %vm2100, %v2046
        %2122 = vst.msk [vmem:[%s566 + $0xa8] sm:$0xff] %vm2100, %v2047
        %2123 = vst.msk [vmem:[%s566 + $0xb0] sm:$0xff] %vm2100, %v2048
        %2124 = vst.msk [vmem:[%s566 + $0xb8] sm:$0xff] %vm2100, %v2049
        %2125 = vst.msk [vmem:[%s566 + $0xc0] sm:$0xff] %vm2100, %v2050
        %2126 = vst.msk [vmem:[%s566 + $0xc8] sm:$0xff] %vm2100, %v2051
        %2127 = vst.msk [vmem:[%s566 + $0xd0] sm:$0xff] %vm2100, %v2052
        %2128 = vst.msk [vmem:[%s566 + $0xd8] sm:$0xff] %vm2100, %v2053
        %2129 = vst.msk [vmem:[%s566 + $0xe0] sm:$0xff] %vm2100, %v2054
        %2130 = vst.msk [vmem:[%s566 + $0xe8] sm:$0xff] %vm2100, %v2055
        %2131 = vst.msk [vmem:[%s566 + $0xf0] sm:$0xff] %vm2100, %v2056
        %2132 = vst.msk [vmem:[%s566 + $0xf8] sm:$0xff] %vm2100, %v2057
        %2133 = vst.msk [vmem:[%s566 + $0x100] sm:$0xff] %vm2100, %v2058
        %2134 = vst.msk [vmem:[%s566 + $0x108] sm:$0xff] %vm2100, %v2059
        %2135 = vst.msk [vmem:[%s566 + $0x110] sm:$0xff] %vm2100, %v2060
        %2136 = vst.msk [vmem:[%s566 + $0x118] sm:$0xff] %vm2100, %v2061
        %v2137 = vld [vmem:[%s5] sm:$0xf]
        %v2138 = vld [vmem:[%s5 + $0x4] sm:$0xf]
        %v2139 = vld [vmem:[%s5 + $0x8] sm:$0xf]
        %v2140 = vld [vmem:[%s5 + $0xc] sm:$0xf]
        %v2141 = vld [vmem:[%s5 + $0x10] sm:$0xf]
        %v2142 = vld [vmem:[%s5 + $0x14] sm:$0xf]
        %v2143 = vld [vmem:[%s5 + $0x18] sm:$0xf]
        %v2144 = vld [vmem:[%s5 + $0x1c] sm:$0xf]
        %v2145 = vld [vmem:[%s5 + $0x20] sm:$0xf]
        %v2146 = vld [vmem:[%s5 + $0x24] sm:$0xf]
        %v2147 = vld [vmem:[%s5 + $0x28] sm:$0xf]
        %v2148 = vld [vmem:[%s5 + $0x2c] sm:$0xf]
        %v2149 = vld [vmem:[%s5 + $0x30] sm:$0xf]
        %v2150 = vld [vmem:[%s5 + $0x34] sm:$0xf]
        %v2151 = vld [vmem:[%s5 + $0x38] sm:$0xf]
        %v2152 = vld [vmem:[%s5 + $0x3c] sm:$0xf]
        %v2153 = vld [vmem:[%s5 + $0x40] sm:$0xf]
        %v2154 = vld [vmem:[%s5 + $0x44] sm:$0xf]
        %v2155 = vld [vmem:[%s12 + $0x2] ss:$0 sm:$0xff]
        %v2174 = vunpack.c.l.b16 %v2137
        %v2175 = vunpack.c.l.b16 %v2138
        %v2176 = vunpack.c.l.b16 %v2139
        %v2177 = vunpack.c.l.b16 %v2140
        %v2178 = vunpack.c.l.b16 %v2141
        %v2179 = vunpack.c.l.b16 %v2142
        %v2180 = vunpack.c.l.b16 %v2143
        %v2181 = vunpack.c.l.b16 %v2144
        %v2182 = vunpack.c.l.b16 %v2145
        %v2183 = vunpack.c.l.b16 %v2146
        %v2184 = vunpack.c.l.b16 %v2147
        %v2185 = vunpack.c.l.b16 %v2148
        %v2186 = vunpack.c.l.b16 %v2149
        %v2187 = vunpack.c.l.b16 %v2150
        %v2188 = vunpack.c.l.b16 %v2151
        %v2189 = vunpack.c.l.b16 %v2152
        %v2190 = vunpack.c.l.b16 %v2153
        %v2191 = vunpack.c.l.b16 %v2154
        %v2192 = vpack.c.b16 %v2175, %v2174
        %v2193 = vpack.c.b16 %v2177, %v2176
        %v2194 = vpack.c.b16 %v2179, %v2178
        %v2195 = vpack.c.b16 %v2181, %v2180
        %v2196 = vpack.c.b16 %v2183, %v2182
        %v2197 = vpack.c.b16 %v2185, %v2184
        %v2198 = vpack.c.b16 %v2187, %v2186
        %v2199 = vpack.c.b16 %v2189, %v2188
        %v2200 = vpack.c.b16 %v2191, %v2190
        %2210 = vmatprep.subr.bf16.mxu0 0
        %2211 = vmatpush1.bf16.msra.mxu0 %v2199
        %2212 = vmatprep.subr.bf16.mxu0 0
        %2213 = vmatpush1.bf16.msra.mxu0 %v2198
        %2214 = vmatprep.subr.bf16.mxu0 0
        %2215 = vmatpush1.bf16.msra.mxu0 %v2197
        %2216 = vmatprep.subr.bf16.mxu0 0
        %2217 = vmatpush1.bf16.msra.mxu0 %v2196
        %2218 = vmatprep.subr.bf16.mxu0 0
        %2219 = vmatpush1.bf16.msra.mxu0 %v2195
        %2220 = vmatprep.subr.bf16.mxu0 0
        %2221 = vmatpush1.bf16.msra.mxu0 %v2194
        %2222 = vmatprep.subr.bf16.mxu0 0
        %2223 = vmatpush1.bf16.msra.mxu0 %v2193
        %2224 = vmatprep.subr.bf16.mxu0 0
        %2225 = vmatpush1.bf16.msra.mxu0 %v2192
        %2226 = vmatprep.subr.bf16.mxu0 0
        %2227 = vmatpush2.bf16.msra.mxu0 0
        %2228 = vmatprep.subr.bf16.mxu0 0
        %2229 = vmatpush2.bf16.msra.mxu0 0
        %2230 = vmatprep.subr.bf16.mxu0 0
        %2231 = vmatpush2.bf16.msra.mxu0 0
        %2232 = vmatprep.subr.bf16.mxu0 0
        %2233 = vmatpush2.bf16.msra.mxu0 0
        %2234 = vmatprep.subr.bf16.mxu0 0
        %2235 = vmatpush2.bf16.msra.mxu0 0
        %2236 = vmatprep.subr.bf16.mxu0 0
        %2237 = vmatpush2.bf16.msra.mxu0 0
        %2238 = vmatprep.subr.bf16.mxu0 0
        %2239 = vmatpush2.bf16.msra.mxu0 0
        %2240 = vmatprep.subr.bf16.mxu0 0
        %2241 = vmatpush2.bf16.msra.mxu0 %v2200
        %2242 = vmatprep.mubr.bf16.mxu0 %v904
        %2243 = vmatmul.mubr.bf16.gmra.mxu0 %v758
        %v2244 = vpop.f32.mrf.mxu0
        %v2245 = vadd.f32 %v2155, %v2244
        %v2246 = vpop.f32.mrf.mxu0
        %v2247 = vpop.f32.mrf.mxu0
        %v2248 = vadd.f32 %v2155, %v2247
        %v2249 = vpop.f32.mrf.mxu0
        %2250 = vmatprep.mubr.bf16.mxu0 %v907
        %2251 = vmatmul.mubr.bf16.gmra.mxu0 %v760
        %v2252 = vpop.f32.mrf.mxu0
        %v2253 = vadd.f32 %v2155, %v2252
        %v2254 = vpop.f32.mrf.mxu0
        %v2255 = vpop.f32.mrf.mxu0
        %v2256 = vadd.f32 %v2155, %v2255
        %v2257 = vpop.f32.mrf.mxu0
        %2258 = vmatprep.mubr.bf16.mxu0 %v910
        %2259 = vmatmul.mubr.bf16.gmra.mxu0 %v762
        %v2260 = vpop.f32.mrf.mxu0
        %v2261 = vadd.f32 %v2155, %v2260
        %v2262 = vpop.f32.mrf.mxu0
        %v2263 = vpop.f32.mrf.mxu0
        %v2264 = vadd.f32 %v2155, %v2263
        %v2265 = vpop.f32.mrf.mxu0
        %2266 = vmatprep.mubr.bf16.mxu0 %v913
        %2267 = vmatmul.mubr.bf16.gmra.mxu0 %v764
        %v2268 = vpop.f32.mrf.mxu0
        %v2269 = vadd.f32 %v2155, %v2268
        %v2270 = vpop.f32.mrf.mxu0
        %v2271 = vpop.f32.mrf.mxu0
        %v2272 = vadd.f32 %v2155, %v2271
        %v2273 = vpop.f32.mrf.mxu0
        %2274 = vmatprep.mubr.bf16.mxu0 %v916
        %2275 = vmatmul.mubr.bf16.gmra.mxu0 %v766
        %v2276 = vpop.f32.mrf.mxu0
        %v2277 = vadd.f32 %v2155, %v2276
        %v2278 = vpop.f32.mrf.mxu0
        %v2279 = vpop.f32.mrf.mxu0
        %v2280 = vadd.f32 %v2155, %v2279
        %v2281 = vpop.f32.mrf.mxu0
        %2282 = vmatprep.mubr.bf16.mxu0 %v919
        %2283 = vmatmul.mubr.bf16.gmra.mxu0 %v768
        %v2284 = vpop.f32.mrf.mxu0
        %v2285 = vadd.f32 %v2155, %v2284
        %v2286 = vpop.f32.mrf.mxu0
        %v2287 = vpop.f32.mrf.mxu0
        %v2288 = vadd.f32 %v2155, %v2287
        %v2289 = vpop.f32.mrf.mxu0
        %2290 = vmatprep.mubr.bf16.mxu0 %v922
        %2291 = vmatmul.mubr.bf16.gmra.mxu0 %v770
        %v2292 = vpop.f32.mrf.mxu0
        %v2293 = vadd.f32 %v2155, %v2292
        %v2294 = vpop.f32.mrf.mxu0
        %v2295 = vpop.f32.mrf.mxu0
        %v2296 = vadd.f32 %v2155, %v2295
        %v2297 = vpop.f32.mrf.mxu0
        %2298 = vmatprep.mubr.bf16.mxu0 %v925
        %2299 = vmatmul.mubr.bf16.gmra.mxu0 %v772
        %v2300 = vpop.f32.mrf.mxu0
        %v2301 = vadd.f32 %v2155, %v2300
        %v2302 = vpop.f32.mrf.mxu0
        %v2303 = vpop.f32.mrf.mxu0
        %v2304 = vadd.f32 %v2155, %v2303
        %v2305 = vpop.f32.mrf.mxu0
        %2306 = vmatprep.mubr.bf16.mxu0 %v928
        %2307 = vmatmul.mubr.bf16.gmra.mxu0 %v774
        %v2308 = vpop.f32.mrf.mxu0
        %v2309 = vadd.f32 %v2155, %v2308
        %v2310 = vpop.f32.mrf.mxu0
        %v2311 = vpop.f32.mrf.mxu0
        %v2312 = vadd.f32 %v2155, %v2311
        %v2313 = vpop.f32.mrf.mxu0
        %2314 = vmatprep.mubr.bf16.mxu0 %v931
        %2315 = vmatmul.mubr.bf16.gmra.mxu0 %v776
        %v2316 = vpop.f32.mrf.mxu0
        %v2317 = vadd.f32 %v2155, %v2316
        %v2318 = vpop.f32.mrf.mxu0
        %v2319 = vpop.f32.mrf.mxu0
        %v2320 = vadd.f32 %v2155, %v2319
        %v2321 = vpop.f32.mrf.mxu0
        %2322 = vmatprep.mubr.bf16.mxu0 %v934
        %2323 = vmatmul.mubr.bf16.gmra.mxu0 %v778
        %v2324 = vpop.f32.mrf.mxu0
        %v2325 = vadd.f32 %v2155, %v2324
        %v2326 = vpop.f32.mrf.mxu0
        %v2327 = vpop.f32.mrf.mxu0
        %v2328 = vadd.f32 %v2155, %v2327
        %v2329 = vpop.f32.mrf.mxu0
        %2330 = vmatprep.mubr.bf16.mxu0 %v937
        %2331 = vmatmul.mubr.bf16.gmra.mxu0 %v780
        %v2332 = vpop.f32.mrf.mxu0
        %v2333 = vadd.f32 %v2155, %v2332
        %v2334 = vpop.f32.mrf.mxu0
        %v2335 = vpop.f32.mrf.mxu0
        %v2336 = vadd.f32 %v2155, %v2335
        %v2337 = vpop.f32.mrf.mxu0
        %2338 = vmatprep.mubr.bf16.mxu0 %v940
        %2339 = vmatmul.mubr.bf16.gmra.mxu0 %v782
        %v2340 = vpop.f32.mrf.mxu0
        %v2341 = vadd.f32 %v2155, %v2340
        %v2342 = vpop.f32.mrf.mxu0
        %v2343 = vpop.f32.mrf.mxu0
        %v2344 = vadd.f32 %v2155, %v2343
        %v2345 = vpop.f32.mrf.mxu0
        %2346 = vmatprep.mubr.bf16.mxu0 %v943
        %2347 = vmatmul.mubr.bf16.gmra.mxu0 %v784
        %v2348 = vpop.f32.mrf.mxu0
        %v2349 = vadd.f32 %v2155, %v2348
        %v2350 = vpop.f32.mrf.mxu0
        %v2351 = vpop.f32.mrf.mxu0
        %v2352 = vadd.f32 %v2155, %v2351
        %v2353 = vpop.f32.mrf.mxu0
        %2354 = vmatprep.mubr.bf16.mxu0 %v946
        %2355 = vmatmul.mubr.bf16.gmra.mxu0 %v786
        %v2356 = vpop.f32.mrf.mxu0
        %v2357 = vadd.f32 %v2155, %v2356
        %v2358 = vpop.f32.mrf.mxu0
        %v2359 = vpop.f32.mrf.mxu0
        %v2360 = vadd.f32 %v2155, %v2359
        %v2361 = vpop.f32.mrf.mxu0
        %2362 = vmatprep.mubr.bf16.mxu0 %v949
        %2363 = vmatmul.mubr.bf16.gmra.mxu0 %v788
        %v2364 = vpop.f32.mrf.mxu0
        %v2365 = vadd.f32 %v2155, %v2364
        %v2366 = vpop.f32.mrf.mxu0
        %v2367 = vpop.f32.mrf.mxu0
        %v2368 = vadd.f32 %v2155, %v2367
        %v2369 = vpop.f32.mrf.mxu0
        %2370 = vmatprep.mubr.bf16.mxu0 %v952
        %2371 = vmatmul.mubr.bf16.gmra.mxu0 %v790
        %v2372 = vpop.f32.mrf.mxu0
        %v2373 = vadd.f32 %v2155, %v2372
        %v2374 = vpop.f32.mrf.mxu0
        %v2375 = vpop.f32.mrf.mxu0
        %v2376 = vadd.f32 %v2155, %v2375
        %v2377 = vpop.f32.mrf.mxu0
        %2378 = vmatprep.mubr.bf16.mxu0 %v955
        %2379 = vmatmul.mubr.bf16.gmra.mxu0 %v792
        %v2380 = vpop.f32.mrf.mxu0
        %v2381 = vadd.f32 %v2155, %v2380
        %v2382 = vpop.f32.mrf.mxu0
        %v2383 = vpop.f32.mrf.mxu0
        %v2384 = vadd.f32 %v2155, %v2383
        %v2385 = vpop.f32.mrf.mxu0
        %2386 = vdwg.mxu0
        %v2387 = vmax.f32 %v2245, 0.0
        %v2388 = vmax.f32 %v2248, 0.0
        %v2389 = vmax.f32 %v2253, 0.0
        %v2390 = vmax.f32 %v2256, 0.0
        %v2391 = vmax.f32 %v2261, 0.0
        %v2392 = vmax.f32 %v2264, 0.0
        %v2393 = vmax.f32 %v2269, 0.0
        %v2394 = vmax.f32 %v2272, 0.0
        %v2395 = vmax.f32 %v2277, 0.0
        %v2396 = vmax.f32 %v2280, 0.0
        %v2397 = vmax.f32 %v2285, 0.0
        %v2398 = vmax.f32 %v2288, 0.0
        %v2399 = vmax.f32 %v2293, 0.0
        %v2400 = vmax.f32 %v2296, 0.0
        %v2401 = vmax.f32 %v2301, 0.0
        %v2402 = vmax.f32 %v2304, 0.0
        %v2403 = vmax.f32 %v2309, 0.0
        %v2404 = vmax.f32 %v2312, 0.0
        %v2405 = vmax.f32 %v2317, 0.0
        %v2406 = vmax.f32 %v2320, 0.0
        %v2407 = vmax.f32 %v2325, 0.0
        %v2408 = vmax.f32 %v2328, 0.0
        %v2409 = vmax.f32 %v2333, 0.0
        %v2410 = vmax.f32 %v2336, 0.0
        %v2411 = vmax.f32 %v2341, 0.0
        %v2412 = vmax.f32 %v2344, 0.0
        %v2413 = vmax.f32 %v2349, 0.0
        %v2414 = vmax.f32 %v2352, 0.0
        %v2415 = vmax.f32 %v2357, 0.0
        %v2416 = vmax.f32 %v2360, 0.0
        %v2417 = vmax.f32 %v2365, 0.0
        %v2418 = vmax.f32 %v2368, 0.0
        %v2419 = vmax.f32 %v2373, 0.0
        %v2420 = vmax.f32 %v2376, 0.0
        %v2421 = vmax.f32 %v2381, 0.0
        %v2422 = vmax.f32 %v2384, 0.0
        %v2423 = vld [vmem:[%s6] sm:$0xff]
        %v2424 = vld [vmem:[%s6 + $0x8] sm:$0xff]
        %v2425 = vld [vmem:[%s6 + $0x10] sm:$0xff]
        %v2426 = vld [vmem:[%s6 + $0x18] sm:$0xff]
        %v2427 = vld [vmem:[%s6 + $0x20] sm:$0xff]
        %v2428 = vld [vmem:[%s6 + $0x28] sm:$0xff]
        %v2429 = vld [vmem:[%s6 + $0x30] sm:$0xff]
        %v2430 = vld [vmem:[%s6 + $0x38] sm:$0xff]
        %v2431 = vld [vmem:[%s6 + $0x40] sm:$0xff]
        %v2432 = vld [vmem:[%s6 + $0x48] sm:$0xff]
        %v2433 = vld [vmem:[%s6 + $0x50] sm:$0xff]
        %v2434 = vld [vmem:[%s6 + $0x58] sm:$0xff]
        %v2435 = vld [vmem:[%s6 + $0x60] sm:$0xff]
        %v2436 = vld [vmem:[%s6 + $0x68] sm:$0xff]
        %v2437 = vld [vmem:[%s6 + $0x70] sm:$0xff]
        %v2438 = vld [vmem:[%s6 + $0x78] sm:$0xff]
        %v2439 = vld [vmem:[%s6 + $0x80] sm:$0xff]
        %v2440 = vld [vmem:[%s6 + $0x88] sm:$0xff]
        %v2441 = vpack.c.bf16 %v2388, %v2387
        %v2442 = vpack.c.bf16 %v2390, %v2389
        %v2443 = vpack.c.bf16 %v2392, %v2391
        %v2444 = vpack.c.bf16 %v2394, %v2393
        %v2445 = vpack.c.bf16 %v2396, %v2395
        %v2446 = vpack.c.bf16 %v2398, %v2397
        %v2447 = vpack.c.bf16 %v2400, %v2399
        %v2448 = vpack.c.bf16 %v2402, %v2401
        %v2449 = vpack.c.bf16 %v2404, %v2403
        %v2450 = vpack.c.bf16 %v2406, %v2405
        %v2451 = vpack.c.bf16 %v2408, %v2407
        %v2452 = vpack.c.bf16 %v2410, %v2409
        %v2453 = vpack.c.bf16 %v2412, %v2411
        %v2454 = vpack.c.bf16 %v2414, %v2413
        %v2455 = vpack.c.bf16 %v2416, %v2415
        %v2456 = vpack.c.bf16 %v2418, %v2417
        %v2457 = vpack.c.bf16 %v2420, %v2419
        %v2458 = vpack.c.bf16 %v2422, %v2421
        %v2459 = vld [vmem:[%s7] sm:$0xf]
        %v2460 = vld [vmem:[%s7 + $0x4] sm:$0xf]
        %v2463 = vunpack.c.l.b16 %v2459
        %v2464 = vunpack.c.l.b16 %v2460
        %v2465 = vpack.c.b16 %v2464, %v2463
        %v2468 = vsel %vm902, %v2441, 0
        %v2471 = vsel %vm902, %v2442, 0
        %v2474 = vsel %vm902, %v2443, 0
        %v2477 = vsel %vm902, %v2444, 0
        %v2480 = vsel %vm902, %v2445, 0
        %v2483 = vsel %vm902, %v2446, 0
        %v2486 = vsel %vm902, %v2447, 0
        %v2489 = vsel %vm902, %v2448, 0
        %v2492 = vsel %vm902, %v2449, 0
        %v2495 = vsel %vm902, %v2450, 0
        %v2498 = vsel %vm902, %v2451, 0
        %v2501 = vsel %vm902, %v2452, 0
        %v2504 = vsel %vm902, %v2453, 0
        %v2507 = vsel %vm902, %v2454, 0
        %v2510 = vsel %vm902, %v2455, 0
        %v2513 = vsel %vm902, %v2456, 0
        %v2516 = vsel %vm902, %v2457, 0
        %v2519 = vsel %vm902, %v2458, 0
        %2521 = vmatprep.subr.bf16.mxu0 0
        %2522 = vmatpush1.bf16.msra.mxu0 0
        %2523 = vmatprep.subr.bf16.mxu0 0
        %2524 = vmatpush1.bf16.msra.mxu0 0
        %2525 = vmatprep.subr.bf16.mxu0 0
        %2526 = vmatpush1.bf16.msra.mxu0 0
        %2527 = vmatprep.subr.bf16.mxu0 0
        %2528 = vmatpush1.bf16.msra.mxu0 0
        %2529 = vmatprep.subr.bf16.mxu0 0
        %2530 = vmatpush1.bf16.msra.mxu0 0
        %2531 = vmatprep.subr.bf16.mxu0 0
        %2532 = vmatpush1.bf16.msra.mxu0 0
        %2533 = vmatprep.subr.bf16.mxu0 0
        %2534 = vmatpush1.bf16.msra.mxu0 0
        %2535 = vmatprep.subr.bf16.mxu0 0
        %2536 = vmatpush1.bf16.msra.mxu0 %v2465
        %2537 = vmatprep.subr.bf16.mxu0 0
        %2538 = vmatpush2.bf16.msra.mxu0 0
        %2539 = vmatprep.subr.bf16.mxu0 0
        %2540 = vmatpush2.bf16.msra.mxu0 0
        %2541 = vmatprep.subr.bf16.mxu0 0
        %2542 = vmatpush2.bf16.msra.mxu0 0
        %2543 = vmatprep.subr.bf16.mxu0 0
        %2544 = vmatpush2.bf16.msra.mxu0 0
        %2545 = vmatprep.subr.bf16.mxu0 0
        %2546 = vmatpush2.bf16.msra.mxu0 0
        %2547 = vmatprep.subr.bf16.mxu0 0
        %2548 = vmatpush2.bf16.msra.mxu0 0
        %2549 = vmatprep.subr.bf16.mxu0 0
        %2550 = vmatpush2.bf16.msra.mxu0 0
        %2551 = vmatprep.subr.bf16.mxu0 0
        %2552 = vmatpush2.bf16.msra.mxu0 0
        %2553 = vmatprep.mubr.bf16.mxu0 0
        %2554 = vmatmul.mubr.bf16.gmra.mxu0 %v2468
        %v2555 = vpop.f32.mrf.mxu0
        %v2556 = vadd.f32 0.0, %v2555
        %v2557 = vpop.f32.mrf.mxu0
        %v2558 = vpop.f32.mrf.mxu0
        %v2559 = vadd.f32 0.0, %v2558
        %v2560 = vpop.f32.mrf.mxu0
        %2561 = vmatprep.mubr.bf16.mxu0 0
        %2562 = vmatmul.mubr.bf16.gmra.mxu0 %v2471
        %v2563 = vpop.f32.mrf.mxu0
        %v2564 = vadd.f32 0.0, %v2563
        %v2565 = vpop.f32.mrf.mxu0
        %v2566 = vpop.f32.mrf.mxu0
        %v2567 = vadd.f32 0.0, %v2566
        %v2568 = vpop.f32.mrf.mxu0
        %2569 = vmatprep.mubr.bf16.mxu0 0
        %2570 = vmatmul.mubr.bf16.gmra.mxu0 %v2474
        %v2571 = vpop.f32.mrf.mxu0
        %v2572 = vadd.f32 0.0, %v2571
        %v2573 = vpop.f32.mrf.mxu0
        %v2574 = vpop.f32.mrf.mxu0
        %v2575 = vadd.f32 0.0, %v2574
        %v2576 = vpop.f32.mrf.mxu0
        %2577 = vmatprep.mubr.bf16.mxu0 0
        %2578 = vmatmul.mubr.bf16.gmra.mxu0 %v2477
        %v2579 = vpop.f32.mrf.mxu0
        %v2580 = vadd.f32 0.0, %v2579
        %v2581 = vpop.f32.mrf.mxu0
        %v2582 = vpop.f32.mrf.mxu0
        %v2583 = vadd.f32 0.0, %v2582
        %v2584 = vpop.f32.mrf.mxu0
        %2585 = vmatprep.mubr.bf16.mxu0 0
        %2586 = vmatmul.mubr.bf16.gmra.mxu0 %v2480
        %v2587 = vpop.f32.mrf.mxu0
        %v2588 = vadd.f32 0.0, %v2587
        %v2589 = vpop.f32.mrf.mxu0
        %v2590 = vpop.f32.mrf.mxu0
        %v2591 = vadd.f32 0.0, %v2590
        %v2592 = vpop.f32.mrf.mxu0
        %2593 = vmatprep.mubr.bf16.mxu0 0
        %2594 = vmatmul.mubr.bf16.gmra.mxu0 %v2483
        %v2595 = vpop.f32.mrf.mxu0
        %v2596 = vadd.f32 0.0, %v2595
        %v2597 = vpop.f32.mrf.mxu0
        %v2598 = vpop.f32.mrf.mxu0
        %v2599 = vadd.f32 0.0, %v2598
        %v2600 = vpop.f32.mrf.mxu0
        %2601 = vmatprep.mubr.bf16.mxu0 0
        %2602 = vmatmul.mubr.bf16.gmra.mxu0 %v2486
        %v2603 = vpop.f32.mrf.mxu0
        %v2604 = vadd.f32 0.0, %v2603
        %v2605 = vpop.f32.mrf.mxu0
        %v2606 = vpop.f32.mrf.mxu0
        %v2607 = vadd.f32 0.0, %v2606
        %v2608 = vpop.f32.mrf.mxu0
        %2609 = vmatprep.mubr.bf16.mxu0 0
        %2610 = vmatmul.mubr.bf16.gmra.mxu0 %v2489
        %v2611 = vpop.f32.mrf.mxu0
        %v2612 = vadd.f32 0.0, %v2611
        %v2613 = vpop.f32.mrf.mxu0
        %v2614 = vpop.f32.mrf.mxu0
        %v2615 = vadd.f32 0.0, %v2614
        %v2616 = vpop.f32.mrf.mxu0
        %2617 = vmatprep.mubr.bf16.mxu0 0
        %2618 = vmatmul.mubr.bf16.gmra.mxu0 %v2492
        %v2619 = vpop.f32.mrf.mxu0
        %v2620 = vadd.f32 0.0, %v2619
        %v2621 = vpop.f32.mrf.mxu0
        %v2622 = vpop.f32.mrf.mxu0
        %v2623 = vadd.f32 0.0, %v2622
        %v2624 = vpop.f32.mrf.mxu0
        %2625 = vmatprep.mubr.bf16.mxu0 0
        %2626 = vmatmul.mubr.bf16.gmra.mxu0 %v2495
        %v2627 = vpop.f32.mrf.mxu0
        %v2628 = vadd.f32 0.0, %v2627
        %v2629 = vpop.f32.mrf.mxu0
        %v2630 = vpop.f32.mrf.mxu0
        %v2631 = vadd.f32 0.0, %v2630
        %v2632 = vpop.f32.mrf.mxu0
        %2633 = vmatprep.mubr.bf16.mxu0 0
        %2634 = vmatmul.mubr.bf16.gmra.mxu0 %v2498
        %v2635 = vpop.f32.mrf.mxu0
        %v2636 = vadd.f32 0.0, %v2635
        %v2637 = vpop.f32.mrf.mxu0
        %v2638 = vpop.f32.mrf.mxu0
        %v2639 = vadd.f32 0.0, %v2638
        %v2640 = vpop.f32.mrf.mxu0
        %2641 = vmatprep.mubr.bf16.mxu0 0
        %2642 = vmatmul.mubr.bf16.gmra.mxu0 %v2501
        %v2643 = vpop.f32.mrf.mxu0
        %v2644 = vadd.f32 0.0, %v2643
        %v2645 = vpop.f32.mrf.mxu0
        %v2646 = vpop.f32.mrf.mxu0
        %v2647 = vadd.f32 0.0, %v2646
        %v2648 = vpop.f32.mrf.mxu0
        %2649 = vmatprep.mubr.bf16.mxu0 0
        %2650 = vmatmul.mubr.bf16.gmra.mxu0 %v2504
        %v2651 = vpop.f32.mrf.mxu0
        %v2652 = vadd.f32 0.0, %v2651
        %v2653 = vpop.f32.mrf.mxu0
        %v2654 = vpop.f32.mrf.mxu0
        %v2655 = vadd.f32 0.0, %v2654
        %v2656 = vpop.f32.mrf.mxu0
        %2657 = vmatprep.mubr.bf16.mxu0 0
        %2658 = vmatmul.mubr.bf16.gmra.mxu0 %v2507
        %v2659 = vpop.f32.mrf.mxu0
        %v2660 = vadd.f32 0.0, %v2659
        %v2661 = vpop.f32.mrf.mxu0
        %v2662 = vpop.f32.mrf.mxu0
        %v2663 = vadd.f32 0.0, %v2662
        %v2664 = vpop.f32.mrf.mxu0
        %2665 = vmatprep.mubr.bf16.mxu0 0
        %2666 = vmatmul.mubr.bf16.gmra.mxu0 %v2510
        %v2667 = vpop.f32.mrf.mxu0
        %v2668 = vadd.f32 0.0, %v2667
        %v2669 = vpop.f32.mrf.mxu0
        %v2670 = vpop.f32.mrf.mxu0
        %v2671 = vadd.f32 0.0, %v2670
        %v2672 = vpop.f32.mrf.mxu0
        %2673 = vmatprep.mubr.bf16.mxu0 0
        %2674 = vmatmul.mubr.bf16.gmra.mxu0 %v2513
        %v2675 = vpop.f32.mrf.mxu0
        %v2676 = vadd.f32 0.0, %v2675
        %v2677 = vpop.f32.mrf.mxu0
        %v2678 = vpop.f32.mrf.mxu0
        %v2679 = vadd.f32 0.0, %v2678
        %v2680 = vpop.f32.mrf.mxu0
        %2681 = vmatprep.mubr.bf16.mxu0 0
        %2682 = vmatmul.mubr.bf16.gmra.mxu0 %v2516
        %v2683 = vpop.f32.mrf.mxu0
        %v2684 = vadd.f32 0.0, %v2683
        %v2685 = vpop.f32.mrf.mxu0
        %v2686 = vpop.f32.mrf.mxu0
        %v2687 = vadd.f32 0.0, %v2686
        %v2688 = vpop.f32.mrf.mxu0
        %2689 = vmatprep.mubr.bf16.mxu0 0
        %2690 = vmatmul.mubr.bf16.gmra.mxu0 %v2519
        %v2691 = vpop.f32.mrf.mxu0
        %v2692 = vadd.f32 0.0, %v2691
        %v2693 = vpop.f32.mrf.mxu0
        %v2694 = vpop.f32.mrf.mxu0
        %v2695 = vadd.f32 0.0, %v2694
        %v2696 = vpop.f32.mrf.mxu0
        %2697 = vdwg.mxu0
        %v2734 = vcombine.high %v2556, %v2556
        %v2736 = vunpack.c.l.s4 1966171168
        %v2737 = vunpack.c.0.s8 %v2736
        %v2738 = vlaneseq
        %v2739 = vshrl.u32 %v2738, 7
        %v2740 = vsub.s32 %v2737, %v2739
        %v2741 = vrot.slane %v2556, %v2740
        %v2743 = vunpack.c.l.s4 1966171168
        %v2744 = vunpack.c.0.s8 %v2743
        %v2745 = vlaneseq
        %v2746 = vshrl.u32 %v2745, 7
        %v2747 = vsub.s32 %v2744, %v2746
        %v2748 = vrot.slane %v2734, %v2747
        %v2749 = vcombine.high %v2741, %v2741
        %v2750 = vcombine.high %v2748, %v2748
        %v2752 = vunpack.c.l.s4 1966171168
        %v2753 = vunpack.c.0.s8 %v2752
        %v2754 = vlaneseq
        %v2755 = vshrl.u32 %v2754, 7
        %v2756 = vsub.s32 %v2753, %v2755
        %v2757 = vrot.slane %v2741, %v2756
        %v2759 = vunpack.c.l.s4 1966171168
        %v2760 = vunpack.c.0.s8 %v2759
        %v2761 = vlaneseq
        %v2762 = vshrl.u32 %v2761, 7
        %v2763 = vsub.s32 %v2760, %v2762
        %v2764 = vrot.slane %v2748, %v2763
        %v2766 = vunpack.c.l.s4 1966171168
        %v2767 = vunpack.c.0.s8 %v2766
        %v2768 = vlaneseq
        %v2769 = vshrl.u32 %v2768, 7
        %v2770 = vsub.s32 %v2767, %v2769
        %v2771 = vrot.slane %v2749, %v2770
        %v2773 = vunpack.c.l.s4 1966171168
        %v2774 = vunpack.c.0.s8 %v2773
        %v2775 = vlaneseq
        %v2776 = vshrl.u32 %v2775, 7
        %v2777 = vsub.s32 %v2774, %v2776
        %v2778 = vrot.slane %v2750, %v2777
        %v2779 = vcombine.high %v2757, %v2757
        %v2780 = vcombine.high %v2764, %v2764
        %v2781 = vcombine.high %v2771, %v2771
        %v2782 = vcombine.high %v2778, %v2778
        %v2783 = vcombine.high %v2559, %v2559
        %v2785 = vunpack.c.l.s4 1966171168
        %v2786 = vunpack.c.0.s8 %v2785
        %v2787 = vlaneseq
        %v2788 = vshrl.u32 %v2787, 7
        %v2789 = vsub.s32 %v2786, %v2788
        %v2790 = vrot.slane %v2559, %v2789
        %v2792 = vunpack.c.l.s4 1966171168
        %v2793 = vunpack.c.0.s8 %v2792
        %v2794 = vlaneseq
        %v2795 = vshrl.u32 %v2794, 7
        %v2796 = vsub.s32 %v2793, %v2795
        %v2797 = vrot.slane %v2783, %v2796
        %v2798 = vcombine.high %v2790, %v2790
        %v2799 = vcombine.high %v2797, %v2797
        %v2801 = vunpack.c.l.s4 1966171168
        %v2802 = vunpack.c.0.s8 %v2801
        %v2803 = vlaneseq
        %v2804 = vshrl.u32 %v2803, 7
        %v2805 = vsub.s32 %v2802, %v2804
        %v2806 = vrot.slane %v2790, %v2805
        %v2808 = vunpack.c.l.s4 1966171168
        %v2809 = vunpack.c.0.s8 %v2808
        %v2810 = vlaneseq
        %v2811 = vshrl.u32 %v2810, 7
        %v2812 = vsub.s32 %v2809, %v2811
        %v2813 = vrot.slane %v2797, %v2812
        %v2815 = vunpack.c.l.s4 1966171168
        %v2816 = vunpack.c.0.s8 %v2815
        %v2817 = vlaneseq
        %v2818 = vshrl.u32 %v2817, 7
        %v2819 = vsub.s32 %v2816, %v2818
        %v2820 = vrot.slane %v2798, %v2819
        %v2822 = vunpack.c.l.s4 1966171168
        %v2823 = vunpack.c.0.s8 %v2822
        %v2824 = vlaneseq
        %v2825 = vshrl.u32 %v2824, 7
        %v2826 = vsub.s32 %v2823, %v2825
        %v2827 = vrot.slane %v2799, %v2826
        %v2828 = vcombine.high %v2806, %v2806
        %v2829 = vcombine.high %v2813, %v2813
        %v2830 = vcombine.high %v2820, %v2820
        %v2831 = vcombine.high %v2827, %v2827
        %v2832 = vcombine.high %v2564, %v2564
        %v2834 = vunpack.c.l.s4 1966171168
        %v2835 = vunpack.c.0.s8 %v2834
        %v2836 = vlaneseq
        %v2837 = vshrl.u32 %v2836, 7
        %v2838 = vsub.s32 %v2835, %v2837
        %v2839 = vrot.slane %v2564, %v2838
        %v2841 = vunpack.c.l.s4 1966171168
        %v2842 = vunpack.c.0.s8 %v2841
        %v2843 = vlaneseq
        %v2844 = vshrl.u32 %v2843, 7
        %v2845 = vsub.s32 %v2842, %v2844
        %v2846 = vrot.slane %v2832, %v2845
        %v2847 = vcombine.high %v2839, %v2839
        %v2848 = vcombine.high %v2846, %v2846
        %v2850 = vunpack.c.l.s4 1966171168
        %v2851 = vunpack.c.0.s8 %v2850
        %v2852 = vlaneseq
        %v2853 = vshrl.u32 %v2852, 7
        %v2854 = vsub.s32 %v2851, %v2853
        %v2855 = vrot.slane %v2839, %v2854
        %v2857 = vunpack.c.l.s4 1966171168
        %v2858 = vunpack.c.0.s8 %v2857
        %v2859 = vlaneseq
        %v2860 = vshrl.u32 %v2859, 7
        %v2861 = vsub.s32 %v2858, %v2860
        %v2862 = vrot.slane %v2846, %v2861
        %v2864 = vunpack.c.l.s4 1966171168
        %v2865 = vunpack.c.0.s8 %v2864
        %v2866 = vlaneseq
        %v2867 = vshrl.u32 %v2866, 7
        %v2868 = vsub.s32 %v2865, %v2867
        %v2869 = vrot.slane %v2847, %v2868
        %v2871 = vunpack.c.l.s4 1966171168
        %v2872 = vunpack.c.0.s8 %v2871
        %v2873 = vlaneseq
        %v2874 = vshrl.u32 %v2873, 7
        %v2875 = vsub.s32 %v2872, %v2874
        %v2876 = vrot.slane %v2848, %v2875
        %v2877 = vcombine.high %v2855, %v2855
        %v2878 = vcombine.high %v2862, %v2862
        %v2879 = vcombine.high %v2869, %v2869
        %v2880 = vcombine.high %v2876, %v2876
        %v2881 = vcombine.high %v2567, %v2567
        %v2883 = vunpack.c.l.s4 1966171168
        %v2884 = vunpack.c.0.s8 %v2883
        %v2885 = vlaneseq
        %v2886 = vshrl.u32 %v2885, 7
        %v2887 = vsub.s32 %v2884, %v2886
        %v2888 = vrot.slane %v2567, %v2887
        %v2890 = vunpack.c.l.s4 1966171168
        %v2891 = vunpack.c.0.s8 %v2890
        %v2892 = vlaneseq
        %v2893 = vshrl.u32 %v2892, 7
        %v2894 = vsub.s32 %v2891, %v2893
        %v2895 = vrot.slane %v2881, %v2894
        %v2896 = vcombine.high %v2888, %v2888
        %v2897 = vcombine.high %v2895, %v2895
        %v2899 = vunpack.c.l.s4 1966171168
        %v2900 = vunpack.c.0.s8 %v2899
        %v2901 = vlaneseq
        %v2902 = vshrl.u32 %v2901, 7
        %v2903 = vsub.s32 %v2900, %v2902
        %v2904 = vrot.slane %v2888, %v2903
        %v2906 = vunpack.c.l.s4 1966171168
        %v2907 = vunpack.c.0.s8 %v2906
        %v2908 = vlaneseq
        %v2909 = vshrl.u32 %v2908, 7
        %v2910 = vsub.s32 %v2907, %v2909
        %v2911 = vrot.slane %v2895, %v2910
        %v2913 = vunpack.c.l.s4 1966171168
        %v2914 = vunpack.c.0.s8 %v2913
        %v2915 = vlaneseq
        %v2916 = vshrl.u32 %v2915, 7
        %v2917 = vsub.s32 %v2914, %v2916
        %v2918 = vrot.slane %v2896, %v2917
        %v2920 = vunpack.c.l.s4 1966171168
        %v2921 = vunpack.c.0.s8 %v2920
        %v2922 = vlaneseq
        %v2923 = vshrl.u32 %v2922, 7
        %v2924 = vsub.s32 %v2921, %v2923
        %v2925 = vrot.slane %v2897, %v2924
        %v2926 = vcombine.high %v2904, %v2904
        %v2927 = vcombine.high %v2911, %v2911
        %v2928 = vcombine.high %v2918, %v2918
        %v2929 = vcombine.high %v2925, %v2925
        %v2930 = vcombine.high %v2572, %v2572
        %v2932 = vunpack.c.l.s4 1966171168
        %v2933 = vunpack.c.0.s8 %v2932
        %v2934 = vlaneseq
        %v2935 = vshrl.u32 %v2934, 7
        %v2936 = vsub.s32 %v2933, %v2935
        %v2937 = vrot.slane %v2572, %v2936
        %v2939 = vunpack.c.l.s4 1966171168
        %v2940 = vunpack.c.0.s8 %v2939
        %v2941 = vlaneseq
        %v2942 = vshrl.u32 %v2941, 7
        %v2943 = vsub.s32 %v2940, %v2942
        %v2944 = vrot.slane %v2930, %v2943
        %v2945 = vcombine.high %v2937, %v2937
        %v2946 = vcombine.high %v2944, %v2944
        %v2948 = vunpack.c.l.s4 1966171168
        %v2949 = vunpack.c.0.s8 %v2948
        %v2950 = vlaneseq
        %v2951 = vshrl.u32 %v2950, 7
        %v2952 = vsub.s32 %v2949, %v2951
        %v2953 = vrot.slane %v2937, %v2952
        %v2955 = vunpack.c.l.s4 1966171168
        %v2956 = vunpack.c.0.s8 %v2955
        %v2957 = vlaneseq
        %v2958 = vshrl.u32 %v2957, 7
        %v2959 = vsub.s32 %v2956, %v2958
        %v2960 = vrot.slane %v2944, %v2959
        %v2962 = vunpack.c.l.s4 1966171168
        %v2963 = vunpack.c.0.s8 %v2962
        %v2964 = vlaneseq
        %v2965 = vshrl.u32 %v2964, 7
        %v2966 = vsub.s32 %v2963, %v2965
        %v2967 = vrot.slane %v2945, %v2966
        %v2969 = vunpack.c.l.s4 1966171168
        %v2970 = vunpack.c.0.s8 %v2969
        %v2971 = vlaneseq
        %v2972 = vshrl.u32 %v2971, 7
        %v2973 = vsub.s32 %v2970, %v2972
        %v2974 = vrot.slane %v2946, %v2973
        %v2975 = vcombine.high %v2953, %v2953
        %v2976 = vcombine.high %v2960, %v2960
        %v2977 = vcombine.high %v2967, %v2967
        %v2978 = vcombine.high %v2974, %v2974
        %v2979 = vcombine.high %v2575, %v2575
        %v2981 = vunpack.c.l.s4 1966171168
        %v2982 = vunpack.c.0.s8 %v2981
        %v2983 = vlaneseq
        %v2984 = vshrl.u32 %v2983, 7
        %v2985 = vsub.s32 %v2982, %v2984
        %v2986 = vrot.slane %v2575, %v2985
        %v2988 = vunpack.c.l.s4 1966171168
        %v2989 = vunpack.c.0.s8 %v2988
        %v2990 = vlaneseq
        %v2991 = vshrl.u32 %v2990, 7
        %v2992 = vsub.s32 %v2989, %v2991
        %v2993 = vrot.slane %v2979, %v2992
        %v2994 = vcombine.high %v2986, %v2986
        %v2995 = vcombine.high %v2993, %v2993
        %v2997 = vunpack.c.l.s4 1966171168
        %v2998 = vunpack.c.0.s8 %v2997
        %v2999 = vlaneseq
        %v3000 = vshrl.u32 %v2999, 7
        %v3001 = vsub.s32 %v2998, %v3000
        %v3002 = vrot.slane %v2986, %v3001
        %v3004 = vunpack.c.l.s4 1966171168
        %v3005 = vunpack.c.0.s8 %v3004
        %v3006 = vlaneseq
        %v3007 = vshrl.u32 %v3006, 7
        %v3008 = vsub.s32 %v3005, %v3007
        %v3009 = vrot.slane %v2993, %v3008
        %v3011 = vunpack.c.l.s4 1966171168
        %v3012 = vunpack.c.0.s8 %v3011
        %v3013 = vlaneseq
        %v3014 = vshrl.u32 %v3013, 7
        %v3015 = vsub.s32 %v3012, %v3014
        %v3016 = vrot.slane %v2994, %v3015
        %v3018 = vunpack.c.l.s4 1966171168
        %v3019 = vunpack.c.0.s8 %v3018
        %v3020 = vlaneseq
        %v3021 = vshrl.u32 %v3020, 7
        %v3022 = vsub.s32 %v3019, %v3021
        %v3023 = vrot.slane %v2995, %v3022
        %v3024 = vcombine.high %v3002, %v3002
        %v3025 = vcombine.high %v3009, %v3009
        %v3026 = vcombine.high %v3016, %v3016
        %v3027 = vcombine.high %v3023, %v3023
        %v3028 = vcombine.high %v2580, %v2580
        %v3030 = vunpack.c.l.s4 1966171168
        %v3031 = vunpack.c.0.s8 %v3030
        %v3032 = vlaneseq
        %v3033 = vshrl.u32 %v3032, 7
        %v3034 = vsub.s32 %v3031, %v3033
        %v3035 = vrot.slane %v2580, %v3034
        %v3037 = vunpack.c.l.s4 1966171168
        %v3038 = vunpack.c.0.s8 %v3037
        %v3039 = vlaneseq
        %v3040 = vshrl.u32 %v3039, 7
        %v3041 = vsub.s32 %v3038, %v3040
        %v3042 = vrot.slane %v3028, %v3041
        %v3043 = vcombine.high %v3035, %v3035
        %v3044 = vcombine.high %v3042, %v3042
        %v3046 = vunpack.c.l.s4 1966171168
        %v3047 = vunpack.c.0.s8 %v3046
        %v3048 = vlaneseq
        %v3049 = vshrl.u32 %v3048, 7
        %v3050 = vsub.s32 %v3047, %v3049
        %v3051 = vrot.slane %v3035, %v3050
        %v3053 = vunpack.c.l.s4 1966171168
        %v3054 = vunpack.c.0.s8 %v3053
        %v3055 = vlaneseq
        %v3056 = vshrl.u32 %v3055, 7
        %v3057 = vsub.s32 %v3054, %v3056
        %v3058 = vrot.slane %v3042, %v3057
        %v3060 = vunpack.c.l.s4 1966171168
        %v3061 = vunpack.c.0.s8 %v3060
        %v3062 = vlaneseq
        %v3063 = vshrl.u32 %v3062, 7
        %v3064 = vsub.s32 %v3061, %v3063
        %v3065 = vrot.slane %v3043, %v3064
        %v3067 = vunpack.c.l.s4 1966171168
        %v3068 = vunpack.c.0.s8 %v3067
        %v3069 = vlaneseq
        %v3070 = vshrl.u32 %v3069, 7
        %v3071 = vsub.s32 %v3068, %v3070
        %v3072 = vrot.slane %v3044, %v3071
        %v3073 = vcombine.high %v3051, %v3051
        %v3074 = vcombine.high %v3058, %v3058
        %v3075 = vcombine.high %v3065, %v3065
        %v3076 = vcombine.high %v3072, %v3072
        %v3077 = vcombine.high %v2583, %v2583
        %v3079 = vunpack.c.l.s4 1966171168
        %v3080 = vunpack.c.0.s8 %v3079
        %v3081 = vlaneseq
        %v3082 = vshrl.u32 %v3081, 7
        %v3083 = vsub.s32 %v3080, %v3082
        %v3084 = vrot.slane %v2583, %v3083
        %v3086 = vunpack.c.l.s4 1966171168
        %v3087 = vunpack.c.0.s8 %v3086
        %v3088 = vlaneseq
        %v3089 = vshrl.u32 %v3088, 7
        %v3090 = vsub.s32 %v3087, %v3089
        %v3091 = vrot.slane %v3077, %v3090
        %v3092 = vcombine.high %v3084, %v3084
        %v3093 = vcombine.high %v3091, %v3091
        %v3095 = vunpack.c.l.s4 1966171168
        %v3096 = vunpack.c.0.s8 %v3095
        %v3097 = vlaneseq
        %v3098 = vshrl.u32 %v3097, 7
        %v3099 = vsub.s32 %v3096, %v3098
        %v3100 = vrot.slane %v3084, %v3099
        %v3102 = vunpack.c.l.s4 1966171168
        %v3103 = vunpack.c.0.s8 %v3102
        %v3104 = vlaneseq
        %v3105 = vshrl.u32 %v3104, 7
        %v3106 = vsub.s32 %v3103, %v3105
        %v3107 = vrot.slane %v3091, %v3106
        %v3109 = vunpack.c.l.s4 1966171168
        %v3110 = vunpack.c.0.s8 %v3109
        %v3111 = vlaneseq
        %v3112 = vshrl.u32 %v3111, 7
        %v3113 = vsub.s32 %v3110, %v3112
        %v3114 = vrot.slane %v3092, %v3113
        %v3116 = vunpack.c.l.s4 1966171168
        %v3117 = vunpack.c.0.s8 %v3116
        %v3118 = vlaneseq
        %v3119 = vshrl.u32 %v3118, 7
        %v3120 = vsub.s32 %v3117, %v3119
        %v3121 = vrot.slane %v3093, %v3120
        %v3122 = vcombine.high %v3100, %v3100
        %v3123 = vcombine.high %v3107, %v3107
        %v3124 = vcombine.high %v3114, %v3114
        %v3125 = vcombine.high %v3121, %v3121
        %v3126 = vcombine.high %v2588, %v2588
        %v3128 = vunpack.c.l.s4 1966171168
        %v3129 = vunpack.c.0.s8 %v3128
        %v3130 = vlaneseq
        %v3131 = vshrl.u32 %v3130, 7
        %v3132 = vsub.s32 %v3129, %v3131
        %v3133 = vrot.slane %v2588, %v3132
        %v3135 = vunpack.c.l.s4 1966171168
        %v3136 = vunpack.c.0.s8 %v3135
        %v3137 = vlaneseq
        %v3138 = vshrl.u32 %v3137, 7
        %v3139 = vsub.s32 %v3136, %v3138
        %v3140 = vrot.slane %v3126, %v3139
        %v3141 = vcombine.high %v3133, %v3133
        %v3142 = vcombine.high %v3140, %v3140
        %v3144 = vunpack.c.l.s4 1966171168
        %v3145 = vunpack.c.0.s8 %v3144
        %v3146 = vlaneseq
        %v3147 = vshrl.u32 %v3146, 7
        %v3148 = vsub.s32 %v3145, %v3147
        %v3149 = vrot.slane %v3133, %v3148
        %v3151 = vunpack.c.l.s4 1966171168
        %v3152 = vunpack.c.0.s8 %v3151
        %v3153 = vlaneseq
        %v3154 = vshrl.u32 %v3153, 7
        %v3155 = vsub.s32 %v3152, %v3154
        %v3156 = vrot.slane %v3140, %v3155
        %v3158 = vunpack.c.l.s4 1966171168
        %v3159 = vunpack.c.0.s8 %v3158
        %v3160 = vlaneseq
        %v3161 = vshrl.u32 %v3160, 7
        %v3162 = vsub.s32 %v3159, %v3161
        %v3163 = vrot.slane %v3141, %v3162
        %v3165 = vunpack.c.l.s4 1966171168
        %v3166 = vunpack.c.0.s8 %v3165
        %v3167 = vlaneseq
        %v3168 = vshrl.u32 %v3167, 7
        %v3169 = vsub.s32 %v3166, %v3168
        %v3170 = vrot.slane %v3142, %v3169
        %v3171 = vcombine.high %v3149, %v3149
        %v3172 = vcombine.high %v3156, %v3156
        %v3173 = vcombine.high %v3163, %v3163
        %v3174 = vcombine.high %v3170, %v3170
        %v3175 = vcombine.high %v2591, %v2591
        %v3177 = vunpack.c.l.s4 1966171168
        %v3178 = vunpack.c.0.s8 %v3177
        %v3179 = vlaneseq
        %v3180 = vshrl.u32 %v3179, 7
        %v3181 = vsub.s32 %v3178, %v3180
        %v3182 = vrot.slane %v2591, %v3181
        %v3184 = vunpack.c.l.s4 1966171168
        %v3185 = vunpack.c.0.s8 %v3184
        %v3186 = vlaneseq
        %v3187 = vshrl.u32 %v3186, 7
        %v3188 = vsub.s32 %v3185, %v3187
        %v3189 = vrot.slane %v3175, %v3188
        %v3190 = vcombine.high %v3182, %v3182
        %v3191 = vcombine.high %v3189, %v3189
        %v3193 = vunpack.c.l.s4 1966171168
        %v3194 = vunpack.c.0.s8 %v3193
        %v3195 = vlaneseq
        %v3196 = vshrl.u32 %v3195, 7
        %v3197 = vsub.s32 %v3194, %v3196
        %v3198 = vrot.slane %v3182, %v3197
        %v3200 = vunpack.c.l.s4 1966171168
        %v3201 = vunpack.c.0.s8 %v3200
        %v3202 = vlaneseq
        %v3203 = vshrl.u32 %v3202, 7
        %v3204 = vsub.s32 %v3201, %v3203
        %v3205 = vrot.slane %v3189, %v3204
        %v3207 = vunpack.c.l.s4 1966171168
        %v3208 = vunpack.c.0.s8 %v3207
        %v3209 = vlaneseq
        %v3210 = vshrl.u32 %v3209, 7
        %v3211 = vsub.s32 %v3208, %v3210
        %v3212 = vrot.slane %v3190, %v3211
        %v3214 = vunpack.c.l.s4 1966171168
        %v3215 = vunpack.c.0.s8 %v3214
        %v3216 = vlaneseq
        %v3217 = vshrl.u32 %v3216, 7
        %v3218 = vsub.s32 %v3215, %v3217
        %v3219 = vrot.slane %v3191, %v3218
        %v3220 = vcombine.high %v3198, %v3198
        %v3221 = vcombine.high %v3205, %v3205
        %v3222 = vcombine.high %v3212, %v3212
        %v3223 = vcombine.high %v3219, %v3219
        %v3224 = vcombine.high %v2596, %v2596
        %v3226 = vunpack.c.l.s4 1966171168
        %v3227 = vunpack.c.0.s8 %v3226
        %v3228 = vlaneseq
        %v3229 = vshrl.u32 %v3228, 7
        %v3230 = vsub.s32 %v3227, %v3229
        %v3231 = vrot.slane %v2596, %v3230
        %v3233 = vunpack.c.l.s4 1966171168
        %v3234 = vunpack.c.0.s8 %v3233
        %v3235 = vlaneseq
        %v3236 = vshrl.u32 %v3235, 7
        %v3237 = vsub.s32 %v3234, %v3236
        %v3238 = vrot.slane %v3224, %v3237
        %v3239 = vcombine.high %v3231, %v3231
        %v3240 = vcombine.high %v3238, %v3238
        %v3242 = vunpack.c.l.s4 1966171168
        %v3243 = vunpack.c.0.s8 %v3242
        %v3244 = vlaneseq
        %v3245 = vshrl.u32 %v3244, 7
        %v3246 = vsub.s32 %v3243, %v3245
        %v3247 = vrot.slane %v3231, %v3246
        %v3249 = vunpack.c.l.s4 1966171168
        %v3250 = vunpack.c.0.s8 %v3249
        %v3251 = vlaneseq
        %v3252 = vshrl.u32 %v3251, 7
        %v3253 = vsub.s32 %v3250, %v3252
        %v3254 = vrot.slane %v3238, %v3253
        %v3256 = vunpack.c.l.s4 1966171168
        %v3257 = vunpack.c.0.s8 %v3256
        %v3258 = vlaneseq
        %v3259 = vshrl.u32 %v3258, 7
        %v3260 = vsub.s32 %v3257, %v3259
        %v3261 = vrot.slane %v3239, %v3260
        %v3263 = vunpack.c.l.s4 1966171168
        %v3264 = vunpack.c.0.s8 %v3263
        %v3265 = vlaneseq
        %v3266 = vshrl.u32 %v3265, 7
        %v3267 = vsub.s32 %v3264, %v3266
        %v3268 = vrot.slane %v3240, %v3267
        %v3269 = vcombine.high %v3247, %v3247
        %v3270 = vcombine.high %v3254, %v3254
        %v3271 = vcombine.high %v3261, %v3261
        %v3272 = vcombine.high %v3268, %v3268
        %v3273 = vcombine.high %v2599, %v2599
        %v3275 = vunpack.c.l.s4 1966171168
        %v3276 = vunpack.c.0.s8 %v3275
        %v3277 = vlaneseq
        %v3278 = vshrl.u32 %v3277, 7
        %v3279 = vsub.s32 %v3276, %v3278
        %v3280 = vrot.slane %v2599, %v3279
        %v3282 = vunpack.c.l.s4 1966171168
        %v3283 = vunpack.c.0.s8 %v3282
        %v3284 = vlaneseq
        %v3285 = vshrl.u32 %v3284, 7
        %v3286 = vsub.s32 %v3283, %v3285
        %v3287 = vrot.slane %v3273, %v3286
        %v3288 = vcombine.high %v3280, %v3280
        %v3289 = vcombine.high %v3287, %v3287
        %v3291 = vunpack.c.l.s4 1966171168
        %v3292 = vunpack.c.0.s8 %v3291
        %v3293 = vlaneseq
        %v3294 = vshrl.u32 %v3293, 7
        %v3295 = vsub.s32 %v3292, %v3294
        %v3296 = vrot.slane %v3280, %v3295
        %v3298 = vunpack.c.l.s4 1966171168
        %v3299 = vunpack.c.0.s8 %v3298
        %v3300 = vlaneseq
        %v3301 = vshrl.u32 %v3300, 7
        %v3302 = vsub.s32 %v3299, %v3301
        %v3303 = vrot.slane %v3287, %v3302
        %v3305 = vunpack.c.l.s4 1966171168
        %v3306 = vunpack.c.0.s8 %v3305
        %v3307 = vlaneseq
        %v3308 = vshrl.u32 %v3307, 7
        %v3309 = vsub.s32 %v3306, %v3308
        %v3310 = vrot.slane %v3288, %v3309
        %v3312 = vunpack.c.l.s4 1966171168
        %v3313 = vunpack.c.0.s8 %v3312
        %v3314 = vlaneseq
        %v3315 = vshrl.u32 %v3314, 7
        %v3316 = vsub.s32 %v3313, %v3315
        %v3317 = vrot.slane %v3289, %v3316
        %v3318 = vcombine.high %v3296, %v3296
        %v3319 = vcombine.high %v3303, %v3303
        %v3320 = vcombine.high %v3310, %v3310
        %v3321 = vcombine.high %v3317, %v3317
        %v3322 = vcombine.high %v2604, %v2604
        %v3324 = vunpack.c.l.s4 1966171168
        %v3325 = vunpack.c.0.s8 %v3324
        %v3326 = vlaneseq
        %v3327 = vshrl.u32 %v3326, 7
        %v3328 = vsub.s32 %v3325, %v3327
        %v3329 = vrot.slane %v2604, %v3328
        %v3331 = vunpack.c.l.s4 1966171168
        %v3332 = vunpack.c.0.s8 %v3331
        %v3333 = vlaneseq
        %v3334 = vshrl.u32 %v3333, 7
        %v3335 = vsub.s32 %v3332, %v3334
        %v3336 = vrot.slane %v3322, %v3335
        %v3337 = vcombine.high %v3329, %v3329
        %v3338 = vcombine.high %v3336, %v3336
        %v3340 = vunpack.c.l.s4 1966171168
        %v3341 = vunpack.c.0.s8 %v3340
        %v3342 = vlaneseq
        %v3343 = vshrl.u32 %v3342, 7
        %v3344 = vsub.s32 %v3341, %v3343
        %v3345 = vrot.slane %v3329, %v3344
        %v3347 = vunpack.c.l.s4 1966171168
        %v3348 = vunpack.c.0.s8 %v3347
        %v3349 = vlaneseq
        %v3350 = vshrl.u32 %v3349, 7
        %v3351 = vsub.s32 %v3348, %v3350
        %v3352 = vrot.slane %v3336, %v3351
        %v3354 = vunpack.c.l.s4 1966171168
        %v3355 = vunpack.c.0.s8 %v3354
        %v3356 = vlaneseq
        %v3357 = vshrl.u32 %v3356, 7
        %v3358 = vsub.s32 %v3355, %v3357
        %v3359 = vrot.slane %v3337, %v3358
        %v3361 = vunpack.c.l.s4 1966171168
        %v3362 = vunpack.c.0.s8 %v3361
        %v3363 = vlaneseq
        %v3364 = vshrl.u32 %v3363, 7
        %v3365 = vsub.s32 %v3362, %v3364
        %v3366 = vrot.slane %v3338, %v3365
        %v3367 = vcombine.high %v3345, %v3345
        %v3368 = vcombine.high %v3352, %v3352
        %v3369 = vcombine.high %v3359, %v3359
        %v3370 = vcombine.high %v3366, %v3366
        %v3371 = vcombine.high %v2607, %v2607
        %v3373 = vunpack.c.l.s4 1966171168
        %v3374 = vunpack.c.0.s8 %v3373
        %v3375 = vlaneseq
        %v3376 = vshrl.u32 %v3375, 7
        %v3377 = vsub.s32 %v3374, %v3376
        %v3378 = vrot.slane %v2607, %v3377
        %v3380 = vunpack.c.l.s4 1966171168
        %v3381 = vunpack.c.0.s8 %v3380
        %v3382 = vlaneseq
        %v3383 = vshrl.u32 %v3382, 7
        %v3384 = vsub.s32 %v3381, %v3383
        %v3385 = vrot.slane %v3371, %v3384
        %v3386 = vcombine.high %v3378, %v3378
        %v3387 = vcombine.high %v3385, %v3385
        %v3389 = vunpack.c.l.s4 1966171168
        %v3390 = vunpack.c.0.s8 %v3389
        %v3391 = vlaneseq
        %v3392 = vshrl.u32 %v3391, 7
        %v3393 = vsub.s32 %v3390, %v3392
        %v3394 = vrot.slane %v3378, %v3393
        %v3396 = vunpack.c.l.s4 1966171168
        %v3397 = vunpack.c.0.s8 %v3396
        %v3398 = vlaneseq
        %v3399 = vshrl.u32 %v3398, 7
        %v3400 = vsub.s32 %v3397, %v3399
        %v3401 = vrot.slane %v3385, %v3400
        %v3403 = vunpack.c.l.s4 1966171168
        %v3404 = vunpack.c.0.s8 %v3403
        %v3405 = vlaneseq
        %v3406 = vshrl.u32 %v3405, 7
        %v3407 = vsub.s32 %v3404, %v3406
        %v3408 = vrot.slane %v3386, %v3407
        %v3410 = vunpack.c.l.s4 1966171168
        %v3411 = vunpack.c.0.s8 %v3410
        %v3412 = vlaneseq
        %v3413 = vshrl.u32 %v3412, 7
        %v3414 = vsub.s32 %v3411, %v3413
        %v3415 = vrot.slane %v3387, %v3414
        %v3416 = vcombine.high %v3394, %v3394
        %v3417 = vcombine.high %v3401, %v3401
        %v3418 = vcombine.high %v3408, %v3408
        %v3419 = vcombine.high %v3415, %v3415
        %v3420 = vcombine.high %v2612, %v2612
        %v3422 = vunpack.c.l.s4 1966171168
        %v3423 = vunpack.c.0.s8 %v3422
        %v3424 = vlaneseq
        %v3425 = vshrl.u32 %v3424, 7
        %v3426 = vsub.s32 %v3423, %v3425
        %v3427 = vrot.slane %v2612, %v3426
        %v3429 = vunpack.c.l.s4 1966171168
        %v3430 = vunpack.c.0.s8 %v3429
        %v3431 = vlaneseq
        %v3432 = vshrl.u32 %v3431, 7
        %v3433 = vsub.s32 %v3430, %v3432
        %v3434 = vrot.slane %v3420, %v3433
        %v3435 = vcombine.high %v3427, %v3427
        %v3436 = vcombine.high %v3434, %v3434
        %v3438 = vunpack.c.l.s4 1966171168
        %v3439 = vunpack.c.0.s8 %v3438
        %v3440 = vlaneseq
        %v3441 = vshrl.u32 %v3440, 7
        %v3442 = vsub.s32 %v3439, %v3441
        %v3443 = vrot.slane %v3427, %v3442
        %v3445 = vunpack.c.l.s4 1966171168
        %v3446 = vunpack.c.0.s8 %v3445
        %v3447 = vlaneseq
        %v3448 = vshrl.u32 %v3447, 7
        %v3449 = vsub.s32 %v3446, %v3448
        %v3450 = vrot.slane %v3434, %v3449
        %v3452 = vunpack.c.l.s4 1966171168
        %v3453 = vunpack.c.0.s8 %v3452
        %v3454 = vlaneseq
        %v3455 = vshrl.u32 %v3454, 7
        %v3456 = vsub.s32 %v3453, %v3455
        %v3457 = vrot.slane %v3435, %v3456
        %v3459 = vunpack.c.l.s4 1966171168
        %v3460 = vunpack.c.0.s8 %v3459
        %v3461 = vlaneseq
        %v3462 = vshrl.u32 %v3461, 7
        %v3463 = vsub.s32 %v3460, %v3462
        %v3464 = vrot.slane %v3436, %v3463
        %v3465 = vcombine.high %v3443, %v3443
        %v3466 = vcombine.high %v3450, %v3450
        %v3467 = vcombine.high %v3457, %v3457
        %v3468 = vcombine.high %v3464, %v3464
        %v3469 = vcombine.high %v2615, %v2615
        %v3471 = vunpack.c.l.s4 1966171168
        %v3472 = vunpack.c.0.s8 %v3471
        %v3473 = vlaneseq
        %v3474 = vshrl.u32 %v3473, 7
        %v3475 = vsub.s32 %v3472, %v3474
        %v3476 = vrot.slane %v2615, %v3475
        %v3478 = vunpack.c.l.s4 1966171168
        %v3479 = vunpack.c.0.s8 %v3478
        %v3480 = vlaneseq
        %v3481 = vshrl.u32 %v3480, 7
        %v3482 = vsub.s32 %v3479, %v3481
        %v3483 = vrot.slane %v3469, %v3482
        %v3484 = vcombine.high %v3476, %v3476
        %v3485 = vcombine.high %v3483, %v3483
        %v3487 = vunpack.c.l.s4 1966171168
        %v3488 = vunpack.c.0.s8 %v3487
        %v3489 = vlaneseq
        %v3490 = vshrl.u32 %v3489, 7
        %v3491 = vsub.s32 %v3488, %v3490
        %v3492 = vrot.slane %v3476, %v3491
        %v3494 = vunpack.c.l.s4 1966171168
        %v3495 = vunpack.c.0.s8 %v3494
        %v3496 = vlaneseq
        %v3497 = vshrl.u32 %v3496, 7
        %v3498 = vsub.s32 %v3495, %v3497
        %v3499 = vrot.slane %v3483, %v3498
        %v3501 = vunpack.c.l.s4 1966171168
        %v3502 = vunpack.c.0.s8 %v3501
        %v3503 = vlaneseq
        %v3504 = vshrl.u32 %v3503, 7
        %v3505 = vsub.s32 %v3502, %v3504
        %v3506 = vrot.slane %v3484, %v3505
        %v3508 = vunpack.c.l.s4 1966171168
        %v3509 = vunpack.c.0.s8 %v3508
        %v3510 = vlaneseq
        %v3511 = vshrl.u32 %v3510, 7
        %v3512 = vsub.s32 %v3509, %v3511
        %v3513 = vrot.slane %v3485, %v3512
        %v3514 = vcombine.high %v3492, %v3492
        %v3515 = vcombine.high %v3499, %v3499
        %v3516 = vcombine.high %v3506, %v3506
        %v3517 = vcombine.high %v3513, %v3513
        %v3518 = vcombine.high %v2620, %v2620
        %v3520 = vunpack.c.l.s4 1966171168
        %v3521 = vunpack.c.0.s8 %v3520
        %v3522 = vlaneseq
        %v3523 = vshrl.u32 %v3522, 7
        %v3524 = vsub.s32 %v3521, %v3523
        %v3525 = vrot.slane %v2620, %v3524
        %v3527 = vunpack.c.l.s4 1966171168
        %v3528 = vunpack.c.0.s8 %v3527
        %v3529 = vlaneseq
        %v3530 = vshrl.u32 %v3529, 7
        %v3531 = vsub.s32 %v3528, %v3530
        %v3532 = vrot.slane %v3518, %v3531
        %v3533 = vcombine.high %v3525, %v3525
        %v3534 = vcombine.high %v3532, %v3532
        %v3536 = vunpack.c.l.s4 1966171168
        %v3537 = vunpack.c.0.s8 %v3536
        %v3538 = vlaneseq
        %v3539 = vshrl.u32 %v3538, 7
        %v3540 = vsub.s32 %v3537, %v3539
        %v3541 = vrot.slane %v3525, %v3540
        %v3543 = vunpack.c.l.s4 1966171168
        %v3544 = vunpack.c.0.s8 %v3543
        %v3545 = vlaneseq
        %v3546 = vshrl.u32 %v3545, 7
        %v3547 = vsub.s32 %v3544, %v3546
        %v3548 = vrot.slane %v3532, %v3547
        %v3550 = vunpack.c.l.s4 1966171168
        %v3551 = vunpack.c.0.s8 %v3550
        %v3552 = vlaneseq
        %v3553 = vshrl.u32 %v3552, 7
        %v3554 = vsub.s32 %v3551, %v3553
        %v3555 = vrot.slane %v3533, %v3554
        %v3557 = vunpack.c.l.s4 1966171168
        %v3558 = vunpack.c.0.s8 %v3557
        %v3559 = vlaneseq
        %v3560 = vshrl.u32 %v3559, 7
        %v3561 = vsub.s32 %v3558, %v3560
        %v3562 = vrot.slane %v3534, %v3561
        %v3563 = vcombine.high %v3541, %v3541
        %v3564 = vcombine.high %v3548, %v3548
        %v3565 = vcombine.high %v3555, %v3555
        %v3566 = vcombine.high %v3562, %v3562
        %v3567 = vcombine.high %v2623, %v2623
        %v3569 = vunpack.c.l.s4 1966171168
        %v3570 = vunpack.c.0.s8 %v3569
        %v3571 = vlaneseq
        %v3572 = vshrl.u32 %v3571, 7
        %v3573 = vsub.s32 %v3570, %v3572
        %v3574 = vrot.slane %v2623, %v3573
        %v3576 = vunpack.c.l.s4 1966171168
        %v3577 = vunpack.c.0.s8 %v3576
        %v3578 = vlaneseq
        %v3579 = vshrl.u32 %v3578, 7
        %v3580 = vsub.s32 %v3577, %v3579
        %v3581 = vrot.slane %v3567, %v3580
        %v3582 = vcombine.high %v3574, %v3574
        %v3583 = vcombine.high %v3581, %v3581
        %v3585 = vunpack.c.l.s4 1966171168
        %v3586 = vunpack.c.0.s8 %v3585
        %v3587 = vlaneseq
        %v3588 = vshrl.u32 %v3587, 7
        %v3589 = vsub.s32 %v3586, %v3588
        %v3590 = vrot.slane %v3574, %v3589
        %v3592 = vunpack.c.l.s4 1966171168
        %v3593 = vunpack.c.0.s8 %v3592
        %v3594 = vlaneseq
        %v3595 = vshrl.u32 %v3594, 7
        %v3596 = vsub.s32 %v3593, %v3595
        %v3597 = vrot.slane %v3581, %v3596
        %v3599 = vunpack.c.l.s4 1966171168
        %v3600 = vunpack.c.0.s8 %v3599
        %v3601 = vlaneseq
        %v3602 = vshrl.u32 %v3601, 7
        %v3603 = vsub.s32 %v3600, %v3602
        %v3604 = vrot.slane %v3582, %v3603
        %v3606 = vunpack.c.l.s4 1966171168
        %v3607 = vunpack.c.0.s8 %v3606
        %v3608 = vlaneseq
        %v3609 = vshrl.u32 %v3608, 7
        %v3610 = vsub.s32 %v3607, %v3609
        %v3611 = vrot.slane %v3583, %v3610
        %v3612 = vcombine.high %v3590, %v3590
        %v3613 = vcombine.high %v3597, %v3597
        %v3614 = vcombine.high %v3604, %v3604
        %v3615 = vcombine.high %v3611, %v3611
        %v3616 = vcombine.high %v2628, %v2628
        %v3618 = vunpack.c.l.s4 1966171168
        %v3619 = vunpack.c.0.s8 %v3618
        %v3620 = vlaneseq
        %v3621 = vshrl.u32 %v3620, 7
        %v3622 = vsub.s32 %v3619, %v3621
        %v3623 = vrot.slane %v2628, %v3622
        %v3625 = vunpack.c.l.s4 1966171168
        %v3626 = vunpack.c.0.s8 %v3625
        %v3627 = vlaneseq
        %v3628 = vshrl.u32 %v3627, 7
        %v3629 = vsub.s32 %v3626, %v3628
        %v3630 = vrot.slane %v3616, %v3629
        %v3631 = vcombine.high %v3623, %v3623
        %v3632 = vcombine.high %v3630, %v3630
        %v3634 = vunpack.c.l.s4 1966171168
        %v3635 = vunpack.c.0.s8 %v3634
        %v3636 = vlaneseq
        %v3637 = vshrl.u32 %v3636, 7
        %v3638 = vsub.s32 %v3635, %v3637
        %v3639 = vrot.slane %v3623, %v3638
        %v3641 = vunpack.c.l.s4 1966171168
        %v3642 = vunpack.c.0.s8 %v3641
        %v3643 = vlaneseq
        %v3644 = vshrl.u32 %v3643, 7
        %v3645 = vsub.s32 %v3642, %v3644
        %v3646 = vrot.slane %v3630, %v3645
        %v3648 = vunpack.c.l.s4 1966171168
        %v3649 = vunpack.c.0.s8 %v3648
        %v3650 = vlaneseq
        %v3651 = vshrl.u32 %v3650, 7
        %v3652 = vsub.s32 %v3649, %v3651
        %v3653 = vrot.slane %v3631, %v3652
        %v3655 = vunpack.c.l.s4 1966171168
        %v3656 = vunpack.c.0.s8 %v3655
        %v3657 = vlaneseq
        %v3658 = vshrl.u32 %v3657, 7
        %v3659 = vsub.s32 %v3656, %v3658
        %v3660 = vrot.slane %v3632, %v3659
        %v3661 = vcombine.high %v3639, %v3639
        %v3662 = vcombine.high %v3646, %v3646
        %v3663 = vcombine.high %v3653, %v3653
        %v3664 = vcombine.high %v3660, %v3660
        %v3665 = vcombine.high %v2631, %v2631
        %v3667 = vunpack.c.l.s4 1966171168
        %v3668 = vunpack.c.0.s8 %v3667
        %v3669 = vlaneseq
        %v3670 = vshrl.u32 %v3669, 7
        %v3671 = vsub.s32 %v3668, %v3670
        %v3672 = vrot.slane %v2631, %v3671
        %v3674 = vunpack.c.l.s4 1966171168
        %v3675 = vunpack.c.0.s8 %v3674
        %v3676 = vlaneseq
        %v3677 = vshrl.u32 %v3676, 7
        %v3678 = vsub.s32 %v3675, %v3677
        %v3679 = vrot.slane %v3665, %v3678
        %v3680 = vcombine.high %v3672, %v3672
        %v3681 = vcombine.high %v3679, %v3679
        %v3683 = vunpack.c.l.s4 1966171168
        %v3684 = vunpack.c.0.s8 %v3683
        %v3685 = vlaneseq
        %v3686 = vshrl.u32 %v3685, 7
        %v3687 = vsub.s32 %v3684, %v3686
        %v3688 = vrot.slane %v3672, %v3687
        %v3690 = vunpack.c.l.s4 1966171168
        %v3691 = vunpack.c.0.s8 %v3690
        %v3692 = vlaneseq
        %v3693 = vshrl.u32 %v3692, 7
        %v3694 = vsub.s32 %v3691, %v3693
        %v3695 = vrot.slane %v3679, %v3694
        %v3697 = vunpack.c.l.s4 1966171168
        %v3698 = vunpack.c.0.s8 %v3697
        %v3699 = vlaneseq
        %v3700 = vshrl.u32 %v3699, 7
        %v3701 = vsub.s32 %v3698, %v3700
        %v3702 = vrot.slane %v3680, %v3701
        %v3704 = vunpack.c.l.s4 1966171168
        %v3705 = vunpack.c.0.s8 %v3704
        %v3706 = vlaneseq
        %v3707 = vshrl.u32 %v3706, 7
        %v3708 = vsub.s32 %v3705, %v3707
        %v3709 = vrot.slane %v3681, %v3708
        %v3710 = vcombine.high %v3688, %v3688
        %v3711 = vcombine.high %v3695, %v3695
        %v3712 = vcombine.high %v3702, %v3702
        %v3713 = vcombine.high %v3709, %v3709
        %v3714 = vcombine.high %v2636, %v2636
        %v3716 = vunpack.c.l.s4 1966171168
        %v3717 = vunpack.c.0.s8 %v3716
        %v3718 = vlaneseq
        %v3719 = vshrl.u32 %v3718, 7
        %v3720 = vsub.s32 %v3717, %v3719
        %v3721 = vrot.slane %v2636, %v3720
        %v3723 = vunpack.c.l.s4 1966171168
        %v3724 = vunpack.c.0.s8 %v3723
        %v3725 = vlaneseq
        %v3726 = vshrl.u32 %v3725, 7
        %v3727 = vsub.s32 %v3724, %v3726
        %v3728 = vrot.slane %v3714, %v3727
        %v3729 = vcombine.high %v3721, %v3721
        %v3730 = vcombine.high %v3728, %v3728
        %v3732 = vunpack.c.l.s4 1966171168
        %v3733 = vunpack.c.0.s8 %v3732
        %v3734 = vlaneseq
        %v3735 = vshrl.u32 %v3734, 7
        %v3736 = vsub.s32 %v3733, %v3735
        %v3737 = vrot.slane %v3721, %v3736
        %v3739 = vunpack.c.l.s4 1966171168
        %v3740 = vunpack.c.0.s8 %v3739
        %v3741 = vlaneseq
        %v3742 = vshrl.u32 %v3741, 7
        %v3743 = vsub.s32 %v3740, %v3742
        %v3744 = vrot.slane %v3728, %v3743
        %v3746 = vunpack.c.l.s4 1966171168
        %v3747 = vunpack.c.0.s8 %v3746
        %v3748 = vlaneseq
        %v3749 = vshrl.u32 %v3748, 7
        %v3750 = vsub.s32 %v3747, %v3749
        %v3751 = vrot.slane %v3729, %v3750
        %v3753 = vunpack.c.l.s4 1966171168
        %v3754 = vunpack.c.0.s8 %v3753
        %v3755 = vlaneseq
        %v3756 = vshrl.u32 %v3755, 7
        %v3757 = vsub.s32 %v3754, %v3756
        %v3758 = vrot.slane %v3730, %v3757
        %v3759 = vcombine.high %v3737, %v3737
        %v3760 = vcombine.high %v3744, %v3744
        %v3761 = vcombine.high %v3751, %v3751
        %v3762 = vcombine.high %v3758, %v3758
        %v3763 = vcombine.high %v2639, %v2639
        %v3765 = vunpack.c.l.s4 1966171168
        %v3766 = vunpack.c.0.s8 %v3765
        %v3767 = vlaneseq
        %v3768 = vshrl.u32 %v3767, 7
        %v3769 = vsub.s32 %v3766, %v3768
        %v3770 = vrot.slane %v2639, %v3769
        %v3772 = vunpack.c.l.s4 1966171168
        %v3773 = vunpack.c.0.s8 %v3772
        %v3774 = vlaneseq
        %v3775 = vshrl.u32 %v3774, 7
        %v3776 = vsub.s32 %v3773, %v3775
        %v3777 = vrot.slane %v3763, %v3776
        %v3778 = vcombine.high %v3770, %v3770
        %v3779 = vcombine.high %v3777, %v3777
        %v3781 = vunpack.c.l.s4 1966171168
        %v3782 = vunpack.c.0.s8 %v3781
        %v3783 = vlaneseq
        %v3784 = vshrl.u32 %v3783, 7
        %v3785 = vsub.s32 %v3782, %v3784
        %v3786 = vrot.slane %v3770, %v3785
        %v3788 = vunpack.c.l.s4 1966171168
        %v3789 = vunpack.c.0.s8 %v3788
        %v3790 = vlaneseq
        %v3791 = vshrl.u32 %v3790, 7
        %v3792 = vsub.s32 %v3789, %v3791
        %v3793 = vrot.slane %v3777, %v3792
        %v3795 = vunpack.c.l.s4 1966171168
        %v3796 = vunpack.c.0.s8 %v3795
        %v3797 = vlaneseq
        %v3798 = vshrl.u32 %v3797, 7
        %v3799 = vsub.s32 %v3796, %v3798
        %v3800 = vrot.slane %v3778, %v3799
        %v3802 = vunpack.c.l.s4 1966171168
        %v3803 = vunpack.c.0.s8 %v3802
        %v3804 = vlaneseq
        %v3805 = vshrl.u32 %v3804, 7
        %v3806 = vsub.s32 %v3803, %v3805
        %v3807 = vrot.slane %v3779, %v3806
        %v3808 = vcombine.high %v3786, %v3786
        %v3809 = vcombine.high %v3793, %v3793
        %v3810 = vcombine.high %v3800, %v3800
        %v3811 = vcombine.high %v3807, %v3807
        %v3812 = vcombine.high %v2644, %v2644
        %v3814 = vunpack.c.l.s4 1966171168
        %v3815 = vunpack.c.0.s8 %v3814
        %v3816 = vlaneseq
        %v3817 = vshrl.u32 %v3816, 7
        %v3818 = vsub.s32 %v3815, %v3817
        %v3819 = vrot.slane %v2644, %v3818
        %v3821 = vunpack.c.l.s4 1966171168
        %v3822 = vunpack.c.0.s8 %v3821
        %v3823 = vlaneseq
        %v3824 = vshrl.u32 %v3823, 7
        %v3825 = vsub.s32 %v3822, %v3824
        %v3826 = vrot.slane %v3812, %v3825
        %v3827 = vcombine.high %v3819, %v3819
        %v3828 = vcombine.high %v3826, %v3826
        %v3830 = vunpack.c.l.s4 1966171168
        %v3831 = vunpack.c.0.s8 %v3830
        %v3832 = vlaneseq
        %v3833 = vshrl.u32 %v3832, 7
        %v3834 = vsub.s32 %v3831, %v3833
        %v3835 = vrot.slane %v3819, %v3834
        %v3837 = vunpack.c.l.s4 1966171168
        %v3838 = vunpack.c.0.s8 %v3837
        %v3839 = vlaneseq
        %v3840 = vshrl.u32 %v3839, 7
        %v3841 = vsub.s32 %v3838, %v3840
        %v3842 = vrot.slane %v3826, %v3841
        %v3844 = vunpack.c.l.s4 1966171168
        %v3845 = vunpack.c.0.s8 %v3844
        %v3846 = vlaneseq
        %v3847 = vshrl.u32 %v3846, 7
        %v3848 = vsub.s32 %v3845, %v3847
        %v3849 = vrot.slane %v3827, %v3848
        %v3851 = vunpack.c.l.s4 1966171168
        %v3852 = vunpack.c.0.s8 %v3851
        %v3853 = vlaneseq
        %v3854 = vshrl.u32 %v3853, 7
        %v3855 = vsub.s32 %v3852, %v3854
        %v3856 = vrot.slane %v3828, %v3855
        %v3857 = vcombine.high %v3835, %v3835
        %v3858 = vcombine.high %v3842, %v3842
        %v3859 = vcombine.high %v3849, %v3849
        %v3860 = vcombine.high %v3856, %v3856
        %v3861 = vcombine.high %v2647, %v2647
        %v3863 = vunpack.c.l.s4 1966171168
        %v3864 = vunpack.c.0.s8 %v3863
        %v3865 = vlaneseq
        %v3866 = vshrl.u32 %v3865, 7
        %v3867 = vsub.s32 %v3864, %v3866
        %v3868 = vrot.slane %v2647, %v3867
        %v3870 = vunpack.c.l.s4 1966171168
        %v3871 = vunpack.c.0.s8 %v3870
        %v3872 = vlaneseq
        %v3873 = vshrl.u32 %v3872, 7
        %v3874 = vsub.s32 %v3871, %v3873
        %v3875 = vrot.slane %v3861, %v3874
        %v3876 = vcombine.high %v3868, %v3868
        %v3877 = vcombine.high %v3875, %v3875
        %v3879 = vunpack.c.l.s4 1966171168
        %v3880 = vunpack.c.0.s8 %v3879
        %v3881 = vlaneseq
        %v3882 = vshrl.u32 %v3881, 7
        %v3883 = vsub.s32 %v3880, %v3882
        %v3884 = vrot.slane %v3868, %v3883
        %v3886 = vunpack.c.l.s4 1966171168
        %v3887 = vunpack.c.0.s8 %v3886
        %v3888 = vlaneseq
        %v3889 = vshrl.u32 %v3888, 7
        %v3890 = vsub.s32 %v3887, %v3889
        %v3891 = vrot.slane %v3875, %v3890
        %v3893 = vunpack.c.l.s4 1966171168
        %v3894 = vunpack.c.0.s8 %v3893
        %v3895 = vlaneseq
        %v3896 = vshrl.u32 %v3895, 7
        %v3897 = vsub.s32 %v3894, %v3896
        %v3898 = vrot.slane %v3876, %v3897
        %v3900 = vunpack.c.l.s4 1966171168
        %v3901 = vunpack.c.0.s8 %v3900
        %v3902 = vlaneseq
        %v3903 = vshrl.u32 %v3902, 7
        %v3904 = vsub.s32 %v3901, %v3903
        %v3905 = vrot.slane %v3877, %v3904
        %v3906 = vcombine.high %v3884, %v3884
        %v3907 = vcombine.high %v3891, %v3891
        %v3908 = vcombine.high %v3898, %v3898
        %v3909 = vcombine.high %v3905, %v3905
        %v3910 = vcombine.high %v2652, %v2652
        %v3912 = vunpack.c.l.s4 1966171168
        %v3913 = vunpack.c.0.s8 %v3912
        %v3914 = vlaneseq
        %v3915 = vshrl.u32 %v3914, 7
        %v3916 = vsub.s32 %v3913, %v3915
        %v3917 = vrot.slane %v2652, %v3916
        %v3919 = vunpack.c.l.s4 1966171168
        %v3920 = vunpack.c.0.s8 %v3919
        %v3921 = vlaneseq
        %v3922 = vshrl.u32 %v3921, 7
        %v3923 = vsub.s32 %v3920, %v3922
        %v3924 = vrot.slane %v3910, %v3923
        %v3925 = vcombine.high %v3917, %v3917
        %v3926 = vcombine.high %v3924, %v3924
        %v3928 = vunpack.c.l.s4 1966171168
        %v3929 = vunpack.c.0.s8 %v3928
        %v3930 = vlaneseq
        %v3931 = vshrl.u32 %v3930, 7
        %v3932 = vsub.s32 %v3929, %v3931
        %v3933 = vrot.slane %v3917, %v3932
        %v3935 = vunpack.c.l.s4 1966171168
        %v3936 = vunpack.c.0.s8 %v3935
        %v3937 = vlaneseq
        %v3938 = vshrl.u32 %v3937, 7
        %v3939 = vsub.s32 %v3936, %v3938
        %v3940 = vrot.slane %v3924, %v3939
        %v3942 = vunpack.c.l.s4 1966171168
        %v3943 = vunpack.c.0.s8 %v3942
        %v3944 = vlaneseq
        %v3945 = vshrl.u32 %v3944, 7
        %v3946 = vsub.s32 %v3943, %v3945
        %v3947 = vrot.slane %v3925, %v3946
        %v3949 = vunpack.c.l.s4 1966171168
        %v3950 = vunpack.c.0.s8 %v3949
        %v3951 = vlaneseq
        %v3952 = vshrl.u32 %v3951, 7
        %v3953 = vsub.s32 %v3950, %v3952
        %v3954 = vrot.slane %v3926, %v3953
        %v3955 = vcombine.high %v3933, %v3933
        %v3956 = vcombine.high %v3940, %v3940
        %v3957 = vcombine.high %v3947, %v3947
        %v3958 = vcombine.high %v3954, %v3954
        %v3959 = vcombine.high %v2655, %v2655
        %v3961 = vunpack.c.l.s4 1966171168
        %v3962 = vunpack.c.0.s8 %v3961
        %v3963 = vlaneseq
        %v3964 = vshrl.u32 %v3963, 7
        %v3965 = vsub.s32 %v3962, %v3964
        %v3966 = vrot.slane %v2655, %v3965
        %v3968 = vunpack.c.l.s4 1966171168
        %v3969 = vunpack.c.0.s8 %v3968
        %v3970 = vlaneseq
        %v3971 = vshrl.u32 %v3970, 7
        %v3972 = vsub.s32 %v3969, %v3971
        %v3973 = vrot.slane %v3959, %v3972
        %v3974 = vcombine.high %v3966, %v3966
        %v3975 = vcombine.high %v3973, %v3973
        %v3977 = vunpack.c.l.s4 1966171168
        %v3978 = vunpack.c.0.s8 %v3977
        %v3979 = vlaneseq
        %v3980 = vshrl.u32 %v3979, 7
        %v3981 = vsub.s32 %v3978, %v3980
        %v3982 = vrot.slane %v3966, %v3981
        %v3984 = vunpack.c.l.s4 1966171168
        %v3985 = vunpack.c.0.s8 %v3984
        %v3986 = vlaneseq
        %v3987 = vshrl.u32 %v3986, 7
        %v3988 = vsub.s32 %v3985, %v3987
        %v3989 = vrot.slane %v3973, %v3988
        %v3991 = vunpack.c.l.s4 1966171168
        %v3992 = vunpack.c.0.s8 %v3991
        %v3993 = vlaneseq
        %v3994 = vshrl.u32 %v3993, 7
        %v3995 = vsub.s32 %v3992, %v3994
        %v3996 = vrot.slane %v3974, %v3995
        %v3998 = vunpack.c.l.s4 1966171168
        %v3999 = vunpack.c.0.s8 %v3998
        %v4000 = vlaneseq
        %v4001 = vshrl.u32 %v4000, 7
        %v4002 = vsub.s32 %v3999, %v4001
        %v4003 = vrot.slane %v3975, %v4002
        %v4004 = vcombine.high %v3982, %v3982
        %v4005 = vcombine.high %v3989, %v3989
        %v4006 = vcombine.high %v3996, %v3996
        %v4007 = vcombine.high %v4003, %v4003
        %v4008 = vcombine.high %v2660, %v2660
        %v4010 = vunpack.c.l.s4 1966171168
        %v4011 = vunpack.c.0.s8 %v4010
        %v4012 = vlaneseq
        %v4013 = vshrl.u32 %v4012, 7
        %v4014 = vsub.s32 %v4011, %v4013
        %v4015 = vrot.slane %v2660, %v4014
        %v4017 = vunpack.c.l.s4 1966171168
        %v4018 = vunpack.c.0.s8 %v4017
        %v4019 = vlaneseq
        %v4020 = vshrl.u32 %v4019, 7
        %v4021 = vsub.s32 %v4018, %v4020
        %v4022 = vrot.slane %v4008, %v4021
        %v4023 = vcombine.high %v4015, %v4015
        %v4024 = vcombine.high %v4022, %v4022
        %v4026 = vunpack.c.l.s4 1966171168
        %v4027 = vunpack.c.0.s8 %v4026
        %v4028 = vlaneseq
        %v4029 = vshrl.u32 %v4028, 7
        %v4030 = vsub.s32 %v4027, %v4029
        %v4031 = vrot.slane %v4015, %v4030
        %v4033 = vunpack.c.l.s4 1966171168
        %v4034 = vunpack.c.0.s8 %v4033
        %v4035 = vlaneseq
        %v4036 = vshrl.u32 %v4035, 7
        %v4037 = vsub.s32 %v4034, %v4036
        %v4038 = vrot.slane %v4022, %v4037
        %v4040 = vunpack.c.l.s4 1966171168
        %v4041 = vunpack.c.0.s8 %v4040
        %v4042 = vlaneseq
        %v4043 = vshrl.u32 %v4042, 7
        %v4044 = vsub.s32 %v4041, %v4043
        %v4045 = vrot.slane %v4023, %v4044
        %v4047 = vunpack.c.l.s4 1966171168
        %v4048 = vunpack.c.0.s8 %v4047
        %v4049 = vlaneseq
        %v4050 = vshrl.u32 %v4049, 7
        %v4051 = vsub.s32 %v4048, %v4050
        %v4052 = vrot.slane %v4024, %v4051
        %v4053 = vcombine.high %v4031, %v4031
        %v4054 = vcombine.high %v4038, %v4038
        %v4055 = vcombine.high %v4045, %v4045
        %v4056 = vcombine.high %v4052, %v4052
        %v4057 = vcombine.high %v2663, %v2663
        %v4059 = vunpack.c.l.s4 1966171168
        %v4060 = vunpack.c.0.s8 %v4059
        %v4061 = vlaneseq
        %v4062 = vshrl.u32 %v4061, 7
        %v4063 = vsub.s32 %v4060, %v4062
        %v4064 = vrot.slane %v2663, %v4063
        %v4066 = vunpack.c.l.s4 1966171168
        %v4067 = vunpack.c.0.s8 %v4066
        %v4068 = vlaneseq
        %v4069 = vshrl.u32 %v4068, 7
        %v4070 = vsub.s32 %v4067, %v4069
        %v4071 = vrot.slane %v4057, %v4070
        %v4072 = vcombine.high %v4064, %v4064
        %v4073 = vcombine.high %v4071, %v4071
        %v4075 = vunpack.c.l.s4 1966171168
        %v4076 = vunpack.c.0.s8 %v4075
        %v4077 = vlaneseq
        %v4078 = vshrl.u32 %v4077, 7
        %v4079 = vsub.s32 %v4076, %v4078
        %v4080 = vrot.slane %v4064, %v4079
        %v4082 = vunpack.c.l.s4 1966171168
        %v4083 = vunpack.c.0.s8 %v4082
        %v4084 = vlaneseq
        %v4085 = vshrl.u32 %v4084, 7
        %v4086 = vsub.s32 %v4083, %v4085
        %v4087 = vrot.slane %v4071, %v4086
        %v4089 = vunpack.c.l.s4 1966171168
        %v4090 = vunpack.c.0.s8 %v4089
        %v4091 = vlaneseq
        %v4092 = vshrl.u32 %v4091, 7
        %v4093 = vsub.s32 %v4090, %v4092
        %v4094 = vrot.slane %v4072, %v4093
        %v4096 = vunpack.c.l.s4 1966171168
        %v4097 = vunpack.c.0.s8 %v4096
        %v4098 = vlaneseq
        %v4099 = vshrl.u32 %v4098, 7
        %v4100 = vsub.s32 %v4097, %v4099
        %v4101 = vrot.slane %v4073, %v4100
        %v4102 = vcombine.high %v4080, %v4080
        %v4103 = vcombine.high %v4087, %v4087
        %v4104 = vcombine.high %v4094, %v4094
        %v4105 = vcombine.high %v4101, %v4101
        %v4106 = vcombine.high %v2668, %v2668
        %v4108 = vunpack.c.l.s4 1966171168
        %v4109 = vunpack.c.0.s8 %v4108
        %v4110 = vlaneseq
        %v4111 = vshrl.u32 %v4110, 7
        %v4112 = vsub.s32 %v4109, %v4111
        %v4113 = vrot.slane %v2668, %v4112
        %v4115 = vunpack.c.l.s4 1966171168
        %v4116 = vunpack.c.0.s8 %v4115
        %v4117 = vlaneseq
        %v4118 = vshrl.u32 %v4117, 7
        %v4119 = vsub.s32 %v4116, %v4118
        %v4120 = vrot.slane %v4106, %v4119
        %v4121 = vcombine.high %v4113, %v4113
        %v4122 = vcombine.high %v4120, %v4120
        %v4124 = vunpack.c.l.s4 1966171168
        %v4125 = vunpack.c.0.s8 %v4124
        %v4126 = vlaneseq
        %v4127 = vshrl.u32 %v4126, 7
        %v4128 = vsub.s32 %v4125, %v4127
        %v4129 = vrot.slane %v4113, %v4128
        %v4131 = vunpack.c.l.s4 1966171168
        %v4132 = vunpack.c.0.s8 %v4131
        %v4133 = vlaneseq
        %v4134 = vshrl.u32 %v4133, 7
        %v4135 = vsub.s32 %v4132, %v4134
        %v4136 = vrot.slane %v4120, %v4135
        %v4138 = vunpack.c.l.s4 1966171168
        %v4139 = vunpack.c.0.s8 %v4138
        %v4140 = vlaneseq
        %v4141 = vshrl.u32 %v4140, 7
        %v4142 = vsub.s32 %v4139, %v4141
        %v4143 = vrot.slane %v4121, %v4142
        %v4145 = vunpack.c.l.s4 1966171168
        %v4146 = vunpack.c.0.s8 %v4145
        %v4147 = vlaneseq
        %v4148 = vshrl.u32 %v4147, 7
        %v4149 = vsub.s32 %v4146, %v4148
        %v4150 = vrot.slane %v4122, %v4149
        %v4151 = vcombine.high %v4129, %v4129
        %v4152 = vcombine.high %v4136, %v4136
        %v4153 = vcombine.high %v4143, %v4143
        %v4154 = vcombine.high %v4150, %v4150
        %v4155 = vcombine.high %v2671, %v2671
        %v4157 = vunpack.c.l.s4 1966171168
        %v4158 = vunpack.c.0.s8 %v4157
        %v4159 = vlaneseq
        %v4160 = vshrl.u32 %v4159, 7
        %v4161 = vsub.s32 %v4158, %v4160
        %v4162 = vrot.slane %v2671, %v4161
        %v4164 = vunpack.c.l.s4 1966171168
        %v4165 = vunpack.c.0.s8 %v4164
        %v4166 = vlaneseq
        %v4167 = vshrl.u32 %v4166, 7
        %v4168 = vsub.s32 %v4165, %v4167
        %v4169 = vrot.slane %v4155, %v4168
        %v4170 = vcombine.high %v4162, %v4162
        %v4171 = vcombine.high %v4169, %v4169
        %v4173 = vunpack.c.l.s4 1966171168
        %v4174 = vunpack.c.0.s8 %v4173
        %v4175 = vlaneseq
        %v4176 = vshrl.u32 %v4175, 7
        %v4177 = vsub.s32 %v4174, %v4176
        %v4178 = vrot.slane %v4162, %v4177
        %v4180 = vunpack.c.l.s4 1966171168
        %v4181 = vunpack.c.0.s8 %v4180
        %v4182 = vlaneseq
        %v4183 = vshrl.u32 %v4182, 7
        %v4184 = vsub.s32 %v4181, %v4183
        %v4185 = vrot.slane %v4169, %v4184
        %v4187 = vunpack.c.l.s4 1966171168
        %v4188 = vunpack.c.0.s8 %v4187
        %v4189 = vlaneseq
        %v4190 = vshrl.u32 %v4189, 7
        %v4191 = vsub.s32 %v4188, %v4190
        %v4192 = vrot.slane %v4170, %v4191
        %v4194 = vunpack.c.l.s4 1966171168
        %v4195 = vunpack.c.0.s8 %v4194
        %v4196 = vlaneseq
        %v4197 = vshrl.u32 %v4196, 7
        %v4198 = vsub.s32 %v4195, %v4197
        %v4199 = vrot.slane %v4171, %v4198
        %v4200 = vcombine.high %v4178, %v4178
        %v4201 = vcombine.high %v4185, %v4185
        %v4202 = vcombine.high %v4192, %v4192
        %v4203 = vcombine.high %v4199, %v4199
        %v4204 = vcombine.high %v2676, %v2676
        %v4206 = vunpack.c.l.s4 1966171168
        %v4207 = vunpack.c.0.s8 %v4206
        %v4208 = vlaneseq
        %v4209 = vshrl.u32 %v4208, 7
        %v4210 = vsub.s32 %v4207, %v4209
        %v4211 = vrot.slane %v2676, %v4210
        %v4213 = vunpack.c.l.s4 1966171168
        %v4214 = vunpack.c.0.s8 %v4213
        %v4215 = vlaneseq
        %v4216 = vshrl.u32 %v4215, 7
        %v4217 = vsub.s32 %v4214, %v4216
        %v4218 = vrot.slane %v4204, %v4217
        %v4219 = vcombine.high %v4211, %v4211
        %v4220 = vcombine.high %v4218, %v4218
        %v4222 = vunpack.c.l.s4 1966171168
        %v4223 = vunpack.c.0.s8 %v4222
        %v4224 = vlaneseq
        %v4225 = vshrl.u32 %v4224, 7
        %v4226 = vsub.s32 %v4223, %v4225
        %v4227 = vrot.slane %v4211, %v4226
        %v4229 = vunpack.c.l.s4 1966171168
        %v4230 = vunpack.c.0.s8 %v4229
        %v4231 = vlaneseq
        %v4232 = vshrl.u32 %v4231, 7
        %v4233 = vsub.s32 %v4230, %v4232
        %v4234 = vrot.slane %v4218, %v4233
        %v4236 = vunpack.c.l.s4 1966171168
        %v4237 = vunpack.c.0.s8 %v4236
        %v4238 = vlaneseq
        %v4239 = vshrl.u32 %v4238, 7
        %v4240 = vsub.s32 %v4237, %v4239
        %v4241 = vrot.slane %v4219, %v4240
        %v4243 = vunpack.c.l.s4 1966171168
        %v4244 = vunpack.c.0.s8 %v4243
        %v4245 = vlaneseq
        %v4246 = vshrl.u32 %v4245, 7
        %v4247 = vsub.s32 %v4244, %v4246
        %v4248 = vrot.slane %v4220, %v4247
        %v4249 = vcombine.high %v4227, %v4227
        %v4250 = vcombine.high %v4234, %v4234
        %v4251 = vcombine.high %v4241, %v4241
        %v4252 = vcombine.high %v4248, %v4248
        %v4253 = vcombine.high %v2679, %v2679
        %v4255 = vunpack.c.l.s4 1966171168
        %v4256 = vunpack.c.0.s8 %v4255
        %v4257 = vlaneseq
        %v4258 = vshrl.u32 %v4257, 7
        %v4259 = vsub.s32 %v4256, %v4258
        %v4260 = vrot.slane %v2679, %v4259
        %v4262 = vunpack.c.l.s4 1966171168
        %v4263 = vunpack.c.0.s8 %v4262
        %v4264 = vlaneseq
        %v4265 = vshrl.u32 %v4264, 7
        %v4266 = vsub.s32 %v4263, %v4265
        %v4267 = vrot.slane %v4253, %v4266
        %v4268 = vcombine.high %v4260, %v4260
        %v4269 = vcombine.high %v4267, %v4267
        %v4271 = vunpack.c.l.s4 1966171168
        %v4272 = vunpack.c.0.s8 %v4271
        %v4273 = vlaneseq
        %v4274 = vshrl.u32 %v4273, 7
        %v4275 = vsub.s32 %v4272, %v4274
        %v4276 = vrot.slane %v4260, %v4275
        %v4278 = vunpack.c.l.s4 1966171168
        %v4279 = vunpack.c.0.s8 %v4278
        %v4280 = vlaneseq
        %v4281 = vshrl.u32 %v4280, 7
        %v4282 = vsub.s32 %v4279, %v4281
        %v4283 = vrot.slane %v4267, %v4282
        %v4285 = vunpack.c.l.s4 1966171168
        %v4286 = vunpack.c.0.s8 %v4285
        %v4287 = vlaneseq
        %v4288 = vshrl.u32 %v4287, 7
        %v4289 = vsub.s32 %v4286, %v4288
        %v4290 = vrot.slane %v4268, %v4289
        %v4292 = vunpack.c.l.s4 1966171168
        %v4293 = vunpack.c.0.s8 %v4292
        %v4294 = vlaneseq
        %v4295 = vshrl.u32 %v4294, 7
        %v4296 = vsub.s32 %v4293, %v4295
        %v4297 = vrot.slane %v4269, %v4296
        %v4298 = vcombine.high %v4276, %v4276
        %v4299 = vcombine.high %v4283, %v4283
        %v4300 = vcombine.high %v4290, %v4290
        %v4301 = vcombine.high %v4297, %v4297
        %v4302 = vcombine.high %v2684, %v2684
        %v4304 = vunpack.c.l.s4 1966171168
        %v4305 = vunpack.c.0.s8 %v4304
        %v4306 = vlaneseq
        %v4307 = vshrl.u32 %v4306, 7
        %v4308 = vsub.s32 %v4305, %v4307
        %v4309 = vrot.slane %v2684, %v4308
        %v4311 = vunpack.c.l.s4 1966171168
        %v4312 = vunpack.c.0.s8 %v4311
        %v4313 = vlaneseq
        %v4314 = vshrl.u32 %v4313, 7
        %v4315 = vsub.s32 %v4312, %v4314
        %v4316 = vrot.slane %v4302, %v4315
        %v4317 = vcombine.high %v4309, %v4309
        %v4318 = vcombine.high %v4316, %v4316
        %v4320 = vunpack.c.l.s4 1966171168
        %v4321 = vunpack.c.0.s8 %v4320
        %v4322 = vlaneseq
        %v4323 = vshrl.u32 %v4322, 7
        %v4324 = vsub.s32 %v4321, %v4323
        %v4325 = vrot.slane %v4309, %v4324
        %v4327 = vunpack.c.l.s4 1966171168
        %v4328 = vunpack.c.0.s8 %v4327
        %v4329 = vlaneseq
        %v4330 = vshrl.u32 %v4329, 7
        %v4331 = vsub.s32 %v4328, %v4330
        %v4332 = vrot.slane %v4316, %v4331
        %v4334 = vunpack.c.l.s4 1966171168
        %v4335 = vunpack.c.0.s8 %v4334
        %v4336 = vlaneseq
        %v4337 = vshrl.u32 %v4336, 7
        %v4338 = vsub.s32 %v4335, %v4337
        %v4339 = vrot.slane %v4317, %v4338
        %v4341 = vunpack.c.l.s4 1966171168
        %v4342 = vunpack.c.0.s8 %v4341
        %v4343 = vlaneseq
        %v4344 = vshrl.u32 %v4343, 7
        %v4345 = vsub.s32 %v4342, %v4344
        %v4346 = vrot.slane %v4318, %v4345
        %v4347 = vcombine.high %v4325, %v4325
        %v4348 = vcombine.high %v4332, %v4332
        %v4349 = vcombine.high %v4339, %v4339
        %v4350 = vcombine.high %v4346, %v4346
        %v4351 = vcombine.high %v2687, %v2687
        %v4353 = vunpack.c.l.s4 1966171168
        %v4354 = vunpack.c.0.s8 %v4353
        %v4355 = vlaneseq
        %v4356 = vshrl.u32 %v4355, 7
        %v4357 = vsub.s32 %v4354, %v4356
        %v4358 = vrot.slane %v2687, %v4357
        %v4360 = vunpack.c.l.s4 1966171168
        %v4361 = vunpack.c.0.s8 %v4360
        %v4362 = vlaneseq
        %v4363 = vshrl.u32 %v4362, 7
        %v4364 = vsub.s32 %v4361, %v4363
        %v4365 = vrot.slane %v4351, %v4364
        %v4366 = vcombine.high %v4358, %v4358
        %v4367 = vcombine.high %v4365, %v4365
        %v4369 = vunpack.c.l.s4 1966171168
        %v4370 = vunpack.c.0.s8 %v4369
        %v4371 = vlaneseq
        %v4372 = vshrl.u32 %v4371, 7
        %v4373 = vsub.s32 %v4370, %v4372
        %v4374 = vrot.slane %v4358, %v4373
        %v4376 = vunpack.c.l.s4 1966171168
        %v4377 = vunpack.c.0.s8 %v4376
        %v4378 = vlaneseq
        %v4379 = vshrl.u32 %v4378, 7
        %v4380 = vsub.s32 %v4377, %v4379
        %v4381 = vrot.slane %v4365, %v4380
        %v4383 = vunpack.c.l.s4 1966171168
        %v4384 = vunpack.c.0.s8 %v4383
        %v4385 = vlaneseq
        %v4386 = vshrl.u32 %v4385, 7
        %v4387 = vsub.s32 %v4384, %v4386
        %v4388 = vrot.slane %v4366, %v4387
        %v4390 = vunpack.c.l.s4 1966171168
        %v4391 = vunpack.c.0.s8 %v4390
        %v4392 = vlaneseq
        %v4393 = vshrl.u32 %v4392, 7
        %v4394 = vsub.s32 %v4391, %v4393
        %v4395 = vrot.slane %v4367, %v4394
        %v4396 = vcombine.high %v4374, %v4374
        %v4397 = vcombine.high %v4381, %v4381
        %v4398 = vcombine.high %v4388, %v4388
        %v4399 = vcombine.high %v4395, %v4395
        %v4400 = vcombine.high %v2692, %v2692
        %v4402 = vunpack.c.l.s4 1966171168
        %v4403 = vunpack.c.0.s8 %v4402
        %v4404 = vlaneseq
        %v4405 = vshrl.u32 %v4404, 7
        %v4406 = vsub.s32 %v4403, %v4405
        %v4407 = vrot.slane %v2692, %v4406
        %v4409 = vunpack.c.l.s4 1966171168
        %v4410 = vunpack.c.0.s8 %v4409
        %v4411 = vlaneseq
        %v4412 = vshrl.u32 %v4411, 7
        %v4413 = vsub.s32 %v4410, %v4412
        %v4414 = vrot.slane %v4400, %v4413
        %v4415 = vcombine.high %v4407, %v4407
        %v4416 = vcombine.high %v4414, %v4414
        %v4418 = vunpack.c.l.s4 1966171168
        %v4419 = vunpack.c.0.s8 %v4418
        %v4420 = vlaneseq
        %v4421 = vshrl.u32 %v4420, 7
        %v4422 = vsub.s32 %v4419, %v4421
        %v4423 = vrot.slane %v4407, %v4422
        %v4425 = vunpack.c.l.s4 1966171168
        %v4426 = vunpack.c.0.s8 %v4425
        %v4427 = vlaneseq
        %v4428 = vshrl.u32 %v4427, 7
        %v4429 = vsub.s32 %v4426, %v4428
        %v4430 = vrot.slane %v4414, %v4429
        %v4432 = vunpack.c.l.s4 1966171168
        %v4433 = vunpack.c.0.s8 %v4432
        %v4434 = vlaneseq
        %v4435 = vshrl.u32 %v4434, 7
        %v4436 = vsub.s32 %v4433, %v4435
        %v4437 = vrot.slane %v4415, %v4436
        %v4439 = vunpack.c.l.s4 1966171168
        %v4440 = vunpack.c.0.s8 %v4439
        %v4441 = vlaneseq
        %v4442 = vshrl.u32 %v4441, 7
        %v4443 = vsub.s32 %v4440, %v4442
        %v4444 = vrot.slane %v4416, %v4443
        %v4445 = vcombine.high %v4423, %v4423
        %v4446 = vcombine.high %v4430, %v4430
        %v4447 = vcombine.high %v4437, %v4437
        %v4448 = vcombine.high %v4444, %v4444
        %v4449 = vcombine.high %v2695, %v2695
        %v4451 = vunpack.c.l.s4 1966171168
        %v4452 = vunpack.c.0.s8 %v4451
        %v4453 = vlaneseq
        %v4454 = vshrl.u32 %v4453, 7
        %v4455 = vsub.s32 %v4452, %v4454
        %v4456 = vrot.slane %v2695, %v4455
        %v4458 = vunpack.c.l.s4 1966171168
        %v4459 = vunpack.c.0.s8 %v4458
        %v4460 = vlaneseq
        %v4461 = vshrl.u32 %v4460, 7
        %v4462 = vsub.s32 %v4459, %v4461
        %v4463 = vrot.slane %v4449, %v4462
        %v4464 = vcombine.high %v4456, %v4456
        %v4465 = vcombine.high %v4463, %v4463
        %v4467 = vunpack.c.l.s4 1966171168
        %v4468 = vunpack.c.0.s8 %v4467
        %v4469 = vlaneseq
        %v4470 = vshrl.u32 %v4469, 7
        %v4471 = vsub.s32 %v4468, %v4470
        %v4472 = vrot.slane %v4456, %v4471
        %v4474 = vunpack.c.l.s4 1966171168
        %v4475 = vunpack.c.0.s8 %v4474
        %v4476 = vlaneseq
        %v4477 = vshrl.u32 %v4476, 7
        %v4478 = vsub.s32 %v4475, %v4477
        %v4479 = vrot.slane %v4463, %v4478
        %v4481 = vunpack.c.l.s4 1966171168
        %v4482 = vunpack.c.0.s8 %v4481
        %v4483 = vlaneseq
        %v4484 = vshrl.u32 %v4483, 7
        %v4485 = vsub.s32 %v4482, %v4484
        %v4486 = vrot.slane %v4464, %v4485
        %v4488 = vunpack.c.l.s4 1966171168
        %v4489 = vunpack.c.0.s8 %v4488
        %v4490 = vlaneseq
        %v4491 = vshrl.u32 %v4490, 7
        %v4492 = vsub.s32 %v4489, %v4491
        %v4493 = vrot.slane %v4465, %v4492
        %v4494 = vcombine.high %v4472, %v4472
        %v4495 = vcombine.high %v4479, %v4479
        %v4496 = vcombine.high %v4486, %v4486
        %v4497 = vcombine.high %v4493, %v4493
        %v4498 = vcombine.low %v2757, %v2820
        %v4499 = vcombine.low %v2877, %v2928
        %v4500 = vcombine.low %v2960, %v3023
        %v4501 = vcombine.low %v3074, %v3125
        %v4503 = vunpack.c.l.s4 1966171168
        %v4504 = vunpack.c.0.s8 %v4503
        %v4505 = vlaneseq
        %v4506 = vshrl.u32 %v4505, 7
        %v4507 = vsub.s32 %v4504, %v4506
        %v4508 = vrot.slane %v4498, %v4507
        %v4510 = vunpack.c.l.s4 1966171168
        %v4511 = vunpack.c.0.s8 %v4510
        %v4512 = vlaneseq
        %v4513 = vshrl.u32 %v4512, 7
        %v4514 = vsub.s32 %v4511, %v4513
        %v4515 = vrot.slane %v4499, %v4514
        %v4517 = vunpack.c.l.s4 1966171168
        %v4518 = vunpack.c.0.s8 %v4517
        %v4519 = vlaneseq
        %v4520 = vshrl.u32 %v4519, 7
        %v4521 = vsub.s32 %v4518, %v4520
        %v4522 = vrot.slane %v4500, %v4521
        %v4524 = vunpack.c.l.s4 1966171168
        %v4525 = vunpack.c.0.s8 %v4524
        %v4526 = vlaneseq
        %v4527 = vshrl.u32 %v4526, 7
        %v4528 = vsub.s32 %v4525, %v4527
        %v4529 = vrot.slane %v4501, %v4528
        %v4530 = vcombine.low %v4508, %v4515
        %v4531 = vcombine.low %v4522, %v4529
        %v4533 = vunpack.c.l.s4 1966171168
        %v4534 = vunpack.c.0.s8 %v4533
        %v4535 = vlaneseq
        %v4536 = vshrl.u32 %v4535, 7
        %v4537 = vsub.s32 %v4534, %v4536
        %v4538 = vrot.slane %v4530, %v4537
        %v4540 = vunpack.c.l.s4 1966171168
        %v4541 = vunpack.c.0.s8 %v4540
        %v4542 = vlaneseq
        %v4543 = vshrl.u32 %v4542, 7
        %v4544 = vsub.s32 %v4541, %v4543
        %v4545 = vrot.slane %v4531, %v4544
        %v4546 = vcombine.low %v4538, %v4545
        %v4547 = vcombine.low %v3198, %v3261
        %v4548 = vcombine.low %v3318, %v3369
        %v4549 = vcombine.low %v3401, %v3464
        %v4550 = vcombine.low %v3515, %v3566
        %v4552 = vunpack.c.l.s4 1966171168
        %v4553 = vunpack.c.0.s8 %v4552
        %v4554 = vlaneseq
        %v4555 = vshrl.u32 %v4554, 7
        %v4556 = vsub.s32 %v4553, %v4555
        %v4557 = vrot.slane %v4547, %v4556
        %v4559 = vunpack.c.l.s4 1966171168
        %v4560 = vunpack.c.0.s8 %v4559
        %v4561 = vlaneseq
        %v4562 = vshrl.u32 %v4561, 7
        %v4563 = vsub.s32 %v4560, %v4562
        %v4564 = vrot.slane %v4548, %v4563
        %v4566 = vunpack.c.l.s4 1966171168
        %v4567 = vunpack.c.0.s8 %v4566
        %v4568 = vlaneseq
        %v4569 = vshrl.u32 %v4568, 7
        %v4570 = vsub.s32 %v4567, %v4569
        %v4571 = vrot.slane %v4549, %v4570
        %v4573 = vunpack.c.l.s4 1966171168
        %v4574 = vunpack.c.0.s8 %v4573
        %v4575 = vlaneseq
        %v4576 = vshrl.u32 %v4575, 7
        %v4577 = vsub.s32 %v4574, %v4576
        %v4578 = vrot.slane %v4550, %v4577
        %v4579 = vcombine.low %v4557, %v4564
        %v4580 = vcombine.low %v4571, %v4578
        %v4582 = vunpack.c.l.s4 1966171168
        %v4583 = vunpack.c.0.s8 %v4582
        %v4584 = vlaneseq
        %v4585 = vshrl.u32 %v4584, 7
        %v4586 = vsub.s32 %v4583, %v4585
        %v4587 = vrot.slane %v4579, %v4586
        %v4589 = vunpack.c.l.s4 1966171168
        %v4590 = vunpack.c.0.s8 %v4589
        %v4591 = vlaneseq
        %v4592 = vshrl.u32 %v4591, 7
        %v4593 = vsub.s32 %v4590, %v4592
        %v4594 = vrot.slane %v4580, %v4593
        %v4595 = vcombine.low %v4587, %v4594
        %v4596 = vcombine.low %v3639, %v3702
        %v4597 = vcombine.low %v3759, %v3810
        %v4598 = vcombine.low %v3842, %v3905
        %v4599 = vcombine.low %v3956, %v4007
        %v4601 = vunpack.c.l.s4 1966171168
        %v4602 = vunpack.c.0.s8 %v4601
        %v4603 = vlaneseq
        %v4604 = vshrl.u32 %v4603, 7
        %v4605 = vsub.s32 %v4602, %v4604
        %v4606 = vrot.slane %v4596, %v4605
        %v4608 = vunpack.c.l.s4 1966171168
        %v4609 = vunpack.c.0.s8 %v4608
        %v4610 = vlaneseq
        %v4611 = vshrl.u32 %v4610, 7
        %v4612 = vsub.s32 %v4609, %v4611
        %v4613 = vrot.slane %v4597, %v4612
        %v4615 = vunpack.c.l.s4 1966171168
        %v4616 = vunpack.c.0.s8 %v4615
        %v4617 = vlaneseq
        %v4618 = vshrl.u32 %v4617, 7
        %v4619 = vsub.s32 %v4616, %v4618
        %v4620 = vrot.slane %v4598, %v4619
        %v4622 = vunpack.c.l.s4 1966171168
        %v4623 = vunpack.c.0.s8 %v4622
        %v4624 = vlaneseq
        %v4625 = vshrl.u32 %v4624, 7
        %v4626 = vsub.s32 %v4623, %v4625
        %v4627 = vrot.slane %v4599, %v4626
        %v4628 = vcombine.low %v4606, %v4613
        %v4629 = vcombine.low %v4620, %v4627
        %v4631 = vunpack.c.l.s4 1966171168
        %v4632 = vunpack.c.0.s8 %v4631
        %v4633 = vlaneseq
        %v4634 = vshrl.u32 %v4633, 7
        %v4635 = vsub.s32 %v4632, %v4634
        %v4636 = vrot.slane %v4628, %v4635
        %v4638 = vunpack.c.l.s4 1966171168
        %v4639 = vunpack.c.0.s8 %v4638
        %v4640 = vlaneseq
        %v4641 = vshrl.u32 %v4640, 7
        %v4642 = vsub.s32 %v4639, %v4641
        %v4643 = vrot.slane %v4629, %v4642
        %v4644 = vcombine.low %v4636, %v4643
        %v4645 = vcombine.low %v4080, %v4143
        %v4646 = vcombine.low %v4200, %v4251
        %v4647 = vcombine.low %v4283, %v4346
        %v4648 = vcombine.low %v4397, %v4448
        %v4650 = vunpack.c.l.s4 1966171168
        %v4651 = vunpack.c.0.s8 %v4650
        %v4652 = vlaneseq
        %v4653 = vshrl.u32 %v4652, 7
        %v4654 = vsub.s32 %v4651, %v4653
        %v4655 = vrot.slane %v4645, %v4654
        %v4657 = vunpack.c.l.s4 1966171168
        %v4658 = vunpack.c.0.s8 %v4657
        %v4659 = vlaneseq
        %v4660 = vshrl.u32 %v4659, 7
        %v4661 = vsub.s32 %v4658, %v4660
        %v4662 = vrot.slane %v4646, %v4661
        %v4664 = vunpack.c.l.s4 1966171168
        %v4665 = vunpack.c.0.s8 %v4664
        %v4666 = vlaneseq
        %v4667 = vshrl.u32 %v4666, 7
        %v4668 = vsub.s32 %v4665, %v4667
        %v4669 = vrot.slane %v4647, %v4668
        %v4671 = vunpack.c.l.s4 1966171168
        %v4672 = vunpack.c.0.s8 %v4671
        %v4673 = vlaneseq
        %v4674 = vshrl.u32 %v4673, 7
        %v4675 = vsub.s32 %v4672, %v4674
        %v4676 = vrot.slane %v4648, %v4675
        %v4677 = vcombine.low %v4655, %v4662
        %v4678 = vcombine.low %v4669, %v4676
        %v4680 = vunpack.c.l.s4 1966171168
        %v4681 = vunpack.c.0.s8 %v4680
        %v4682 = vlaneseq
        %v4683 = vshrl.u32 %v4682, 7
        %v4684 = vsub.s32 %v4681, %v4683
        %v4685 = vrot.slane %v4677, %v4684
        %v4687 = vunpack.c.l.s4 1966171168
        %v4688 = vunpack.c.0.s8 %v4687
        %v4689 = vlaneseq
        %v4690 = vshrl.u32 %v4689, 7
        %v4691 = vsub.s32 %v4688, %v4690
        %v4692 = vrot.slane %v4678, %v4691
        %v4693 = vcombine.low %v4685, %v4692
        %v4698 = vcombine.low %v2771, %v2828
        %v4699 = vcombine.low %v2879, %v2911
        %v4700 = vcombine.low %v2974, %v3025
        %v4701 = vcombine.low %v3076, %v3149
        %v4703 = vunpack.c.l.s4 1966171168
        %v4704 = vunpack.c.0.s8 %v4703
        %v4705 = vlaneseq
        %v4706 = vshrl.u32 %v4705, 7
        %v4707 = vsub.s32 %v4704, %v4706
        %v4708 = vrot.slane %v4698, %v4707
        %v4710 = vunpack.c.l.s4 1966171168
        %v4711 = vunpack.c.0.s8 %v4710
        %v4712 = vlaneseq
        %v4713 = vshrl.u32 %v4712, 7
        %v4714 = vsub.s32 %v4711, %v4713
        %v4715 = vrot.slane %v4699, %v4714
        %v4717 = vunpack.c.l.s4 1966171168
        %v4718 = vunpack.c.0.s8 %v4717
        %v4719 = vlaneseq
        %v4720 = vshrl.u32 %v4719, 7
        %v4721 = vsub.s32 %v4718, %v4720
        %v4722 = vrot.slane %v4700, %v4721
        %v4724 = vunpack.c.l.s4 1966171168
        %v4725 = vunpack.c.0.s8 %v4724
        %v4726 = vlaneseq
        %v4727 = vshrl.u32 %v4726, 7
        %v4728 = vsub.s32 %v4725, %v4727
        %v4729 = vrot.slane %v4701, %v4728
        %v4730 = vcombine.low %v4708, %v4715
        %v4731 = vcombine.low %v4722, %v4729
        %v4733 = vunpack.c.l.s4 1966171168
        %v4734 = vunpack.c.0.s8 %v4733
        %v4735 = vlaneseq
        %v4736 = vshrl.u32 %v4735, 7
        %v4737 = vsub.s32 %v4734, %v4736
        %v4738 = vrot.slane %v4730, %v4737
        %v4740 = vunpack.c.l.s4 1966171168
        %v4741 = vunpack.c.0.s8 %v4740
        %v4742 = vlaneseq
        %v4743 = vshrl.u32 %v4742, 7
        %v4744 = vsub.s32 %v4741, %v4743
        %v4745 = vrot.slane %v4731, %v4744
        %v4746 = vcombine.low %v4738, %v4745
        %v4747 = vcombine.low %v3212, %v3269
        %v4748 = vcombine.low %v3320, %v3352
        %v4749 = vcombine.low %v3415, %v3466
        %v4750 = vcombine.low %v3517, %v3590
        %v4752 = vunpack.c.l.s4 1966171168
        %v4753 = vunpack.c.0.s8 %v4752
        %v4754 = vlaneseq
        %v4755 = vshrl.u32 %v4754, 7
        %v4756 = vsub.s32 %v4753, %v4755
        %v4757 = vrot.slane %v4747, %v4756
        %v4759 = vunpack.c.l.s4 1966171168
        %v4760 = vunpack.c.0.s8 %v4759
        %v4761 = vlaneseq
        %v4762 = vshrl.u32 %v4761, 7
        %v4763 = vsub.s32 %v4760, %v4762
        %v4764 = vrot.slane %v4748, %v4763
        %v4766 = vunpack.c.l.s4 1966171168
        %v4767 = vunpack.c.0.s8 %v4766
        %v4768 = vlaneseq
        %v4769 = vshrl.u32 %v4768, 7
        %v4770 = vsub.s32 %v4767, %v4769
        %v4771 = vrot.slane %v4749, %v4770
        %v4773 = vunpack.c.l.s4 1966171168
        %v4774 = vunpack.c.0.s8 %v4773
        %v4775 = vlaneseq
        %v4776 = vshrl.u32 %v4775, 7
        %v4777 = vsub.s32 %v4774, %v4776
        %v4778 = vrot.slane %v4750, %v4777
        %v4779 = vcombine.low %v4757, %v4764
        %v4780 = vcombine.low %v4771, %v4778
        %v4782 = vunpack.c.l.s4 1966171168
        %v4783 = vunpack.c.0.s8 %v4782
        %v4784 = vlaneseq
        %v4785 = vshrl.u32 %v4784, 7
        %v4786 = vsub.s32 %v4783, %v4785
        %v4787 = vrot.slane %v4779, %v4786
        %v4789 = vunpack.c.l.s4 1966171168
        %v4790 = vunpack.c.0.s8 %v4789
        %v4791 = vlaneseq
        %v4792 = vshrl.u32 %v4791, 7
        %v4793 = vsub.s32 %v4790, %v4792
        %v4794 = vrot.slane %v4780, %v4793
        %v4795 = vcombine.low %v4787, %v4794
        %v4796 = vcombine.low %v3653, %v3710
        %v4797 = vcombine.low %v3761, %v3793
        %v4798 = vcombine.low %v3856, %v3907
        %v4799 = vcombine.low %v3958, %v4031
        %v4801 = vunpack.c.l.s4 1966171168
        %v4802 = vunpack.c.0.s8 %v4801
        %v4803 = vlaneseq
        %v4804 = vshrl.u32 %v4803, 7
        %v4805 = vsub.s32 %v4802, %v4804
        %v4806 = vrot.slane %v4796, %v4805
        %v4808 = vunpack.c.l.s4 1966171168
        %v4809 = vunpack.c.0.s8 %v4808
        %v4810 = vlaneseq
        %v4811 = vshrl.u32 %v4810, 7
        %v4812 = vsub.s32 %v4809, %v4811
        %v4813 = vrot.slane %v4797, %v4812
        %v4815 = vunpack.c.l.s4 1966171168
        %v4816 = vunpack.c.0.s8 %v4815
        %v4817 = vlaneseq
        %v4818 = vshrl.u32 %v4817, 7
        %v4819 = vsub.s32 %v4816, %v4818
        %v4820 = vrot.slane %v4798, %v4819
        %v4822 = vunpack.c.l.s4 1966171168
        %v4823 = vunpack.c.0.s8 %v4822
        %v4824 = vlaneseq
        %v4825 = vshrl.u32 %v4824, 7
        %v4826 = vsub.s32 %v4823, %v4825
        %v4827 = vrot.slane %v4799, %v4826
        %v4828 = vcombine.low %v4806, %v4813
        %v4829 = vcombine.low %v4820, %v4827
        %v4831 = vunpack.c.l.s4 1966171168
        %v4832 = vunpack.c.0.s8 %v4831
        %v4833 = vlaneseq
        %v4834 = vshrl.u32 %v4833, 7
        %v4835 = vsub.s32 %v4832, %v4834
        %v4836 = vrot.slane %v4828, %v4835
        %v4838 = vunpack.c.l.s4 1966171168
        %v4839 = vunpack.c.0.s8 %v4838
        %v4840 = vlaneseq
        %v4841 = vshrl.u32 %v4840, 7
        %v4842 = vsub.s32 %v4839, %v4841
        %v4843 = vrot.slane %v4829, %v4842
        %v4844 = vcombine.low %v4836, %v4843
        %v4845 = vcombine.low %v4094, %v4151
        %v4846 = vcombine.low %v4202, %v4234
        %v4847 = vcombine.low %v4297, %v4348
        %v4848 = vcombine.low %v4399, %v4472
        %v4850 = vunpack.c.l.s4 1966171168
        %v4851 = vunpack.c.0.s8 %v4850
        %v4852 = vlaneseq
        %v4853 = vshrl.u32 %v4852, 7
        %v4854 = vsub.s32 %v4851, %v4853
        %v4855 = vrot.slane %v4845, %v4854
        %v4857 = vunpack.c.l.s4 1966171168
        %v4858 = vunpack.c.0.s8 %v4857
        %v4859 = vlaneseq
        %v4860 = vshrl.u32 %v4859, 7
        %v4861 = vsub.s32 %v4858, %v4860
        %v4862 = vrot.slane %v4846, %v4861
        %v4864 = vunpack.c.l.s4 1966171168
        %v4865 = vunpack.c.0.s8 %v4864
        %v4866 = vlaneseq
        %v4867 = vshrl.u32 %v4866, 7
        %v4868 = vsub.s32 %v4865, %v4867
        %v4869 = vrot.slane %v4847, %v4868
        %v4871 = vunpack.c.l.s4 1966171168
        %v4872 = vunpack.c.0.s8 %v4871
        %v4873 = vlaneseq
        %v4874 = vshrl.u32 %v4873, 7
        %v4875 = vsub.s32 %v4872, %v4874
        %v4876 = vrot.slane %v4848, %v4875
        %v4877 = vcombine.low %v4855, %v4862
        %v4878 = vcombine.low %v4869, %v4876
        %v4880 = vunpack.c.l.s4 1966171168
        %v4881 = vunpack.c.0.s8 %v4880
        %v4882 = vlaneseq
        %v4883 = vshrl.u32 %v4882, 7
        %v4884 = vsub.s32 %v4881, %v4883
        %v4885 = vrot.slane %v4877, %v4884
        %v4887 = vunpack.c.l.s4 1966171168
        %v4888 = vunpack.c.0.s8 %v4887
        %v4889 = vlaneseq
        %v4890 = vshrl.u32 %v4889, 7
        %v4891 = vsub.s32 %v4888, %v4890
        %v4892 = vrot.slane %v4878, %v4891
        %v4893 = vcombine.low %v4885, %v4892
        %4894 = vrot.lane.b32.xlu0 %v4746, 16
        %v4895 = vpop.permute.xlu0 %4894
        %4896 = vrot.lane.b32.xlu0 %v4795, 16
        %v4897 = vpop.permute.xlu0 %4896
        %4898 = vrot.lane.b32.xlu0 %v4844, 16
        %v4899 = vpop.permute.xlu0 %4898
        %4900 = vrot.lane.b32.xlu0 %v4893, 16
        %v4901 = vpop.permute.xlu0 %4900
        %v4906 = vcombine.low %v2779, %v2830
        %v4907 = vcombine.low %v2862, %v2925
        %v4908 = vcombine.low %v2976, %v3027
        %v4909 = vcombine.low %v3100, %v3163
        %v4911 = vunpack.c.l.s4 1966171168
        %v4912 = vunpack.c.0.s8 %v4911
        %v4913 = vlaneseq
        %v4914 = vshrl.u32 %v4913, 7
        %v4915 = vsub.s32 %v4912, %v4914
        %v4916 = vrot.slane %v4906, %v4915
        %v4918 = vunpack.c.l.s4 1966171168
        %v4919 = vunpack.c.0.s8 %v4918
        %v4920 = vlaneseq
        %v4921 = vshrl.u32 %v4920, 7
        %v4922 = vsub.s32 %v4919, %v4921
        %v4923 = vrot.slane %v4907, %v4922
        %v4925 = vunpack.c.l.s4 1966171168
        %v4926 = vunpack.c.0.s8 %v4925
        %v4927 = vlaneseq
        %v4928 = vshrl.u32 %v4927, 7
        %v4929 = vsub.s32 %v4926, %v4928
        %v4930 = vrot.slane %v4908, %v4929
        %v4932 = vunpack.c.l.s4 1966171168
        %v4933 = vunpack.c.0.s8 %v4932
        %v4934 = vlaneseq
        %v4935 = vshrl.u32 %v4934, 7
        %v4936 = vsub.s32 %v4933, %v4935
        %v4937 = vrot.slane %v4909, %v4936
        %v4938 = vcombine.low %v4916, %v4923
        %v4939 = vcombine.low %v4930, %v4937
        %v4941 = vunpack.c.l.s4 1966171168
        %v4942 = vunpack.c.0.s8 %v4941
        %v4943 = vlaneseq
        %v4944 = vshrl.u32 %v4943, 7
        %v4945 = vsub.s32 %v4942, %v4944
        %v4946 = vrot.slane %v4938, %v4945
        %v4948 = vunpack.c.l.s4 1966171168
        %v4949 = vunpack.c.0.s8 %v4948
        %v4950 = vlaneseq
        %v4951 = vshrl.u32 %v4950, 7
        %v4952 = vsub.s32 %v4949, %v4951
        %v4953 = vrot.slane %v4939, %v4952
        %v4954 = vcombine.low %v4946, %v4953
        %v4955 = vcombine.low %v3220, %v3271
        %v4956 = vcombine.low %v3303, %v3366
        %v4957 = vcombine.low %v3417, %v3468
        %v4958 = vcombine.low %v3541, %v3604
        %v4960 = vunpack.c.l.s4 1966171168
        %v4961 = vunpack.c.0.s8 %v4960
        %v4962 = vlaneseq
        %v4963 = vshrl.u32 %v4962, 7
        %v4964 = vsub.s32 %v4961, %v4963
        %v4965 = vrot.slane %v4955, %v4964
        %v4967 = vunpack.c.l.s4 1966171168
        %v4968 = vunpack.c.0.s8 %v4967
        %v4969 = vlaneseq
        %v4970 = vshrl.u32 %v4969, 7
        %v4971 = vsub.s32 %v4968, %v4970
        %v4972 = vrot.slane %v4956, %v4971
        %v4974 = vunpack.c.l.s4 1966171168
        %v4975 = vunpack.c.0.s8 %v4974
        %v4976 = vlaneseq
        %v4977 = vshrl.u32 %v4976, 7
        %v4978 = vsub.s32 %v4975, %v4977
        %v4979 = vrot.slane %v4957, %v4978
        %v4981 = vunpack.c.l.s4 1966171168
        %v4982 = vunpack.c.0.s8 %v4981
        %v4983 = vlaneseq
        %v4984 = vshrl.u32 %v4983, 7
        %v4985 = vsub.s32 %v4982, %v4984
        %v4986 = vrot.slane %v4958, %v4985
        %v4987 = vcombine.low %v4965, %v4972
        %v4988 = vcombine.low %v4979, %v4986
        %v4990 = vunpack.c.l.s4 1966171168
        %v4991 = vunpack.c.0.s8 %v4990
        %v4992 = vlaneseq
        %v4993 = vshrl.u32 %v4992, 7
        %v4994 = vsub.s32 %v4991, %v4993
        %v4995 = vrot.slane %v4987, %v4994
        %v4997 = vunpack.c.l.s4 1966171168
        %v4998 = vunpack.c.0.s8 %v4997
        %v4999 = vlaneseq
        %v5000 = vshrl.u32 %v4999, 7
        %v5001 = vsub.s32 %v4998, %v5000
        %v5002 = vrot.slane %v4988, %v5001
        %v5003 = vcombine.low %v4995, %v5002
        %v5004 = vcombine.low %v3661, %v3712
        %v5005 = vcombine.low %v3744, %v3807
        %v5006 = vcombine.low %v3858, %v3909
        %v5007 = vcombine.low %v3982, %v4045
        %v5009 = vunpack.c.l.s4 1966171168
        %v5010 = vunpack.c.0.s8 %v5009
        %v5011 = vlaneseq
        %v5012 = vshrl.u32 %v5011, 7
        %v5013 = vsub.s32 %v5010, %v5012
        %v5014 = vrot.slane %v5004, %v5013
        %v5016 = vunpack.c.l.s4 1966171168
        %v5017 = vunpack.c.0.s8 %v5016
        %v5018 = vlaneseq
        %v5019 = vshrl.u32 %v5018, 7
        %v5020 = vsub.s32 %v5017, %v5019
        %v5021 = vrot.slane %v5005, %v5020
        %v5023 = vunpack.c.l.s4 1966171168
        %v5024 = vunpack.c.0.s8 %v5023
        %v5025 = vlaneseq
        %v5026 = vshrl.u32 %v5025, 7
        %v5027 = vsub.s32 %v5024, %v5026
        %v5028 = vrot.slane %v5006, %v5027
        %v5030 = vunpack.c.l.s4 1966171168
        %v5031 = vunpack.c.0.s8 %v5030
        %v5032 = vlaneseq
        %v5033 = vshrl.u32 %v5032, 7
        %v5034 = vsub.s32 %v5031, %v5033
        %v5035 = vrot.slane %v5007, %v5034
        %v5036 = vcombine.low %v5014, %v5021
        %v5037 = vcombine.low %v5028, %v5035
        %v5039 = vunpack.c.l.s4 1966171168
        %v5040 = vunpack.c.0.s8 %v5039
        %v5041 = vlaneseq
        %v5042 = vshrl.u32 %v5041, 7
        %v5043 = vsub.s32 %v5040, %v5042
        %v5044 = vrot.slane %v5036, %v5043
        %v5046 = vunpack.c.l.s4 1966171168
        %v5047 = vunpack.c.0.s8 %v5046
        %v5048 = vlaneseq
        %v5049 = vshrl.u32 %v5048, 7
        %v5050 = vsub.s32 %v5047, %v5049
        %v5051 = vrot.slane %v5037, %v5050
        %v5052 = vcombine.low %v5044, %v5051
        %v5053 = vcombine.low %v4102, %v4153
        %v5054 = vcombine.low %v4185, %v4248
        %v5055 = vcombine.low %v4299, %v4350
        %v5056 = vcombine.low %v4423, %v4486
        %v5058 = vunpack.c.l.s4 1966171168
        %v5059 = vunpack.c.0.s8 %v5058
        %v5060 = vlaneseq
        %v5061 = vshrl.u32 %v5060, 7
        %v5062 = vsub.s32 %v5059, %v5061
        %v5063 = vrot.slane %v5053, %v5062
        %v5065 = vunpack.c.l.s4 1966171168
        %v5066 = vunpack.c.0.s8 %v5065
        %v5067 = vlaneseq
        %v5068 = vshrl.u32 %v5067, 7
        %v5069 = vsub.s32 %v5066, %v5068
        %v5070 = vrot.slane %v5054, %v5069
        %v5072 = vunpack.c.l.s4 1966171168
        %v5073 = vunpack.c.0.s8 %v5072
        %v5074 = vlaneseq
        %v5075 = vshrl.u32 %v5074, 7
        %v5076 = vsub.s32 %v5073, %v5075
        %v5077 = vrot.slane %v5055, %v5076
        %v5079 = vunpack.c.l.s4 1966171168
        %v5080 = vunpack.c.0.s8 %v5079
        %v5081 = vlaneseq
        %v5082 = vshrl.u32 %v5081, 7
        %v5083 = vsub.s32 %v5080, %v5082
        %v5084 = vrot.slane %v5056, %v5083
        %v5085 = vcombine.low %v5063, %v5070
        %v5086 = vcombine.low %v5077, %v5084
        %v5088 = vunpack.c.l.s4 1966171168
        %v5089 = vunpack.c.0.s8 %v5088
        %v5090 = vlaneseq
        %v5091 = vshrl.u32 %v5090, 7
        %v5092 = vsub.s32 %v5089, %v5091
        %v5093 = vrot.slane %v5085, %v5092
        %v5095 = vunpack.c.l.s4 1966171168
        %v5096 = vunpack.c.0.s8 %v5095
        %v5097 = vlaneseq
        %v5098 = vshrl.u32 %v5097, 7
        %v5099 = vsub.s32 %v5096, %v5098
        %v5100 = vrot.slane %v5086, %v5099
        %v5101 = vcombine.low %v5093, %v5100
        %5102 = vrot.lane.b32.xlu0 %v4954, 32
        %v5103 = vpop.permute.xlu0 %5102
        %5104 = vrot.lane.b32.xlu0 %v5003, 32
        %v5105 = vpop.permute.xlu0 %5104
        %5106 = vrot.lane.b32.xlu0 %v5052, 32
        %v5107 = vpop.permute.xlu0 %5106
        %5108 = vrot.lane.b32.xlu0 %v5101, 32
        %v5109 = vpop.permute.xlu0 %5108
        %v5114 = vcombine.low %v2781, %v2813
        %v5115 = vcombine.low %v2876, %v2927
        %v5116 = vcombine.low %v2978, %v3051
        %v5117 = vcombine.low %v3114, %v3171
        %v5119 = vunpack.c.l.s4 1966171168
        %v5120 = vunpack.c.0.s8 %v5119
        %v5121 = vlaneseq
        %v5122 = vshrl.u32 %v5121, 7
        %v5123 = vsub.s32 %v5120, %v5122
        %v5124 = vrot.slane %v5114, %v5123
        %v5126 = vunpack.c.l.s4 1966171168
        %v5127 = vunpack.c.0.s8 %v5126
        %v5128 = vlaneseq
        %v5129 = vshrl.u32 %v5128, 7
        %v5130 = vsub.s32 %v5127, %v5129
        %v5131 = vrot.slane %v5115, %v5130
        %v5133 = vunpack.c.l.s4 1966171168
        %v5134 = vunpack.c.0.s8 %v5133
        %v5135 = vlaneseq
        %v5136 = vshrl.u32 %v5135, 7
        %v5137 = vsub.s32 %v5134, %v5136
        %v5138 = vrot.slane %v5116, %v5137
        %v5140 = vunpack.c.l.s4 1966171168
        %v5141 = vunpack.c.0.s8 %v5140
        %v5142 = vlaneseq
        %v5143 = vshrl.u32 %v5142, 7
        %v5144 = vsub.s32 %v5141, %v5143
        %v5145 = vrot.slane %v5117, %v5144
        %v5146 = vcombine.low %v5124, %v5131
        %v5147 = vcombine.low %v5138, %v5145
        %v5149 = vunpack.c.l.s4 1966171168
        %v5150 = vunpack.c.0.s8 %v5149
        %v5151 = vlaneseq
        %v5152 = vshrl.u32 %v5151, 7
        %v5153 = vsub.s32 %v5150, %v5152
        %v5154 = vrot.slane %v5146, %v5153
        %v5156 = vunpack.c.l.s4 1966171168
        %v5157 = vunpack.c.0.s8 %v5156
        %v5158 = vlaneseq
        %v5159 = vshrl.u32 %v5158, 7
        %v5160 = vsub.s32 %v5157, %v5159
        %v5161 = vrot.slane %v5147, %v5160
        %v5162 = vcombine.low %v5154, %v5161
        %v5163 = vcombine.low %v3222, %v3254
        %v5164 = vcombine.low %v3317, %v3368
        %v5165 = vcombine.low %v3419, %v3492
        %v5166 = vcombine.low %v3555, %v3612
        %v5168 = vunpack.c.l.s4 1966171168
        %v5169 = vunpack.c.0.s8 %v5168
        %v5170 = vlaneseq
        %v5171 = vshrl.u32 %v5170, 7
        %v5172 = vsub.s32 %v5169, %v5171
        %v5173 = vrot.slane %v5163, %v5172
        %v5175 = vunpack.c.l.s4 1966171168
        %v5176 = vunpack.c.0.s8 %v5175
        %v5177 = vlaneseq
        %v5178 = vshrl.u32 %v5177, 7
        %v5179 = vsub.s32 %v5176, %v5178
        %v5180 = vrot.slane %v5164, %v5179
        %v5182 = vunpack.c.l.s4 1966171168
        %v5183 = vunpack.c.0.s8 %v5182
        %v5184 = vlaneseq
        %v5185 = vshrl.u32 %v5184, 7
        %v5186 = vsub.s32 %v5183, %v5185
        %v5187 = vrot.slane %v5165, %v5186
        %v5189 = vunpack.c.l.s4 1966171168
        %v5190 = vunpack.c.0.s8 %v5189
        %v5191 = vlaneseq
        %v5192 = vshrl.u32 %v5191, 7
        %v5193 = vsub.s32 %v5190, %v5192
        %v5194 = vrot.slane %v5166, %v5193
        %v5195 = vcombine.low %v5173, %v5180
        %v5196 = vcombine.low %v5187, %v5194
        %v5198 = vunpack.c.l.s4 1966171168
        %v5199 = vunpack.c.0.s8 %v5198
        %v5200 = vlaneseq
        %v5201 = vshrl.u32 %v5200, 7
        %v5202 = vsub.s32 %v5199, %v5201
        %v5203 = vrot.slane %v5195, %v5202
        %v5205 = vunpack.c.l.s4 1966171168
        %v5206 = vunpack.c.0.s8 %v5205
        %v5207 = vlaneseq
        %v5208 = vshrl.u32 %v5207, 7
        %v5209 = vsub.s32 %v5206, %v5208
        %v5210 = vrot.slane %v5196, %v5209
        %v5211 = vcombine.low %v5203, %v5210
        %v5212 = vcombine.low %v3663, %v3695
        %v5213 = vcombine.low %v3758, %v3809
        %v5214 = vcombine.low %v3860, %v3933
        %v5215 = vcombine.low %v3996, %v4053
        %v5217 = vunpack.c.l.s4 1966171168
        %v5218 = vunpack.c.0.s8 %v5217
        %v5219 = vlaneseq
        %v5220 = vshrl.u32 %v5219, 7
        %v5221 = vsub.s32 %v5218, %v5220
        %v5222 = vrot.slane %v5212, %v5221
        %v5224 = vunpack.c.l.s4 1966171168
        %v5225 = vunpack.c.0.s8 %v5224
        %v5226 = vlaneseq
        %v5227 = vshrl.u32 %v5226, 7
        %v5228 = vsub.s32 %v5225, %v5227
        %v5229 = vrot.slane %v5213, %v5228
        %v5231 = vunpack.c.l.s4 1966171168
        %v5232 = vunpack.c.0.s8 %v5231
        %v5233 = vlaneseq
        %v5234 = vshrl.u32 %v5233, 7
        %v5235 = vsub.s32 %v5232, %v5234
        %v5236 = vrot.slane %v5214, %v5235
        %v5238 = vunpack.c.l.s4 1966171168
        %v5239 = vunpack.c.0.s8 %v5238
        %v5240 = vlaneseq
        %v5241 = vshrl.u32 %v5240, 7
        %v5242 = vsub.s32 %v5239, %v5241
        %v5243 = vrot.slane %v5215, %v5242
        %v5244 = vcombine.low %v5222, %v5229
        %v5245 = vcombine.low %v5236, %v5243
        %v5247 = vunpack.c.l.s4 1966171168
        %v5248 = vunpack.c.0.s8 %v5247
        %v5249 = vlaneseq
        %v5250 = vshrl.u32 %v5249, 7
        %v5251 = vsub.s32 %v5248, %v5250
        %v5252 = vrot.slane %v5244, %v5251
        %v5254 = vunpack.c.l.s4 1966171168
        %v5255 = vunpack.c.0.s8 %v5254
        %v5256 = vlaneseq
        %v5257 = vshrl.u32 %v5256, 7
        %v5258 = vsub.s32 %v5255, %v5257
        %v5259 = vrot.slane %v5245, %v5258
        %v5260 = vcombine.low %v5252, %v5259
        %v5261 = vcombine.low %v4104, %v4136
        %v5262 = vcombine.low %v4199, %v4250
        %v5263 = vcombine.low %v4301, %v4374
        %v5264 = vcombine.low %v4437, %v4494
        %v5266 = vunpack.c.l.s4 1966171168
        %v5267 = vunpack.c.0.s8 %v5266
        %v5268 = vlaneseq
        %v5269 = vshrl.u32 %v5268, 7
        %v5270 = vsub.s32 %v5267, %v5269
        %v5271 = vrot.slane %v5261, %v5270
        %v5273 = vunpack.c.l.s4 1966171168
        %v5274 = vunpack.c.0.s8 %v5273
        %v5275 = vlaneseq
        %v5276 = vshrl.u32 %v5275, 7
        %v5277 = vsub.s32 %v5274, %v5276
        %v5278 = vrot.slane %v5262, %v5277
        %v5280 = vunpack.c.l.s4 1966171168
        %v5281 = vunpack.c.0.s8 %v5280
        %v5282 = vlaneseq
        %v5283 = vshrl.u32 %v5282, 7
        %v5284 = vsub.s32 %v5281, %v5283
        %v5285 = vrot.slane %v5263, %v5284
        %v5287 = vunpack.c.l.s4 1966171168
        %v5288 = vunpack.c.0.s8 %v5287
        %v5289 = vlaneseq
        %v5290 = vshrl.u32 %v5289, 7
        %v5291 = vsub.s32 %v5288, %v5290
        %v5292 = vrot.slane %v5264, %v5291
        %v5293 = vcombine.low %v5271, %v5278
        %v5294 = vcombine.low %v5285, %v5292
        %v5296 = vunpack.c.l.s4 1966171168
        %v5297 = vunpack.c.0.s8 %v5296
        %v5298 = vlaneseq
        %v5299 = vshrl.u32 %v5298, 7
        %v5300 = vsub.s32 %v5297, %v5299
        %v5301 = vrot.slane %v5293, %v5300
        %v5303 = vunpack.c.l.s4 1966171168
        %v5304 = vunpack.c.0.s8 %v5303
        %v5305 = vlaneseq
        %v5306 = vshrl.u32 %v5305, 7
        %v5307 = vsub.s32 %v5304, %v5306
        %v5308 = vrot.slane %v5294, %v5307
        %v5309 = vcombine.low %v5301, %v5308
        %5310 = vrot.lane.b32.xlu0 %v5162, 48
        %v5311 = vpop.permute.xlu0 %5310
        %5312 = vrot.lane.b32.xlu0 %v5211, 48
        %v5313 = vpop.permute.xlu0 %5312
        %5314 = vrot.lane.b32.xlu0 %v5260, 48
        %v5315 = vpop.permute.xlu0 %5314
        %5316 = vrot.lane.b32.xlu0 %v5309, 48
        %v5317 = vpop.permute.xlu0 %5316
        %v5322 = vcombine.low %v2764, %v2827
        %v5323 = vcombine.low %v2878, %v2929
        %v5324 = vcombine.low %v3002, %v3065
        %v5325 = vcombine.low %v3122, %v3173
        %v5327 = vunpack.c.l.s4 1966171168
        %v5328 = vunpack.c.0.s8 %v5327
        %v5329 = vlaneseq
        %v5330 = vshrl.u32 %v5329, 7
        %v5331 = vsub.s32 %v5328, %v5330
        %v5332 = vrot.slane %v5322, %v5331
        %v5334 = vunpack.c.l.s4 1966171168
        %v5335 = vunpack.c.0.s8 %v5334
        %v5336 = vlaneseq
        %v5337 = vshrl.u32 %v5336, 7
        %v5338 = vsub.s32 %v5335, %v5337
        %v5339 = vrot.slane %v5323, %v5338
        %v5341 = vunpack.c.l.s4 1966171168
        %v5342 = vunpack.c.0.s8 %v5341
        %v5343 = vlaneseq
        %v5344 = vshrl.u32 %v5343, 7
        %v5345 = vsub.s32 %v5342, %v5344
        %v5346 = vrot.slane %v5324, %v5345
        %v5348 = vunpack.c.l.s4 1966171168
        %v5349 = vunpack.c.0.s8 %v5348
        %v5350 = vlaneseq
        %v5351 = vshrl.u32 %v5350, 7
        %v5352 = vsub.s32 %v5349, %v5351
        %v5353 = vrot.slane %v5325, %v5352
        %v5354 = vcombine.low %v5332, %v5339
        %v5355 = vcombine.low %v5346, %v5353
        %v5357 = vunpack.c.l.s4 1966171168
        %v5358 = vunpack.c.0.s8 %v5357
        %v5359 = vlaneseq
        %v5360 = vshrl.u32 %v5359, 7
        %v5361 = vsub.s32 %v5358, %v5360
        %v5362 = vrot.slane %v5354, %v5361
        %v5364 = vunpack.c.l.s4 1966171168
        %v5365 = vunpack.c.0.s8 %v5364
        %v5366 = vlaneseq
        %v5367 = vshrl.u32 %v5366, 7
        %v5368 = vsub.s32 %v5365, %v5367
        %v5369 = vrot.slane %v5355, %v5368
        %v5370 = vcombine.low %v5362, %v5369
        %v5371 = vcombine.low %v3205, %v3268
        %v5372 = vcombine.low %v3319, %v3370
        %v5373 = vcombine.low %v3443, %v3506
        %v5374 = vcombine.low %v3563, %v3614
        %v5376 = vunpack.c.l.s4 1966171168
        %v5377 = vunpack.c.0.s8 %v5376
        %v5378 = vlaneseq
        %v5379 = vshrl.u32 %v5378, 7
        %v5380 = vsub.s32 %v5377, %v5379
        %v5381 = vrot.slane %v5371, %v5380
        %v5383 = vunpack.c.l.s4 1966171168
        %v5384 = vunpack.c.0.s8 %v5383
        %v5385 = vlaneseq
        %v5386 = vshrl.u32 %v5385, 7
        %v5387 = vsub.s32 %v5384, %v5386
        %v5388 = vrot.slane %v5372, %v5387
        %v5390 = vunpack.c.l.s4 1966171168
        %v5391 = vunpack.c.0.s8 %v5390
        %v5392 = vlaneseq
        %v5393 = vshrl.u32 %v5392, 7
        %v5394 = vsub.s32 %v5391, %v5393
        %v5395 = vrot.slane %v5373, %v5394
        %v5397 = vunpack.c.l.s4 1966171168
        %v5398 = vunpack.c.0.s8 %v5397
        %v5399 = vlaneseq
        %v5400 = vshrl.u32 %v5399, 7
        %v5401 = vsub.s32 %v5398, %v5400
        %v5402 = vrot.slane %v5374, %v5401
        %v5403 = vcombine.low %v5381, %v5388
        %v5404 = vcombine.low %v5395, %v5402
        %v5406 = vunpack.c.l.s4 1966171168
        %v5407 = vunpack.c.0.s8 %v5406
        %v5408 = vlaneseq
        %v5409 = vshrl.u32 %v5408, 7
        %v5410 = vsub.s32 %v5407, %v5409
        %v5411 = vrot.slane %v5403, %v5410
        %v5413 = vunpack.c.l.s4 1966171168
        %v5414 = vunpack.c.0.s8 %v5413
        %v5415 = vlaneseq
        %v5416 = vshrl.u32 %v5415, 7
        %v5417 = vsub.s32 %v5414, %v5416
        %v5418 = vrot.slane %v5404, %v5417
        %v5419 = vcombine.low %v5411, %v5418
        %v5420 = vcombine.low %v3646, %v3709
        %v5421 = vcombine.low %v3760, %v3811
        %v5422 = vcombine.low %v3884, %v3947
        %v5423 = vcombine.low %v4004, %v4055
        %v5425 = vunpack.c.l.s4 1966171168
        %v5426 = vunpack.c.0.s8 %v5425
        %v5427 = vlaneseq
        %v5428 = vshrl.u32 %v5427, 7
        %v5429 = vsub.s32 %v5426, %v5428
        %v5430 = vrot.slane %v5420, %v5429
        %v5432 = vunpack.c.l.s4 1966171168
        %v5433 = vunpack.c.0.s8 %v5432
        %v5434 = vlaneseq
        %v5435 = vshrl.u32 %v5434, 7
        %v5436 = vsub.s32 %v5433, %v5435
        %v5437 = vrot.slane %v5421, %v5436
        %v5439 = vunpack.c.l.s4 1966171168
        %v5440 = vunpack.c.0.s8 %v5439
        %v5441 = vlaneseq
        %v5442 = vshrl.u32 %v5441, 7
        %v5443 = vsub.s32 %v5440, %v5442
        %v5444 = vrot.slane %v5422, %v5443
        %v5446 = vunpack.c.l.s4 1966171168
        %v5447 = vunpack.c.0.s8 %v5446
        %v5448 = vlaneseq
        %v5449 = vshrl.u32 %v5448, 7
        %v5450 = vsub.s32 %v5447, %v5449
        %v5451 = vrot.slane %v5423, %v5450
        %v5452 = vcombine.low %v5430, %v5437
        %v5453 = vcombine.low %v5444, %v5451
        %v5455 = vunpack.c.l.s4 1966171168
        %v5456 = vunpack.c.0.s8 %v5455
        %v5457 = vlaneseq
        %v5458 = vshrl.u32 %v5457, 7
        %v5459 = vsub.s32 %v5456, %v5458
        %v5460 = vrot.slane %v5452, %v5459
        %v5462 = vunpack.c.l.s4 1966171168
        %v5463 = vunpack.c.0.s8 %v5462
        %v5464 = vlaneseq
        %v5465 = vshrl.u32 %v5464, 7
        %v5466 = vsub.s32 %v5463, %v5465
        %v5467 = vrot.slane %v5453, %v5466
        %v5468 = vcombine.low %v5460, %v5467
        %v5469 = vcombine.low %v4087, %v4150
        %v5470 = vcombine.low %v4201, %v4252
        %v5471 = vcombine.low %v4325, %v4388
        %v5472 = vcombine.low %v4445, %v4496
        %v5474 = vunpack.c.l.s4 1966171168
        %v5475 = vunpack.c.0.s8 %v5474
        %v5476 = vlaneseq
        %v5477 = vshrl.u32 %v5476, 7
        %v5478 = vsub.s32 %v5475, %v5477
        %v5479 = vrot.slane %v5469, %v5478
        %v5481 = vunpack.c.l.s4 1966171168
        %v5482 = vunpack.c.0.s8 %v5481
        %v5483 = vlaneseq
        %v5484 = vshrl.u32 %v5483, 7
        %v5485 = vsub.s32 %v5482, %v5484
        %v5486 = vrot.slane %v5470, %v5485
        %v5488 = vunpack.c.l.s4 1966171168
        %v5489 = vunpack.c.0.s8 %v5488
        %v5490 = vlaneseq
        %v5491 = vshrl.u32 %v5490, 7
        %v5492 = vsub.s32 %v5489, %v5491
        %v5493 = vrot.slane %v5471, %v5492
        %v5495 = vunpack.c.l.s4 1966171168
        %v5496 = vunpack.c.0.s8 %v5495
        %v5497 = vlaneseq
        %v5498 = vshrl.u32 %v5497, 7
        %v5499 = vsub.s32 %v5496, %v5498
        %v5500 = vrot.slane %v5472, %v5499
        %v5501 = vcombine.low %v5479, %v5486
        %v5502 = vcombine.low %v5493, %v5500
        %v5504 = vunpack.c.l.s4 1966171168
        %v5505 = vunpack.c.0.s8 %v5504
        %v5506 = vlaneseq
        %v5507 = vshrl.u32 %v5506, 7
        %v5508 = vsub.s32 %v5505, %v5507
        %v5509 = vrot.slane %v5501, %v5508
        %v5511 = vunpack.c.l.s4 1966171168
        %v5512 = vunpack.c.0.s8 %v5511
        %v5513 = vlaneseq
        %v5514 = vshrl.u32 %v5513, 7
        %v5515 = vsub.s32 %v5512, %v5514
        %v5516 = vrot.slane %v5502, %v5515
        %v5517 = vcombine.low %v5509, %v5516
        %5518 = vrot.lane.b32.xlu0 %v5370, 64
        %v5519 = vpop.permute.xlu0 %5518
        %5520 = vrot.lane.b32.xlu0 %v5419, 64
        %v5521 = vpop.permute.xlu0 %5520
        %5522 = vrot.lane.b32.xlu0 %v5468, 64
        %v5523 = vpop.permute.xlu0 %5522
        %5524 = vrot.lane.b32.xlu0 %v5517, 64
        %v5525 = vpop.permute.xlu0 %5524
        %v5530 = vcombine.low %v2778, %v2829
        %v5531 = vcombine.low %v2880, %v2953
        %v5532 = vcombine.low %v3016, %v3073
        %v5533 = vcombine.low %v3124, %v3156
        %v5535 = vunpack.c.l.s4 1966171168
        %v5536 = vunpack.c.0.s8 %v5535
        %v5537 = vlaneseq
        %v5538 = vshrl.u32 %v5537, 7
        %v5539 = vsub.s32 %v5536, %v5538
        %v5540 = vrot.slane %v5530, %v5539
        %v5542 = vunpack.c.l.s4 1966171168
        %v5543 = vunpack.c.0.s8 %v5542
        %v5544 = vlaneseq
        %v5545 = vshrl.u32 %v5544, 7
        %v5546 = vsub.s32 %v5543, %v5545
        %v5547 = vrot.slane %v5531, %v5546
        %v5549 = vunpack.c.l.s4 1966171168
        %v5550 = vunpack.c.0.s8 %v5549
        %v5551 = vlaneseq
        %v5552 = vshrl.u32 %v5551, 7
        %v5553 = vsub.s32 %v5550, %v5552
        %v5554 = vrot.slane %v5532, %v5553
        %v5556 = vunpack.c.l.s4 1966171168
        %v5557 = vunpack.c.0.s8 %v5556
        %v5558 = vlaneseq
        %v5559 = vshrl.u32 %v5558, 7
        %v5560 = vsub.s32 %v5557, %v5559
        %v5561 = vrot.slane %v5533, %v5560
        %v5562 = vcombine.low %v5540, %v5547
        %v5563 = vcombine.low %v5554, %v5561
        %v5565 = vunpack.c.l.s4 1966171168
        %v5566 = vunpack.c.0.s8 %v5565
        %v5567 = vlaneseq
        %v5568 = vshrl.u32 %v5567, 7
        %v5569 = vsub.s32 %v5566, %v5568
        %v5570 = vrot.slane %v5562, %v5569
        %v5572 = vunpack.c.l.s4 1966171168
        %v5573 = vunpack.c.0.s8 %v5572
        %v5574 = vlaneseq
        %v5575 = vshrl.u32 %v5574, 7
        %v5576 = vsub.s32 %v5573, %v5575
        %v5577 = vrot.slane %v5563, %v5576
        %v5578 = vcombine.low %v5570, %v5577
        %v5579 = vcombine.low %v3219, %v3270
        %v5580 = vcombine.low %v3321, %v3394
        %v5581 = vcombine.low %v3457, %v3514
        %v5582 = vcombine.low %v3565, %v3597
        %v5584 = vunpack.c.l.s4 1966171168
        %v5585 = vunpack.c.0.s8 %v5584
        %v5586 = vlaneseq
        %v5587 = vshrl.u32 %v5586, 7
        %v5588 = vsub.s32 %v5585, %v5587
        %v5589 = vrot.slane %v5579, %v5588
        %v5591 = vunpack.c.l.s4 1966171168
        %v5592 = vunpack.c.0.s8 %v5591
        %v5593 = vlaneseq
        %v5594 = vshrl.u32 %v5593, 7
        %v5595 = vsub.s32 %v5592, %v5594
        %v5596 = vrot.slane %v5580, %v5595
        %v5598 = vunpack.c.l.s4 1966171168
        %v5599 = vunpack.c.0.s8 %v5598
        %v5600 = vlaneseq
        %v5601 = vshrl.u32 %v5600, 7
        %v5602 = vsub.s32 %v5599, %v5601
        %v5603 = vrot.slane %v5581, %v5602
        %v5605 = vunpack.c.l.s4 1966171168
        %v5606 = vunpack.c.0.s8 %v5605
        %v5607 = vlaneseq
        %v5608 = vshrl.u32 %v5607, 7
        %v5609 = vsub.s32 %v5606, %v5608
        %v5610 = vrot.slane %v5582, %v5609
        %v5611 = vcombine.low %v5589, %v5596
        %v5612 = vcombine.low %v5603, %v5610
        %v5614 = vunpack.c.l.s4 1966171168
        %v5615 = vunpack.c.0.s8 %v5614
        %v5616 = vlaneseq
        %v5617 = vshrl.u32 %v5616, 7
        %v5618 = vsub.s32 %v5615, %v5617
        %v5619 = vrot.slane %v5611, %v5618
        %v5621 = vunpack.c.l.s4 1966171168
        %v5622 = vunpack.c.0.s8 %v5621
        %v5623 = vlaneseq
        %v5624 = vshrl.u32 %v5623, 7
        %v5625 = vsub.s32 %v5622, %v5624
        %v5626 = vrot.slane %v5612, %v5625
        %v5627 = vcombine.low %v5619, %v5626
        %v5628 = vcombine.low %v3660, %v3711
        %v5629 = vcombine.low %v3762, %v3835
        %v5630 = vcombine.low %v3898, %v3955
        %v5631 = vcombine.low %v4006, %v4038
        %v5633 = vunpack.c.l.s4 1966171168
        %v5634 = vunpack.c.0.s8 %v5633
        %v5635 = vlaneseq
        %v5636 = vshrl.u32 %v5635, 7
        %v5637 = vsub.s32 %v5634, %v5636
        %v5638 = vrot.slane %v5628, %v5637
        %v5640 = vunpack.c.l.s4 1966171168
        %v5641 = vunpack.c.0.s8 %v5640
        %v5642 = vlaneseq
        %v5643 = vshrl.u32 %v5642, 7
        %v5644 = vsub.s32 %v5641, %v5643
        %v5645 = vrot.slane %v5629, %v5644
        %v5647 = vunpack.c.l.s4 1966171168
        %v5648 = vunpack.c.0.s8 %v5647
        %v5649 = vlaneseq
        %v5650 = vshrl.u32 %v5649, 7
        %v5651 = vsub.s32 %v5648, %v5650
        %v5652 = vrot.slane %v5630, %v5651
        %v5654 = vunpack.c.l.s4 1966171168
        %v5655 = vunpack.c.0.s8 %v5654
        %v5656 = vlaneseq
        %v5657 = vshrl.u32 %v5656, 7
        %v5658 = vsub.s32 %v5655, %v5657
        %v5659 = vrot.slane %v5631, %v5658
        %v5660 = vcombine.low %v5638, %v5645
        %v5661 = vcombine.low %v5652, %v5659
        %v5663 = vunpack.c.l.s4 1966171168
        %v5664 = vunpack.c.0.s8 %v5663
        %v5665 = vlaneseq
        %v5666 = vshrl.u32 %v5665, 7
        %v5667 = vsub.s32 %v5664, %v5666
        %v5668 = vrot.slane %v5660, %v5667
        %v5670 = vunpack.c.l.s4 1966171168
        %v5671 = vunpack.c.0.s8 %v5670
        %v5672 = vlaneseq
        %v5673 = vshrl.u32 %v5672, 7
        %v5674 = vsub.s32 %v5671, %v5673
        %v5675 = vrot.slane %v5661, %v5674
        %v5676 = vcombine.low %v5668, %v5675
        %v5677 = vcombine.low %v4101, %v4152
        %v5678 = vcombine.low %v4203, %v4276
        %v5679 = vcombine.low %v4339, %v4396
        %v5680 = vcombine.low %v4447, %v4479
        %v5682 = vunpack.c.l.s4 1966171168
        %v5683 = vunpack.c.0.s8 %v5682
        %v5684 = vlaneseq
        %v5685 = vshrl.u32 %v5684, 7
        %v5686 = vsub.s32 %v5683, %v5685
        %v5687 = vrot.slane %v5677, %v5686
        %v5689 = vunpack.c.l.s4 1966171168
        %v5690 = vunpack.c.0.s8 %v5689
        %v5691 = vlaneseq
        %v5692 = vshrl.u32 %v5691, 7
        %v5693 = vsub.s32 %v5690, %v5692
        %v5694 = vrot.slane %v5678, %v5693
        %v5696 = vunpack.c.l.s4 1966171168
        %v5697 = vunpack.c.0.s8 %v5696
        %v5698 = vlaneseq
        %v5699 = vshrl.u32 %v5698, 7
        %v5700 = vsub.s32 %v5697, %v5699
        %v5701 = vrot.slane %v5679, %v5700
        %v5703 = vunpack.c.l.s4 1966171168
        %v5704 = vunpack.c.0.s8 %v5703
        %v5705 = vlaneseq
        %v5706 = vshrl.u32 %v5705, 7
        %v5707 = vsub.s32 %v5704, %v5706
        %v5708 = vrot.slane %v5680, %v5707
        %v5709 = vcombine.low %v5687, %v5694
        %v5710 = vcombine.low %v5701, %v5708
        %v5712 = vunpack.c.l.s4 1966171168
        %v5713 = vunpack.c.0.s8 %v5712
        %v5714 = vlaneseq
        %v5715 = vshrl.u32 %v5714, 7
        %v5716 = vsub.s32 %v5713, %v5715
        %v5717 = vrot.slane %v5709, %v5716
        %v5719 = vunpack.c.l.s4 1966171168
        %v5720 = vunpack.c.0.s8 %v5719
        %v5721 = vlaneseq
        %v5722 = vshrl.u32 %v5721, 7
        %v5723 = vsub.s32 %v5720, %v5722
        %v5724 = vrot.slane %v5710, %v5723
        %v5725 = vcombine.low %v5717, %v5724
        %5726 = vrot.lane.b32.xlu0 %v5578, 80
        %v5727 = vpop.permute.xlu0 %5726
        %5728 = vrot.lane.b32.xlu0 %v5627, 80
        %v5729 = vpop.permute.xlu0 %5728
        %5730 = vrot.lane.b32.xlu0 %v5676, 80
        %v5731 = vpop.permute.xlu0 %5730
        %5732 = vrot.lane.b32.xlu0 %v5725, 80
        %v5733 = vpop.permute.xlu0 %5732
        %v5738 = vcombine.low %v2780, %v2831
        %v5739 = vcombine.low %v2904, %v2967
        %v5740 = vcombine.low %v3024, %v3075
        %v5741 = vcombine.low %v3107, %v3170
        %v5743 = vunpack.c.l.s4 1966171168
        %v5744 = vunpack.c.0.s8 %v5743
        %v5745 = vlaneseq
        %v5746 = vshrl.u32 %v5745, 7
        %v5747 = vsub.s32 %v5744, %v5746
        %v5748 = vrot.slane %v5738, %v5747
        %v5750 = vunpack.c.l.s4 1966171168
        %v5751 = vunpack.c.0.s8 %v5750
        %v5752 = vlaneseq
        %v5753 = vshrl.u32 %v5752, 7
        %v5754 = vsub.s32 %v5751, %v5753
        %v5755 = vrot.slane %v5739, %v5754
        %v5757 = vunpack.c.l.s4 1966171168
        %v5758 = vunpack.c.0.s8 %v5757
        %v5759 = vlaneseq
        %v5760 = vshrl.u32 %v5759, 7
        %v5761 = vsub.s32 %v5758, %v5760
        %v5762 = vrot.slane %v5740, %v5761
        %v5764 = vunpack.c.l.s4 1966171168
        %v5765 = vunpack.c.0.s8 %v5764
        %v5766 = vlaneseq
        %v5767 = vshrl.u32 %v5766, 7
        %v5768 = vsub.s32 %v5765, %v5767
        %v5769 = vrot.slane %v5741, %v5768
        %v5770 = vcombine.low %v5748, %v5755
        %v5771 = vcombine.low %v5762, %v5769
        %v5773 = vunpack.c.l.s4 1966171168
        %v5774 = vunpack.c.0.s8 %v5773
        %v5775 = vlaneseq
        %v5776 = vshrl.u32 %v5775, 7
        %v5777 = vsub.s32 %v5774, %v5776
        %v5778 = vrot.slane %v5770, %v5777
        %v5780 = vunpack.c.l.s4 1966171168
        %v5781 = vunpack.c.0.s8 %v5780
        %v5782 = vlaneseq
        %v5783 = vshrl.u32 %v5782, 7
        %v5784 = vsub.s32 %v5781, %v5783
        %v5785 = vrot.slane %v5771, %v5784
        %v5786 = vcombine.low %v5778, %v5785
        %v5787 = vcombine.low %v3221, %v3272
        %v5788 = vcombine.low %v3345, %v3408
        %v5789 = vcombine.low %v3465, %v3516
        %v5790 = vcombine.low %v3548, %v3611
        %v5792 = vunpack.c.l.s4 1966171168
        %v5793 = vunpack.c.0.s8 %v5792
        %v5794 = vlaneseq
        %v5795 = vshrl.u32 %v5794, 7
        %v5796 = vsub.s32 %v5793, %v5795
        %v5797 = vrot.slane %v5787, %v5796
        %v5799 = vunpack.c.l.s4 1966171168
        %v5800 = vunpack.c.0.s8 %v5799
        %v5801 = vlaneseq
        %v5802 = vshrl.u32 %v5801, 7
        %v5803 = vsub.s32 %v5800, %v5802
        %v5804 = vrot.slane %v5788, %v5803
        %v5806 = vunpack.c.l.s4 1966171168
        %v5807 = vunpack.c.0.s8 %v5806
        %v5808 = vlaneseq
        %v5809 = vshrl.u32 %v5808, 7
        %v5810 = vsub.s32 %v5807, %v5809
        %v5811 = vrot.slane %v5789, %v5810
        %v5813 = vunpack.c.l.s4 1966171168
        %v5814 = vunpack.c.0.s8 %v5813
        %v5815 = vlaneseq
        %v5816 = vshrl.u32 %v5815, 7
        %v5817 = vsub.s32 %v5814, %v5816
        %v5818 = vrot.slane %v5790, %v5817
        %v5819 = vcombine.low %v5797, %v5804
        %v5820 = vcombine.low %v5811, %v5818
        %v5822 = vunpack.c.l.s4 1966171168
        %v5823 = vunpack.c.0.s8 %v5822
        %v5824 = vlaneseq
        %v5825 = vshrl.u32 %v5824, 7
        %v5826 = vsub.s32 %v5823, %v5825
        %v5827 = vrot.slane %v5819, %v5826
        %v5829 = vunpack.c.l.s4 1966171168
        %v5830 = vunpack.c.0.s8 %v5829
        %v5831 = vlaneseq
        %v5832 = vshrl.u32 %v5831, 7
        %v5833 = vsub.s32 %v5830, %v5832
        %v5834 = vrot.slane %v5820, %v5833
        %v5835 = vcombine.low %v5827, %v5834
        %v5836 = vcombine.low %v3662, %v3713
        %v5837 = vcombine.low %v3786, %v3849
        %v5838 = vcombine.low %v3906, %v3957
        %v5839 = vcombine.low %v3989, %v4052
        %v5841 = vunpack.c.l.s4 1966171168
        %v5842 = vunpack.c.0.s8 %v5841
        %v5843 = vlaneseq
        %v5844 = vshrl.u32 %v5843, 7
        %v5845 = vsub.s32 %v5842, %v5844
        %v5846 = vrot.slane %v5836, %v5845
        %v5848 = vunpack.c.l.s4 1966171168
        %v5849 = vunpack.c.0.s8 %v5848
        %v5850 = vlaneseq
        %v5851 = vshrl.u32 %v5850, 7
        %v5852 = vsub.s32 %v5849, %v5851
        %v5853 = vrot.slane %v5837, %v5852
        %v5855 = vunpack.c.l.s4 1966171168
        %v5856 = vunpack.c.0.s8 %v5855
        %v5857 = vlaneseq
        %v5858 = vshrl.u32 %v5857, 7
        %v5859 = vsub.s32 %v5856, %v5858
        %v5860 = vrot.slane %v5838, %v5859
        %v5862 = vunpack.c.l.s4 1966171168
        %v5863 = vunpack.c.0.s8 %v5862
        %v5864 = vlaneseq
        %v5865 = vshrl.u32 %v5864, 7
        %v5866 = vsub.s32 %v5863, %v5865
        %v5867 = vrot.slane %v5839, %v5866
        %v5868 = vcombine.low %v5846, %v5853
        %v5869 = vcombine.low %v5860, %v5867
        %v5871 = vunpack.c.l.s4 1966171168
        %v5872 = vunpack.c.0.s8 %v5871
        %v5873 = vlaneseq
        %v5874 = vshrl.u32 %v5873, 7
        %v5875 = vsub.s32 %v5872, %v5874
        %v5876 = vrot.slane %v5868, %v5875
        %v5878 = vunpack.c.l.s4 1966171168
        %v5879 = vunpack.c.0.s8 %v5878
        %v5880 = vlaneseq
        %v5881 = vshrl.u32 %v5880, 7
        %v5882 = vsub.s32 %v5879, %v5881
        %v5883 = vrot.slane %v5869, %v5882
        %v5884 = vcombine.low %v5876, %v5883
        %v5885 = vcombine.low %v4103, %v4154
        %v5886 = vcombine.low %v4227, %v4290
        %v5887 = vcombine.low %v4347, %v4398
        %v5888 = vcombine.low %v4430, %v4493
        %v5890 = vunpack.c.l.s4 1966171168
        %v5891 = vunpack.c.0.s8 %v5890
        %v5892 = vlaneseq
        %v5893 = vshrl.u32 %v5892, 7
        %v5894 = vsub.s32 %v5891, %v5893
        %v5895 = vrot.slane %v5885, %v5894
        %v5897 = vunpack.c.l.s4 1966171168
        %v5898 = vunpack.c.0.s8 %v5897
        %v5899 = vlaneseq
        %v5900 = vshrl.u32 %v5899, 7
        %v5901 = vsub.s32 %v5898, %v5900
        %v5902 = vrot.slane %v5886, %v5901
        %v5904 = vunpack.c.l.s4 1966171168
        %v5905 = vunpack.c.0.s8 %v5904
        %v5906 = vlaneseq
        %v5907 = vshrl.u32 %v5906, 7
        %v5908 = vsub.s32 %v5905, %v5907
        %v5909 = vrot.slane %v5887, %v5908
        %v5911 = vunpack.c.l.s4 1966171168
        %v5912 = vunpack.c.0.s8 %v5911
        %v5913 = vlaneseq
        %v5914 = vshrl.u32 %v5913, 7
        %v5915 = vsub.s32 %v5912, %v5914
        %v5916 = vrot.slane %v5888, %v5915
        %v5917 = vcombine.low %v5895, %v5902
        %v5918 = vcombine.low %v5909, %v5916
        %v5920 = vunpack.c.l.s4 1966171168
        %v5921 = vunpack.c.0.s8 %v5920
        %v5922 = vlaneseq
        %v5923 = vshrl.u32 %v5922, 7
        %v5924 = vsub.s32 %v5921, %v5923
        %v5925 = vrot.slane %v5917, %v5924
        %v5927 = vunpack.c.l.s4 1966171168
        %v5928 = vunpack.c.0.s8 %v5927
        %v5929 = vlaneseq
        %v5930 = vshrl.u32 %v5929, 7
        %v5931 = vsub.s32 %v5928, %v5930
        %v5932 = vrot.slane %v5918, %v5931
        %v5933 = vcombine.low %v5925, %v5932
        %5934 = vrot.lane.b32.xlu0 %v5786, 96
        %v5935 = vpop.permute.xlu0 %5934
        %5936 = vrot.lane.b32.xlu0 %v5835, 96
        %v5937 = vpop.permute.xlu0 %5936
        %5938 = vrot.lane.b32.xlu0 %v5884, 96
        %v5939 = vpop.permute.xlu0 %5938
        %5940 = vrot.lane.b32.xlu0 %v5933, 96
        %v5941 = vpop.permute.xlu0 %5940
        %v5946 = vcombine.low %v2782, %v2855
        %v5947 = vcombine.low %v2918, %v2975
        %v5948 = vcombine.low %v3026, %v3058
        %v5949 = vcombine.low %v3121, %v3172
        %v5951 = vunpack.c.l.s4 1966171168
        %v5952 = vunpack.c.0.s8 %v5951
        %v5953 = vlaneseq
        %v5954 = vshrl.u32 %v5953, 7
        %v5955 = vsub.s32 %v5952, %v5954
        %v5956 = vrot.slane %v5946, %v5955
        %v5958 = vunpack.c.l.s4 1966171168
        %v5959 = vunpack.c.0.s8 %v5958
        %v5960 = vlaneseq
        %v5961 = vshrl.u32 %v5960, 7
        %v5962 = vsub.s32 %v5959, %v5961
        %v5963 = vrot.slane %v5947, %v5962
        %v5965 = vunpack.c.l.s4 1966171168
        %v5966 = vunpack.c.0.s8 %v5965
        %v5967 = vlaneseq
        %v5968 = vshrl.u32 %v5967, 7
        %v5969 = vsub.s32 %v5966, %v5968
        %v5970 = vrot.slane %v5948, %v5969
        %v5972 = vunpack.c.l.s4 1966171168
        %v5973 = vunpack.c.0.s8 %v5972
        %v5974 = vlaneseq
        %v5975 = vshrl.u32 %v5974, 7
        %v5976 = vsub.s32 %v5973, %v5975
        %v5977 = vrot.slane %v5949, %v5976
        %v5978 = vcombine.low %v5956, %v5963
        %v5979 = vcombine.low %v5970, %v5977
        %v5981 = vunpack.c.l.s4 1966171168
        %v5982 = vunpack.c.0.s8 %v5981
        %v5983 = vlaneseq
        %v5984 = vshrl.u32 %v5983, 7
        %v5985 = vsub.s32 %v5982, %v5984
        %v5986 = vrot.slane %v5978, %v5985
        %v5988 = vunpack.c.l.s4 1966171168
        %v5989 = vunpack.c.0.s8 %v5988
        %v5990 = vlaneseq
        %v5991 = vshrl.u32 %v5990, 7
        %v5992 = vsub.s32 %v5989, %v5991
        %v5993 = vrot.slane %v5979, %v5992
        %v5994 = vcombine.low %v5986, %v5993
        %v5995 = vcombine.low %v3223, %v3296
        %v5996 = vcombine.low %v3359, %v3416
        %v5997 = vcombine.low %v3467, %v3499
        %v5998 = vcombine.low %v3562, %v3613
        %v6000 = vunpack.c.l.s4 1966171168
        %v6001 = vunpack.c.0.s8 %v6000
        %v6002 = vlaneseq
        %v6003 = vshrl.u32 %v6002, 7
        %v6004 = vsub.s32 %v6001, %v6003
        %v6005 = vrot.slane %v5995, %v6004
        %v6007 = vunpack.c.l.s4 1966171168
        %v6008 = vunpack.c.0.s8 %v6007
        %v6009 = vlaneseq
        %v6010 = vshrl.u32 %v6009, 7
        %v6011 = vsub.s32 %v6008, %v6010
        %v6012 = vrot.slane %v5996, %v6011
        %v6014 = vunpack.c.l.s4 1966171168
        %v6015 = vunpack.c.0.s8 %v6014
        %v6016 = vlaneseq
        %v6017 = vshrl.u32 %v6016, 7
        %v6018 = vsub.s32 %v6015, %v6017
        %v6019 = vrot.slane %v5997, %v6018
        %v6021 = vunpack.c.l.s4 1966171168
        %v6022 = vunpack.c.0.s8 %v6021
        %v6023 = vlaneseq
        %v6024 = vshrl.u32 %v6023, 7
        %v6025 = vsub.s32 %v6022, %v6024
        %v6026 = vrot.slane %v5998, %v6025
        %v6027 = vcombine.low %v6005, %v6012
        %v6028 = vcombine.low %v6019, %v6026
        %v6030 = vunpack.c.l.s4 1966171168
        %v6031 = vunpack.c.0.s8 %v6030
        %v6032 = vlaneseq
        %v6033 = vshrl.u32 %v6032, 7
        %v6034 = vsub.s32 %v6031, %v6033
        %v6035 = vrot.slane %v6027, %v6034
        %v6037 = vunpack.c.l.s4 1966171168
        %v6038 = vunpack.c.0.s8 %v6037
        %v6039 = vlaneseq
        %v6040 = vshrl.u32 %v6039, 7
        %v6041 = vsub.s32 %v6038, %v6040
        %v6042 = vrot.slane %v6028, %v6041
        %v6043 = vcombine.low %v6035, %v6042
        %v6044 = vcombine.low %v3664, %v3737
        %v6045 = vcombine.low %v3800, %v3857
        %v6046 = vcombine.low %v3908, %v3940
        %v6047 = vcombine.low %v4003, %v4054
        %v6049 = vunpack.c.l.s4 1966171168
        %v6050 = vunpack.c.0.s8 %v6049
        %v6051 = vlaneseq
        %v6052 = vshrl.u32 %v6051, 7
        %v6053 = vsub.s32 %v6050, %v6052
        %v6054 = vrot.slane %v6044, %v6053
        %v6056 = vunpack.c.l.s4 1966171168
        %v6057 = vunpack.c.0.s8 %v6056
        %v6058 = vlaneseq
        %v6059 = vshrl.u32 %v6058, 7
        %v6060 = vsub.s32 %v6057, %v6059
        %v6061 = vrot.slane %v6045, %v6060
        %v6063 = vunpack.c.l.s4 1966171168
        %v6064 = vunpack.c.0.s8 %v6063
        %v6065 = vlaneseq
        %v6066 = vshrl.u32 %v6065, 7
        %v6067 = vsub.s32 %v6064, %v6066
        %v6068 = vrot.slane %v6046, %v6067
        %v6070 = vunpack.c.l.s4 1966171168
        %v6071 = vunpack.c.0.s8 %v6070
        %v6072 = vlaneseq
        %v6073 = vshrl.u32 %v6072, 7
        %v6074 = vsub.s32 %v6071, %v6073
        %v6075 = vrot.slane %v6047, %v6074
        %v6076 = vcombine.low %v6054, %v6061
        %v6077 = vcombine.low %v6068, %v6075
        %v6079 = vunpack.c.l.s4 1966171168
        %v6080 = vunpack.c.0.s8 %v6079
        %v6081 = vlaneseq
        %v6082 = vshrl.u32 %v6081, 7
        %v6083 = vsub.s32 %v6080, %v6082
        %v6084 = vrot.slane %v6076, %v6083
        %v6086 = vunpack.c.l.s4 1966171168
        %v6087 = vunpack.c.0.s8 %v6086
        %v6088 = vlaneseq
        %v6089 = vshrl.u32 %v6088, 7
        %v6090 = vsub.s32 %v6087, %v6089
        %v6091 = vrot.slane %v6077, %v6090
        %v6092 = vcombine.low %v6084, %v6091
        %v6093 = vcombine.low %v4105, %v4178
        %v6094 = vcombine.low %v4241, %v4298
        %v6095 = vcombine.low %v4349, %v4381
        %v6096 = vcombine.low %v4444, %v4495
        %v6098 = vunpack.c.l.s4 1966171168
        %v6099 = vunpack.c.0.s8 %v6098
        %v6100 = vlaneseq
        %v6101 = vshrl.u32 %v6100, 7
        %v6102 = vsub.s32 %v6099, %v6101
        %v6103 = vrot.slane %v6093, %v6102
        %v6105 = vunpack.c.l.s4 1966171168
        %v6106 = vunpack.c.0.s8 %v6105
        %v6107 = vlaneseq
        %v6108 = vshrl.u32 %v6107, 7
        %v6109 = vsub.s32 %v6106, %v6108
        %v6110 = vrot.slane %v6094, %v6109
        %v6112 = vunpack.c.l.s4 1966171168
        %v6113 = vunpack.c.0.s8 %v6112
        %v6114 = vlaneseq
        %v6115 = vshrl.u32 %v6114, 7
        %v6116 = vsub.s32 %v6113, %v6115
        %v6117 = vrot.slane %v6095, %v6116
        %v6119 = vunpack.c.l.s4 1966171168
        %v6120 = vunpack.c.0.s8 %v6119
        %v6121 = vlaneseq
        %v6122 = vshrl.u32 %v6121, 7
        %v6123 = vsub.s32 %v6120, %v6122
        %v6124 = vrot.slane %v6096, %v6123
        %v6125 = vcombine.low %v6103, %v6110
        %v6126 = vcombine.low %v6117, %v6124
        %v6128 = vunpack.c.l.s4 1966171168
        %v6129 = vunpack.c.0.s8 %v6128
        %v6130 = vlaneseq
        %v6131 = vshrl.u32 %v6130, 7
        %v6132 = vsub.s32 %v6129, %v6131
        %v6133 = vrot.slane %v6125, %v6132
        %v6135 = vunpack.c.l.s4 1966171168
        %v6136 = vunpack.c.0.s8 %v6135
        %v6137 = vlaneseq
        %v6138 = vshrl.u32 %v6137, 7
        %v6139 = vsub.s32 %v6136, %v6138
        %v6140 = vrot.slane %v6126, %v6139
        %v6141 = vcombine.low %v6133, %v6140
        %6142 = vrot.lane.b32.xlu0 %v5994, 112
        %v6143 = vpop.permute.xlu0 %6142
        %6144 = vrot.lane.b32.xlu0 %v6043, 112
        %v6145 = vpop.permute.xlu0 %6144
        %6146 = vrot.lane.b32.xlu0 %v6092, 112
        %v6147 = vpop.permute.xlu0 %6146
        %6148 = vrot.lane.b32.xlu0 %v6141, 112
        %v6149 = vpop.permute.xlu0 %6148
        %v6154 = vcombine.low %v2806, %v2869
        %v6155 = vcombine.low %v2926, %v2977
        %v6156 = vcombine.low %v3009, %v3072
        %v6157 = vcombine.low %v3123, %v3174
        %v6159 = vunpack.c.l.s4 1966171168
        %v6160 = vunpack.c.0.s8 %v6159
        %v6161 = vlaneseq
        %v6162 = vshrl.u32 %v6161, 7
        %v6163 = vsub.s32 %v6160, %v6162
        %v6164 = vrot.slane %v6154, %v6163
        %v6166 = vunpack.c.l.s4 1966171168
        %v6167 = vunpack.c.0.s8 %v6166
        %v6168 = vlaneseq
        %v6169 = vshrl.u32 %v6168, 7
        %v6170 = vsub.s32 %v6167, %v6169
        %v6171 = vrot.slane %v6155, %v6170
        %v6173 = vunpack.c.l.s4 1966171168
        %v6174 = vunpack.c.0.s8 %v6173
        %v6175 = vlaneseq
        %v6176 = vshrl.u32 %v6175, 7
        %v6177 = vsub.s32 %v6174, %v6176
        %v6178 = vrot.slane %v6156, %v6177
        %v6180 = vunpack.c.l.s4 1966171168
        %v6181 = vunpack.c.0.s8 %v6180
        %v6182 = vlaneseq
        %v6183 = vshrl.u32 %v6182, 7
        %v6184 = vsub.s32 %v6181, %v6183
        %v6185 = vrot.slane %v6157, %v6184
        %v6186 = vcombine.low %v6164, %v6171
        %v6187 = vcombine.low %v6178, %v6185
        %v6189 = vunpack.c.l.s4 1966171168
        %v6190 = vunpack.c.0.s8 %v6189
        %v6191 = vlaneseq
        %v6192 = vshrl.u32 %v6191, 7
        %v6193 = vsub.s32 %v6190, %v6192
        %v6194 = vrot.slane %v6186, %v6193
        %v6196 = vunpack.c.l.s4 1966171168
        %v6197 = vunpack.c.0.s8 %v6196
        %v6198 = vlaneseq
        %v6199 = vshrl.u32 %v6198, 7
        %v6200 = vsub.s32 %v6197, %v6199
        %v6201 = vrot.slane %v6187, %v6200
        %v6202 = vcombine.low %v6194, %v6201
        %v6203 = vcombine.low %v3247, %v3310
        %v6204 = vcombine.low %v3367, %v3418
        %v6205 = vcombine.low %v3450, %v3513
        %v6206 = vcombine.low %v3564, %v3615
        %v6208 = vunpack.c.l.s4 1966171168
        %v6209 = vunpack.c.0.s8 %v6208
        %v6210 = vlaneseq
        %v6211 = vshrl.u32 %v6210, 7
        %v6212 = vsub.s32 %v6209, %v6211
        %v6213 = vrot.slane %v6203, %v6212
        %v6215 = vunpack.c.l.s4 1966171168
        %v6216 = vunpack.c.0.s8 %v6215
        %v6217 = vlaneseq
        %v6218 = vshrl.u32 %v6217, 7
        %v6219 = vsub.s32 %v6216, %v6218
        %v6220 = vrot.slane %v6204, %v6219
        %v6222 = vunpack.c.l.s4 1966171168
        %v6223 = vunpack.c.0.s8 %v6222
        %v6224 = vlaneseq
        %v6225 = vshrl.u32 %v6224, 7
        %v6226 = vsub.s32 %v6223, %v6225
        %v6227 = vrot.slane %v6205, %v6226
        %v6229 = vunpack.c.l.s4 1966171168
        %v6230 = vunpack.c.0.s8 %v6229
        %v6231 = vlaneseq
        %v6232 = vshrl.u32 %v6231, 7
        %v6233 = vsub.s32 %v6230, %v6232
        %v6234 = vrot.slane %v6206, %v6233
        %v6235 = vcombine.low %v6213, %v6220
        %v6236 = vcombine.low %v6227, %v6234
        %v6238 = vunpack.c.l.s4 1966171168
        %v6239 = vunpack.c.0.s8 %v6238
        %v6240 = vlaneseq
        %v6241 = vshrl.u32 %v6240, 7
        %v6242 = vsub.s32 %v6239, %v6241
        %v6243 = vrot.slane %v6235, %v6242
        %v6245 = vunpack.c.l.s4 1966171168
        %v6246 = vunpack.c.0.s8 %v6245
        %v6247 = vlaneseq
        %v6248 = vshrl.u32 %v6247, 7
        %v6249 = vsub.s32 %v6246, %v6248
        %v6250 = vrot.slane %v6236, %v6249
        %v6251 = vcombine.low %v6243, %v6250
        %v6252 = vcombine.low %v3688, %v3751
        %v6253 = vcombine.low %v3808, %v3859
        %v6254 = vcombine.low %v3891, %v3954
        %v6255 = vcombine.low %v4005, %v4056
        %v6257 = vunpack.c.l.s4 1966171168
        %v6258 = vunpack.c.0.s8 %v6257
        %v6259 = vlaneseq
        %v6260 = vshrl.u32 %v6259, 7
        %v6261 = vsub.s32 %v6258, %v6260
        %v6262 = vrot.slane %v6252, %v6261
        %v6264 = vunpack.c.l.s4 1966171168
        %v6265 = vunpack.c.0.s8 %v6264
        %v6266 = vlaneseq
        %v6267 = vshrl.u32 %v6266, 7
        %v6268 = vsub.s32 %v6265, %v6267
        %v6269 = vrot.slane %v6253, %v6268
        %v6271 = vunpack.c.l.s4 1966171168
        %v6272 = vunpack.c.0.s8 %v6271
        %v6273 = vlaneseq
        %v6274 = vshrl.u32 %v6273, 7
        %v6275 = vsub.s32 %v6272, %v6274
        %v6276 = vrot.slane %v6254, %v6275
        %v6278 = vunpack.c.l.s4 1966171168
        %v6279 = vunpack.c.0.s8 %v6278
        %v6280 = vlaneseq
        %v6281 = vshrl.u32 %v6280, 7
        %v6282 = vsub.s32 %v6279, %v6281
        %v6283 = vrot.slane %v6255, %v6282
        %v6284 = vcombine.low %v6262, %v6269
        %v6285 = vcombine.low %v6276, %v6283
        %v6287 = vunpack.c.l.s4 1966171168
        %v6288 = vunpack.c.0.s8 %v6287
        %v6289 = vlaneseq
        %v6290 = vshrl.u32 %v6289, 7
        %v6291 = vsub.s32 %v6288, %v6290
        %v6292 = vrot.slane %v6284, %v6291
        %v6294 = vunpack.c.l.s4 1966171168
        %v6295 = vunpack.c.0.s8 %v6294
        %v6296 = vlaneseq
        %v6297 = vshrl.u32 %v6296, 7
        %v6298 = vsub.s32 %v6295, %v6297
        %v6299 = vrot.slane %v6285, %v6298
        %v6300 = vcombine.low %v6292, %v6299
        %v6301 = vcombine.low %v4129, %v4192
        %v6302 = vcombine.low %v4249, %v4300
        %v6303 = vcombine.low %v4332, %v4395
        %v6304 = vcombine.low %v4446, %v4497
        %v6306 = vunpack.c.l.s4 1966171168
        %v6307 = vunpack.c.0.s8 %v6306
        %v6308 = vlaneseq
        %v6309 = vshrl.u32 %v6308, 7
        %v6310 = vsub.s32 %v6307, %v6309
        %v6311 = vrot.slane %v6301, %v6310
        %v6313 = vunpack.c.l.s4 1966171168
        %v6314 = vunpack.c.0.s8 %v6313
        %v6315 = vlaneseq
        %v6316 = vshrl.u32 %v6315, 7
        %v6317 = vsub.s32 %v6314, %v6316
        %v6318 = vrot.slane %v6302, %v6317
        %v6320 = vunpack.c.l.s4 1966171168
        %v6321 = vunpack.c.0.s8 %v6320
        %v6322 = vlaneseq
        %v6323 = vshrl.u32 %v6322, 7
        %v6324 = vsub.s32 %v6321, %v6323
        %v6325 = vrot.slane %v6303, %v6324
        %v6327 = vunpack.c.l.s4 1966171168
        %v6328 = vunpack.c.0.s8 %v6327
        %v6329 = vlaneseq
        %v6330 = vshrl.u32 %v6329, 7
        %v6331 = vsub.s32 %v6328, %v6330
        %v6332 = vrot.slane %v6304, %v6331
        %v6333 = vcombine.low %v6311, %v6318
        %v6334 = vcombine.low %v6325, %v6332
        %v6336 = vunpack.c.l.s4 1966171168
        %v6337 = vunpack.c.0.s8 %v6336
        %v6338 = vlaneseq
        %v6339 = vshrl.u32 %v6338, 7
        %v6340 = vsub.s32 %v6337, %v6339
        %v6341 = vrot.slane %v6333, %v6340
        %v6343 = vunpack.c.l.s4 1966171168
        %v6344 = vunpack.c.0.s8 %v6343
        %v6345 = vlaneseq
        %v6346 = vshrl.u32 %v6345, 7
        %v6347 = vsub.s32 %v6344, %v6346
        %v6348 = vrot.slane %v6334, %v6347
        %v6349 = vcombine.low %v6341, %v6348
        %v6354 = vsel %vm902, %v4546, %v4895
        %v6355 = vsel %vm902, %v4595, %v4897
        %v6356 = vsel %vm902, %v4644, %v4899
        %v6357 = vsel %vm902, %v4693, %v4901
        %vm6358 = vcmask 261120
        %v6359 = vsel %vm6358, %v6354, %v5103
        %v6360 = vsel %vm6358, %v6355, %v5105
        %v6361 = vsel %vm6358, %v6356, %v5107
        %v6362 = vsel %vm6358, %v6357, %v5109
        %vm6363 = vcmask 392192
        %v6364 = vsel %vm6363, %v6359, %v5311
        %v6365 = vsel %vm6363, %v6360, %v5313
        %v6366 = vsel %vm6363, %v6361, %v5315
        %v6367 = vsel %vm6363, %v6362, %v5317
        %vm6368 = vcmask 523264
        %v6369 = vsel %vm6368, %v6364, %v5519
        %v6370 = vsel %vm6368, %v6365, %v5521
        %v6371 = vsel %vm6368, %v6366, %v5523
        %v6372 = vsel %vm6368, %v6367, %v5525
        %vm6373 = vcmask 654336
        %v6374 = vsel %vm6373, %v6369, %v5727
        %v6375 = vsel %vm6373, %v6370, %v5729
        %v6376 = vsel %vm6373, %v6371, %v5731
        %v6377 = vsel %vm6373, %v6372, %v5733
        %vm6378 = vcmask 785408
        %v6379 = vsel %vm6378, %v6374, %v5935
        %v6380 = vsel %vm6378, %v6375, %v5937
        %v6381 = vsel %vm6378, %v6376, %v5939
        %v6382 = vsel %vm6378, %v6377, %v5941
        %vm6383 = vcmask 916480
        %v6384 = vsel %vm6383, %v6379, %v6143
        %v6385 = vsel %vm6383, %v6380, %v6145
        %v6386 = vsel %vm6383, %v6381, %v6147
        %v6387 = vsel %vm6383, %v6382, %v6149
        %v6392 = vunpack.c.l.b16 %v612
        %v6393 = vunpack.c.h.b16 %v612
        %v6394 = vunpack.c.l.b16 %v613
        %v6395 = vunpack.c.h.b16 %v613
        %v6396 = vunpack.c.l.b16 %v614
        %v6397 = vunpack.c.h.b16 %v614
        %v6398 = vunpack.c.l.b16 %v615
        %v6399 = vunpack.c.h.b16 %v615
        %v6400 = vpack.c.b16 %v6394, %v6392
        %v6401 = vpack.c.b16 %v6395, %v6393
        %v6402 = vpack.c.b16 %v6398, %v6396
        %v6403 = vpack.c.b16 %v6399, %v6397
        %v6424 = vunpack.c.l.b16 %v2423
        %v6425 = vunpack.c.h.b16 %v2423
        %v6426 = vunpack.c.l.b16 %v2424
        %v6427 = vunpack.c.h.b16 %v2424
        %v6428 = vunpack.c.l.b16 %v2425
        %v6429 = vunpack.c.h.b16 %v2425
        %v6430 = vunpack.c.l.b16 %v2426
        %v6431 = vunpack.c.h.b16 %v2426
        %v6432 = vunpack.c.l.b16 %v2427
        %v6433 = vunpack.c.h.b16 %v2427
        %v6434 = vunpack.c.l.b16 %v2428
        %v6435 = vunpack.c.h.b16 %v2428
        %v6436 = vunpack.c.l.b16 %v2429
        %v6437 = vunpack.c.h.b16 %v2429
        %v6438 = vunpack.c.l.b16 %v2430
        %v6439 = vunpack.c.h.b16 %v2430
        %v6440 = vunpack.c.l.b16 %v2431
        %v6441 = vunpack.c.h.b16 %v2431
        %v6442 = vunpack.c.l.b16 %v2432
        %v6443 = vunpack.c.h.b16 %v2432
        %v6444 = vunpack.c.l.b16 %v2433
        %v6445 = vunpack.c.h.b16 %v2433
        %v6446 = vunpack.c.l.b16 %v2434
        %v6447 = vunpack.c.h.b16 %v2434
        %v6448 = vunpack.c.l.b16 %v2435
        %v6449 = vunpack.c.h.b16 %v2435
        %v6450 = vunpack.c.l.b16 %v2436
        %v6451 = vunpack.c.h.b16 %v2436
        %v6452 = vunpack.c.l.b16 %v2437
        %v6453 = vunpack.c.h.b16 %v2437
        %v6454 = vunpack.c.l.b16 %v2438
        %v6455 = vunpack.c.h.b16 %v2438
        %v6456 = vunpack.c.l.b16 %v2439
        %v6457 = vunpack.c.h.b16 %v2439
        %v6458 = vunpack.c.l.b16 %v2440
        %v6459 = vunpack.c.h.b16 %v2440
        %v6460 = vpack.c.b16 %v6426, %v6424
        %v6461 = vpack.c.b16 %v6427, %v6425
        %v6462 = vpack.c.b16 %v6430, %v6428
        %v6463 = vpack.c.b16 %v6431, %v6429
        %v6464 = vpack.c.b16 %v6434, %v6432
        %v6465 = vpack.c.b16 %v6435, %v6433
        %v6466 = vpack.c.b16 %v6438, %v6436
        %v6467 = vpack.c.b16 %v6439, %v6437
        %v6468 = vpack.c.b16 %v6442, %v6440
        %v6469 = vpack.c.b16 %v6443, %v6441
        %v6470 = vpack.c.b16 %v6446, %v6444
        %v6471 = vpack.c.b16 %v6447, %v6445
        %v6472 = vpack.c.b16 %v6450, %v6448
        %v6473 = vpack.c.b16 %v6451, %v6449
        %v6474 = vpack.c.b16 %v6454, %v6452
        %v6475 = vpack.c.b16 %v6455, %v6453
        %v6476 = vpack.c.b16 %v6458, %v6456
        %v6477 = vpack.c.b16 %v6459, %v6457
        %v6497 = vsel %vm902, %v6401, 0
        %v6500 = vsel %vm902, %v6403, 0
        %6502 = vmatprep.subr.bf16.mxu0 %v6475
        %6503 = vmatpush1.bf16.msra.mxu0 %v6474
        %6504 = vmatprep.subr.bf16.mxu0 %v6473
        %6505 = vmatpush1.bf16.msra.mxu0 %v6472
        %6506 = vmatprep.subr.bf16.mxu0 %v6471
        %6507 = vmatpush1.bf16.msra.mxu0 %v6470
        %6508 = vmatprep.subr.bf16.mxu0 %v6469
        %6509 = vmatpush1.bf16.msra.mxu0 %v6468
        %6510 = vmatprep.subr.bf16.mxu0 %v6467
        %6511 = vmatpush1.bf16.msra.mxu0 %v6466
        %6512 = vmatprep.subr.bf16.mxu0 %v6465
        %6513 = vmatpush1.bf16.msra.mxu0 %v6464
        %6514 = vmatprep.subr.bf16.mxu0 %v6463
        %6515 = vmatpush1.bf16.msra.mxu0 %v6462
        %6516 = vmatprep.subr.bf16.mxu0 %v6461
        %6517 = vmatpush1.bf16.msra.mxu0 %v6460
        %6518 = vmatprep.subr.bf16.mxu0 0
        %6519 = vmatpush2.bf16.msra.mxu0 0
        %6520 = vmatprep.subr.bf16.mxu0 0
        %6521 = vmatpush2.bf16.msra.mxu0 0
        %6522 = vmatprep.subr.bf16.mxu0 0
        %6523 = vmatpush2.bf16.msra.mxu0 0
        %6524 = vmatprep.subr.bf16.mxu0 0
        %6525 = vmatpush2.bf16.msra.mxu0 0
        %6526 = vmatprep.subr.bf16.mxu0 0
        %6527 = vmatpush2.bf16.msra.mxu0 0
        %6528 = vmatprep.subr.bf16.mxu0 0
        %6529 = vmatpush2.bf16.msra.mxu0 0
        %6530 = vmatprep.subr.bf16.mxu0 0
        %6531 = vmatpush2.bf16.msra.mxu0 0
        %6532 = vmatprep.subr.bf16.mxu0 %v6477
        %6533 = vmatpush2.bf16.msra.mxu0 %v6476
        %6534 = vmatprep.mubr.bf16.mxu0 %v6497
        %6535 = vmatmul.mubr.bf16.gmra.mxu0 %v6400
        %v6536 = vpop.f32.mrf.mxu0
        %v6537 = vadd.f32 %v6384, %v6536
        %v6538 = vpop.f32.mrf.mxu0
        %v6539 = vadd.f32 %v6202, %v6538
        %v6540 = vpop.f32.mrf.mxu0
        %v6541 = vadd.f32 %v6385, %v6540
        %v6542 = vpop.f32.mrf.mxu0
        %v6543 = vadd.f32 %v6251, %v6542
        %6544 = vmatprep.mubr.bf16.mxu0 %v6500
        %6545 = vmatmul.mubr.bf16.gmra.mxu0 %v6402
        %v6546 = vpop.f32.mrf.mxu0
        %v6547 = vadd.f32 %v6386, %v6546
        %v6548 = vpop.f32.mrf.mxu0
        %v6549 = vadd.f32 %v6300, %v6548
        %v6550 = vpop.f32.mrf.mxu0
        %v6551 = vadd.f32 %v6387, %v6550
        %v6552 = vpop.f32.mrf.mxu0
        %v6553 = vadd.f32 %v6349, %v6552
        %6554 = vdwg.mxu0
        %s6555 = scalar_lea.vmem %s12, 3
        %v6556 = vld [vmem:[%s6555] ss:$8 sm:$0x3]
        %v6558 = vlaneseq
        %v6559 = vshrl.u32 %v6558, 7
        %v6560 = vsub.s32 0, %v6559
        %v6561 = vrot.slane %v6556, %v6560
        %v6562 = vlaneseq
        %v6563 = vshrl.u32 %v6562, 7
        %v6564 = vsub.s32 1, %v6563
        %v6565 = vrot.slane %v6556, %v6564
        %v6568 = vadd.f32 %v6537, %v6561
        %v6569 = vadd.f32 %v6539, %v6565
        %v6570 = vadd.f32 %v6541, %v6561
        %v6571 = vadd.f32 %v6543, %v6565
        %v6572 = vadd.f32 %v6547, %v6561
        %v6573 = vadd.f32 %v6549, %v6565
        %v6574 = vadd.f32 %v6551, %v6561
        %v6575 = vadd.f32 %v6553, %v6565
        %v6576 = vmax.f32 %v6568, 0.0
        %v6577 = vmax.f32 %v6569, 0.0
        %v6578 = vmax.f32 %v6570, 0.0
        %v6579 = vmax.f32 %v6571, 0.0
        %v6580 = vmax.f32 %v6572, 0.0
        %v6581 = vmax.f32 %v6573, 0.0
        %v6582 = vmax.f32 %v6574, 0.0
        %v6583 = vmax.f32 %v6575, 0.0
        %v6584 = vpack.c.bf16 %v6578, %v6576
        %v6585 = vpack.c.bf16 %v6579, %v6577
        %v6586 = vpack.c.bf16 %v6582, %v6580
        %v6587 = vpack.c.bf16 %v6583, %v6581
        %v6588 = vld [vmem:[%s8] sm:$0xff]
        %v6589 = vld [vmem:[%s8 + $0x8] sm:$0xff]
        %v6590 = vld [vmem:[%s8 + $0x10] sm:$0xff]
        %v6591 = vld [vmem:[%s8 + $0x18] sm:$0xff]
        %v6592 = vld [vmem:[%s8 + $0x20] sm:$0xff]
        %v6593 = vld [vmem:[%s8 + $0x28] sm:$0xff]
        %v6594 = vld [vmem:[%s8 + $0x30] sm:$0xff]
        %v6595 = vld [vmem:[%s8 + $0x38] sm:$0xff]
        %v6596 = vld [vmem:[%s8 + $0x40] sm:$0xff]
        %v6597 = vld [vmem:[%s8 + $0x48] sm:$0xff]
        %v6598 = vld [vmem:[%s8 + $0x50] sm:$0xff]
        %v6599 = vld [vmem:[%s8 + $0x58] sm:$0xff]
        %v6600 = vld [vmem:[%s8 + $0x60] sm:$0xff]
        %v6601 = vld [vmem:[%s8 + $0x68] sm:$0xff]
        %v6602 = vld [vmem:[%s8 + $0x70] sm:$0xff]
        %v6603 = vld [vmem:[%s8 + $0x78] sm:$0xff]
        %v6604 = vld [vmem:[%s8 + $0x80] sm:$0xff]
        %v6605 = vld [vmem:[%s8 + $0x88] sm:$0xff]
        %s6606 = scalar_lea.vmem %s12, 4
        %v6607 = vld [vmem:[%s6606] ss:$8 sm:$0x3]
        %v6609 = vlaneseq
        %v6610 = vshrl.u32 %v6609, 7
        %v6611 = vsub.s32 0, %v6610
        %v6612 = vrot.slane %v6607, %v6611
        %v6613 = vlaneseq
        %v6614 = vshrl.u32 %v6613, 7
        %v6615 = vsub.s32 1, %v6614
        %v6616 = vrot.slane %v6607, %v6615
        %v6637 = vunpack.c.l.b16 %v6588
        %v6638 = vunpack.c.h.b16 %v6588
        %v6639 = vunpack.c.l.b16 %v6589
        %v6640 = vunpack.c.h.b16 %v6589
        %v6641 = vunpack.c.l.b16 %v6590
        %v6642 = vunpack.c.h.b16 %v6590
        %v6643 = vunpack.c.l.b16 %v6591
        %v6644 = vunpack.c.h.b16 %v6591
        %v6645 = vunpack.c.l.b16 %v6592
        %v6646 = vunpack.c.h.b16 %v6592
        %v6647 = vunpack.c.l.b16 %v6593
        %v6648 = vunpack.c.h.b16 %v6593
        %v6649 = vunpack.c.l.b16 %v6594
        %v6650 = vunpack.c.h.b16 %v6594
        %v6651 = vunpack.c.l.b16 %v6595
        %v6652 = vunpack.c.h.b16 %v6595
        %v6653 = vunpack.c.l.b16 %v6596
        %v6654 = vunpack.c.h.b16 %v6596
        %v6655 = vunpack.c.l.b16 %v6597
        %v6656 = vunpack.c.h.b16 %v6597
        %v6657 = vunpack.c.l.b16 %v6598
        %v6658 = vunpack.c.h.b16 %v6598
        %v6659 = vunpack.c.l.b16 %v6599
        %v6660 = vunpack.c.h.b16 %v6599
        %v6661 = vunpack.c.l.b16 %v6600
        %v6662 = vunpack.c.h.b16 %v6600
        %v6663 = vunpack.c.l.b16 %v6601
        %v6664 = vunpack.c.h.b16 %v6601
        %v6665 = vunpack.c.l.b16 %v6602
        %v6666 = vunpack.c.h.b16 %v6602
        %v6667 = vunpack.c.l.b16 %v6603
        %v6668 = vunpack.c.h.b16 %v6603
        %v6669 = vunpack.c.l.b16 %v6604
        %v6670 = vunpack.c.h.b16 %v6604
        %v6671 = vunpack.c.l.b16 %v6605
        %v6672 = vunpack.c.h.b16 %v6605
        %v6673 = vpack.c.b16 %v6639, %v6637
        %v6674 = vpack.c.b16 %v6640, %v6638
        %v6675 = vpack.c.b16 %v6643, %v6641
        %v6676 = vpack.c.b16 %v6644, %v6642
        %v6677 = vpack.c.b16 %v6647, %v6645
        %v6678 = vpack.c.b16 %v6648, %v6646
        %v6679 = vpack.c.b16 %v6651, %v6649
        %v6680 = vpack.c.b16 %v6652, %v6650
        %v6681 = vpack.c.b16 %v6655, %v6653
        %v6682 = vpack.c.b16 %v6656, %v6654
        %v6683 = vpack.c.b16 %v6659, %v6657
        %v6684 = vpack.c.b16 %v6660, %v6658
        %v6685 = vpack.c.b16 %v6663, %v6661
        %v6686 = vpack.c.b16 %v6664, %v6662
        %v6687 = vpack.c.b16 %v6667, %v6665
        %v6688 = vpack.c.b16 %v6668, %v6666
        %v6689 = vpack.c.b16 %v6671, %v6669
        %v6690 = vpack.c.b16 %v6672, %v6670
        %v6710 = vsel %vm902, %v6585, 0
        %v6713 = vsel %vm902, %v6587, 0
        %6715 = vmatprep.subr.bf16.mxu0 %v6688
        %6716 = vmatpush1.bf16.msra.mxu0 %v6687
        %6717 = vmatprep.subr.bf16.mxu0 %v6686
        %6718 = vmatpush1.bf16.msra.mxu0 %v6685
        %6719 = vmatprep.subr.bf16.mxu0 %v6684
        %6720 = vmatpush1.bf16.msra.mxu0 %v6683
        %6721 = vmatprep.subr.bf16.mxu0 %v6682
        %6722 = vmatpush1.bf16.msra.mxu0 %v6681
        %6723 = vmatprep.subr.bf16.mxu0 %v6680
        %6724 = vmatpush1.bf16.msra.mxu0 %v6679
        %6725 = vmatprep.subr.bf16.mxu0 %v6678
        %6726 = vmatpush1.bf16.msra.mxu0 %v6677
        %6727 = vmatprep.subr.bf16.mxu0 %v6676
        %6728 = vmatpush1.bf16.msra.mxu0 %v6675
        %6729 = vmatprep.subr.bf16.mxu0 %v6674
        %6730 = vmatpush1.bf16.msra.mxu0 %v6673
        %6731 = vmatprep.subr.bf16.mxu0 0
        %6732 = vmatpush2.bf16.msra.mxu0 0
        %6733 = vmatprep.subr.bf16.mxu0 0
        %6734 = vmatpush2.bf16.msra.mxu0 0
        %6735 = vmatprep.subr.bf16.mxu0 0
        %6736 = vmatpush2.bf16.msra.mxu0 0
        %6737 = vmatprep.subr.bf16.mxu0 0
        %6738 = vmatpush2.bf16.msra.mxu0 0
        %6739 = vmatprep.subr.bf16.mxu0 0
        %6740 = vmatpush2.bf16.msra.mxu0 0
        %6741 = vmatprep.subr.bf16.mxu0 0
        %6742 = vmatpush2.bf16.msra.mxu0 0
        %6743 = vmatprep.subr.bf16.mxu0 0
        %6744 = vmatpush2.bf16.msra.mxu0 0
        %6745 = vmatprep.subr.bf16.mxu0 %v6690
        %6746 = vmatpush2.bf16.msra.mxu0 %v6689
        %6747 = vmatprep.mubr.bf16.mxu0 %v6710
        %6748 = vmatmul.mubr.bf16.gmra.mxu0 %v6584
        %v6749 = vpop.f32.mrf.mxu0
        %v6750 = vadd.f32 %v6612, %v6749
        %v6751 = vpop.f32.mrf.mxu0
        %v6752 = vadd.f32 %v6616, %v6751
        %v6753 = vpop.f32.mrf.mxu0
        %v6754 = vadd.f32 %v6612, %v6753
        %v6755 = vpop.f32.mrf.mxu0
        %v6756 = vadd.f32 %v6616, %v6755
        %6757 = vmatprep.mubr.bf16.mxu0 %v6713
        %6758 = vmatmul.mubr.bf16.gmra.mxu0 %v6586
        %v6759 = vpop.f32.mrf.mxu0
        %v6760 = vadd.f32 %v6612, %v6759
        %v6761 = vpop.f32.mrf.mxu0
        %v6762 = vadd.f32 %v6616, %v6761
        %v6763 = vpop.f32.mrf.mxu0
        %v6764 = vadd.f32 %v6612, %v6763
        %v6765 = vpop.f32.mrf.mxu0
        %v6766 = vadd.f32 %v6616, %v6765
        %6767 = vdwg.mxu0
        %v6768 = vmax.f32 %v6750, 0.0
        %v6769 = vmax.f32 %v6752, 0.0
        %v6770 = vmax.f32 %v6754, 0.0
        %v6771 = vmax.f32 %v6756, 0.0
        %v6772 = vmax.f32 %v6760, 0.0
        %v6773 = vmax.f32 %v6762, 0.0
        %v6774 = vmax.f32 %v6764, 0.0
        %v6775 = vmax.f32 %v6766, 0.0
        %v6776 = vpack.c.bf16 %v6770, %v6768
        %v6777 = vpack.c.bf16 %v6771, %v6769
        %v6778 = vpack.c.bf16 %v6774, %v6772
        %v6779 = vpack.c.bf16 %v6775, %v6773
        %v6780 = vld [vmem:[%s9] sm:$0xff]
        %v6781 = vld [vmem:[%s9 + $0x8] sm:$0xff]
        %v6782 = vld [vmem:[%s9 + $0x10] sm:$0xff]
        %v6783 = vld [vmem:[%s9 + $0x18] sm:$0xff]
        %v6784 = vld [vmem:[%s9 + $0x20] sm:$0xff]
        %v6785 = vld [vmem:[%s9 + $0x28] sm:$0xff]
        %v6786 = vld [vmem:[%s9 + $0x30] sm:$0xff]
        %v6787 = vld [vmem:[%s9 + $0x38] sm:$0xff]
        %v6788 = vld [vmem:[%s9 + $0x40] sm:$0xff]
        %v6789 = vld [vmem:[%s9 + $0x48] sm:$0xff]
        %v6790 = vld [vmem:[%s9 + $0x50] sm:$0xff]
        %v6791 = vld [vmem:[%s9 + $0x58] sm:$0xff]
        %v6792 = vld [vmem:[%s9 + $0x60] sm:$0xff]
        %v6793 = vld [vmem:[%s9 + $0x68] sm:$0xff]
        %v6794 = vld [vmem:[%s9 + $0x70] sm:$0xff]
        %v6795 = vld [vmem:[%s9 + $0x78] sm:$0xff]
        %v6796 = vld [vmem:[%s9 + $0x80] sm:$0xff]
        %v6797 = vld [vmem:[%s9 + $0x88] sm:$0xff]
        %s6798 = scalar_lea.vmem %s12, 5
        %v6799 = vld [vmem:[%s6798] ss:$8 sm:$0x3]
        %v6801 = vlaneseq
        %v6802 = vshrl.u32 %v6801, 7
        %v6803 = vsub.s32 0, %v6802
        %v6804 = vrot.slane %v6799, %v6803
        %v6805 = vlaneseq
        %v6806 = vshrl.u32 %v6805, 7
        %v6807 = vsub.s32 1, %v6806
        %v6808 = vrot.slane %v6799, %v6807
        %v6829 = vunpack.c.l.b16 %v6780
        %v6830 = vunpack.c.h.b16 %v6780
        %v6831 = vunpack.c.l.b16 %v6781
        %v6832 = vunpack.c.h.b16 %v6781
        %v6833 = vunpack.c.l.b16 %v6782
        %v6834 = vunpack.c.h.b16 %v6782
        %v6835 = vunpack.c.l.b16 %v6783
        %v6836 = vunpack.c.h.b16 %v6783
        %v6837 = vunpack.c.l.b16 %v6784
        %v6838 = vunpack.c.h.b16 %v6784
        %v6839 = vunpack.c.l.b16 %v6785
        %v6840 = vunpack.c.h.b16 %v6785
        %v6841 = vunpack.c.l.b16 %v6786
        %v6842 = vunpack.c.h.b16 %v6786
        %v6843 = vunpack.c.l.b16 %v6787
        %v6844 = vunpack.c.h.b16 %v6787
        %v6845 = vunpack.c.l.b16 %v6788
        %v6846 = vunpack.c.h.b16 %v6788
        %v6847 = vunpack.c.l.b16 %v6789
        %v6848 = vunpack.c.h.b16 %v6789
        %v6849 = vunpack.c.l.b16 %v6790
        %v6850 = vunpack.c.h.b16 %v6790
        %v6851 = vunpack.c.l.b16 %v6791
        %v6852 = vunpack.c.h.b16 %v6791
        %v6853 = vunpack.c.l.b16 %v6792
        %v6854 = vunpack.c.h.b16 %v6792
        %v6855 = vunpack.c.l.b16 %v6793
        %v6856 = vunpack.c.h.b16 %v6793
        %v6857 = vunpack.c.l.b16 %v6794
        %v6858 = vunpack.c.h.b16 %v6794
        %v6859 = vunpack.c.l.b16 %v6795
        %v6860 = vunpack.c.h.b16 %v6795
        %v6861 = vunpack.c.l.b16 %v6796
        %v6862 = vunpack.c.h.b16 %v6796
        %v6863 = vunpack.c.l.b16 %v6797
        %v6864 = vunpack.c.h.b16 %v6797
        %v6865 = vpack.c.b16 %v6831, %v6829
        %v6866 = vpack.c.b16 %v6832, %v6830
        %v6867 = vpack.c.b16 %v6835, %v6833
        %v6868 = vpack.c.b16 %v6836, %v6834
        %v6869 = vpack.c.b16 %v6839, %v6837
        %v6870 = vpack.c.b16 %v6840, %v6838
        %v6871 = vpack.c.b16 %v6843, %v6841
        %v6872 = vpack.c.b16 %v6844, %v6842
        %v6873 = vpack.c.b16 %v6847, %v6845
        %v6874 = vpack.c.b16 %v6848, %v6846
        %v6875 = vpack.c.b16 %v6851, %v6849
        %v6876 = vpack.c.b16 %v6852, %v6850
        %v6877 = vpack.c.b16 %v6855, %v6853
        %v6878 = vpack.c.b16 %v6856, %v6854
        %v6879 = vpack.c.b16 %v6859, %v6857
        %v6880 = vpack.c.b16 %v6860, %v6858
        %v6881 = vpack.c.b16 %v6863, %v6861
        %v6882 = vpack.c.b16 %v6864, %v6862
        %v6902 = vsel %vm902, %v6777, 0
        %v6905 = vsel %vm902, %v6779, 0
        %6907 = vmatprep.subr.bf16.mxu0 %v6880
        %6908 = vmatpush1.bf16.msra.mxu0 %v6879
        %6909 = vmatprep.subr.bf16.mxu0 %v6878
        %6910 = vmatpush1.bf16.msra.mxu0 %v6877
        %6911 = vmatprep.subr.bf16.mxu0 %v6876
        %6912 = vmatpush1.bf16.msra.mxu0 %v6875
        %6913 = vmatprep.subr.bf16.mxu0 %v6874
        %6914 = vmatpush1.bf16.msra.mxu0 %v6873
        %6915 = vmatprep.subr.bf16.mxu0 %v6872
        %6916 = vmatpush1.bf16.msra.mxu0 %v6871
        %6917 = vmatprep.subr.bf16.mxu0 %v6870
        %6918 = vmatpush1.bf16.msra.mxu0 %v6869
        %6919 = vmatprep.subr.bf16.mxu0 %v6868
        %6920 = vmatpush1.bf16.msra.mxu0 %v6867
        %6921 = vmatprep.subr.bf16.mxu0 %v6866
        %6922 = vmatpush1.bf16.msra.mxu0 %v6865
        %6923 = vmatprep.subr.bf16.mxu0 0
        %6924 = vmatpush2.bf16.msra.mxu0 0
        %6925 = vmatprep.subr.bf16.mxu0 0
        %6926 = vmatpush2.bf16.msra.mxu0 0
        %6927 = vmatprep.subr.bf16.mxu0 0
        %6928 = vmatpush2.bf16.msra.mxu0 0
        %6929 = vmatprep.subr.bf16.mxu0 0
        %6930 = vmatpush2.bf16.msra.mxu0 0
        %6931 = vmatprep.subr.bf16.mxu0 0
        %6932 = vmatpush2.bf16.msra.mxu0 0
        %6933 = vmatprep.subr.bf16.mxu0 0
        %6934 = vmatpush2.bf16.msra.mxu0 0
        %6935 = vmatprep.subr.bf16.mxu0 0
        %6936 = vmatpush2.bf16.msra.mxu0 0
        %6937 = vmatprep.subr.bf16.mxu0 %v6882
        %6938 = vmatpush2.bf16.msra.mxu0 %v6881
        %6939 = vmatprep.mubr.bf16.mxu0 %v6902
        %6940 = vmatmul.mubr.bf16.gmra.mxu0 %v6776
        %v6941 = vpop.f32.mrf.mxu0
        %v6942 = vadd.f32 %v6804, %v6941
        %v6943 = vpop.f32.mrf.mxu0
        %v6944 = vadd.f32 %v6808, %v6943
        %v6945 = vpop.f32.mrf.mxu0
        %v6946 = vadd.f32 %v6804, %v6945
        %v6947 = vpop.f32.mrf.mxu0
        %v6948 = vadd.f32 %v6808, %v6947
        %6949 = vmatprep.mubr.bf16.mxu0 %v6905
        %6950 = vmatmul.mubr.bf16.gmra.mxu0 %v6778
        %v6951 = vpop.f32.mrf.mxu0
        %v6952 = vadd.f32 %v6804, %v6951
        %v6953 = vpop.f32.mrf.mxu0
        %v6954 = vadd.f32 %v6808, %v6953
        %v6955 = vpop.f32.mrf.mxu0
        %v6956 = vadd.f32 %v6804, %v6955
        %v6957 = vpop.f32.mrf.mxu0
        %v6958 = vadd.f32 %v6808, %v6957
        %6959 = vdwg.mxu0
        %v6960 = vmax.f32 %v6942, 0.0
        %v6961 = vmax.f32 %v6944, 0.0
        %v6962 = vmax.f32 %v6946, 0.0
        %v6963 = vmax.f32 %v6948, 0.0
        %v6964 = vmax.f32 %v6952, 0.0
        %v6965 = vmax.f32 %v6954, 0.0
        %v6966 = vmax.f32 %v6956, 0.0
        %v6967 = vmax.f32 %v6958, 0.0
        %v6968 = vunpack.c.l.bf16 %v612
        %v6969 = vunpack.c.h.bf16 %v612
        %v6970 = vunpack.c.l.bf16 %v613
        %v6971 = vunpack.c.h.bf16 %v613
        %v6972 = vunpack.c.l.bf16 %v614
        %v6973 = vunpack.c.h.bf16 %v614
        %v6974 = vunpack.c.l.bf16 %v615
        %v6975 = vunpack.c.h.bf16 %v615
        %v6976 = vadd.f32 %v6968, %v6960
        %v6977 = vadd.f32 %v6969, %v6961
        %v6978 = vadd.f32 %v6970, %v6962
        %v6979 = vadd.f32 %v6971, %v6963
        %v6980 = vadd.f32 %v6972, %v6964
        %v6981 = vadd.f32 %v6973, %v6965
        %v6982 = vadd.f32 %v6974, %v6966
        %v6983 = vadd.f32 %v6975, %v6967
        %v6984 = vpack.c.bf16 %v6978, %v6976
        %v6985 = vpack.c.bf16 %v6979, %v6977
        %v6986 = vpack.c.bf16 %v6982, %v6980
        %v6987 = vpack.c.bf16 %v6983, %v6981
        %v6992 = vunpack.c.l.b16 %v6984
        %v6993 = vunpack.c.l.b16 %v6985
        %v6994 = vunpack.c.h.b16 %v6984
        %v6995 = vunpack.c.h.b16 %v6985
        %v6996 = vunpack.c.l.b16 %v6986
        %v6997 = vunpack.c.l.b16 %v6987
        %v6998 = vunpack.c.h.b16 %v6986
        %v6999 = vunpack.c.h.b16 %v6987
        %v7000 = vpack.c.b16 %v6993, %v6992
        %v7001 = vpack.c.b16 %v6995, %v6994
        %v7002 = vpack.c.b16 %v6997, %v6996
        %v7003 = vpack.c.b16 %v6999, %v6998
        %7008 = vst.msk [vmem:[%s533] sm:$0xff] %vm2100, %v7000
        %7009 = vst.msk [vmem:[%s533 + $0x8] sm:$0xff] %vm2100, %v7001
        %7010 = vst.msk [vmem:[%s533 + $0x10] sm:$0xff] %vm2100, %v7002
        %7011 = vst.msk [vmem:[%s533 + $0x18] sm:$0xff] %vm2100, %v7003
        %v7012 = vld [vmem:[%s10] sm:$0xf]
        %v7013 = vld [vmem:[%s10 + $0x4] sm:$0xf]
        %v7014 = vld [vmem:[%s10 + $0x8] sm:$0xf]
        %v7015 = vld [vmem:[%s10 + $0xc] sm:$0xf]
        %v7016 = vld [vmem:[%s10 + $0x10] sm:$0xf]
        %v7017 = vld [vmem:[%s10 + $0x14] sm:$0xf]
        %v7018 = vld [vmem:[%s10 + $0x18] sm:$0xf]
        %v7019 = vld [vmem:[%s10 + $0x1c] sm:$0xf]
        %v7020 = vld [vmem:[%s10 + $0x20] sm:$0xf]
        %v7021 = vld [vmem:[%s10 + $0x24] sm:$0xf]
        %v7022 = vld [vmem:[%s10 + $0x28] sm:$0xf]
        %v7023 = vld [vmem:[%s10 + $0x2c] sm:$0xf]
        %v7024 = vld [vmem:[%s10 + $0x30] sm:$0xf]
        %v7025 = vld [vmem:[%s10 + $0x34] sm:$0xf]
        %v7026 = vld [vmem:[%s10 + $0x38] sm:$0xf]
        %v7027 = vld [vmem:[%s10 + $0x3c] sm:$0xf]
        %v7028 = vld [vmem:[%s10 + $0x40] sm:$0xf]
        %v7029 = vld [vmem:[%s10 + $0x44] sm:$0xf]
        %v7030 = vld [vmem:[%s12 + $0x6] ss:$0 sm:$0xff]
        %v7049 = vunpack.c.l.b16 %v7012
        %v7050 = vunpack.c.l.b16 %v7013
        %v7051 = vunpack.c.l.b16 %v7014
        %v7052 = vunpack.c.l.b16 %v7015
        %v7053 = vunpack.c.l.b16 %v7016
        %v7054 = vunpack.c.l.b16 %v7017
        %v7055 = vunpack.c.l.b16 %v7018
        %v7056 = vunpack.c.l.b16 %v7019
        %v7057 = vunpack.c.l.b16 %v7020
        %v7058 = vunpack.c.l.b16 %v7021
        %v7059 = vunpack.c.l.b16 %v7022
        %v7060 = vunpack.c.l.b16 %v7023
        %v7061 = vunpack.c.l.b16 %v7024
        %v7062 = vunpack.c.l.b16 %v7025
        %v7063 = vunpack.c.l.b16 %v7026
        %v7064 = vunpack.c.l.b16 %v7027
        %v7065 = vunpack.c.l.b16 %v7028
        %v7066 = vunpack.c.l.b16 %v7029
        %v7067 = vpack.c.b16 %v7050, %v7049
        %v7068 = vpack.c.b16 %v7052, %v7051
        %v7069 = vpack.c.b16 %v7054, %v7053
        %v7070 = vpack.c.b16 %v7056, %v7055
        %v7071 = vpack.c.b16 %v7058, %v7057
        %v7072 = vpack.c.b16 %v7060, %v7059
        %v7073 = vpack.c.b16 %v7062, %v7061
        %v7074 = vpack.c.b16 %v7064, %v7063
        %v7075 = vpack.c.b16 %v7066, %v7065
        %7085 = vmatprep.subr.bf16.mxu0 0
        %7086 = vmatpush1.bf16.msra.mxu0 %v7074
        %7087 = vmatprep.subr.bf16.mxu0 0
        %7088 = vmatpush1.bf16.msra.mxu0 %v7073
        %7089 = vmatprep.subr.bf16.mxu0 0
        %7090 = vmatpush1.bf16.msra.mxu0 %v7072
        %7091 = vmatprep.subr.bf16.mxu0 0
        %7092 = vmatpush1.bf16.msra.mxu0 %v7071
        %7093 = vmatprep.subr.bf16.mxu0 0
        %7094 = vmatpush1.bf16.msra.mxu0 %v7070
        %7095 = vmatprep.subr.bf16.mxu0 0
        %7096 = vmatpush1.bf16.msra.mxu0 %v7069
        %7097 = vmatprep.subr.bf16.mxu0 0
        %7098 = vmatpush1.bf16.msra.mxu0 %v7068
        %7099 = vmatprep.subr.bf16.mxu0 0
        %7100 = vmatpush1.bf16.msra.mxu0 %v7067
        %7101 = vmatprep.subr.bf16.mxu0 0
        %7102 = vmatpush2.bf16.msra.mxu0 0
        %7103 = vmatprep.subr.bf16.mxu0 0
        %7104 = vmatpush2.bf16.msra.mxu0 0
        %7105 = vmatprep.subr.bf16.mxu0 0
        %7106 = vmatpush2.bf16.msra.mxu0 0
        %7107 = vmatprep.subr.bf16.mxu0 0
        %7108 = vmatpush2.bf16.msra.mxu0 0
        %7109 = vmatprep.subr.bf16.mxu0 0
        %7110 = vmatpush2.bf16.msra.mxu0 0
        %7111 = vmatprep.subr.bf16.mxu0 0
        %7112 = vmatpush2.bf16.msra.mxu0 0
        %7113 = vmatprep.subr.bf16.mxu0 0
        %7114 = vmatpush2.bf16.msra.mxu0 0
        %7115 = vmatprep.subr.bf16.mxu0 0
        %7116 = vmatpush2.bf16.msra.mxu0 %v7075
        %7117 = vmatprep.mubr.bf16.mxu0 %v6497
        %7118 = vmatmul.mubr.bf16.gmra.mxu0 %v6400
        %v7119 = vpop.f32.mrf.mxu0
        %v7120 = vadd.f32 %v7030, %v7119
        %v7121 = vpop.f32.mrf.mxu0
        %v7122 = vpop.f32.mrf.mxu0
        %v7123 = vadd.f32 %v7030, %v7122
        %v7124 = vpop.f32.mrf.mxu0
        %7125 = vmatprep.mubr.bf16.mxu0 %v6500
        %7126 = vmatmul.mubr.bf16.gmra.mxu0 %v6402
        %v7127 = vpop.f32.mrf.mxu0
        %v7128 = vadd.f32 %v7030, %v7127
        %v7129 = vpop.f32.mrf.mxu0
        %v7130 = vpop.f32.mrf.mxu0
        %v7131 = vadd.f32 %v7030, %v7130
        %v7132 = vpop.f32.mrf.mxu0
        %7133 = vdwg.mxu0
        %v7134 = vmax.f32 %v7120, 0.0
        %v7135 = vmax.f32 %v7123, 0.0
        %v7136 = vmax.f32 %v7128, 0.0
        %v7137 = vmax.f32 %v7131, 0.0
        %v7138 = vpack.c.bf16 %v7135, %v7134
        %v7139 = vpack.c.bf16 %v7137, %v7136
        %v7144 = vunpack.c.l.b16 %v616
        %v7145 = vunpack.c.l.b16 %v617
        %v7146 = vunpack.c.l.b16 %v618
        %v7147 = vunpack.c.l.b16 %v619
        %v7148 = vpack.c.b16 %v7145, %v7144
        %v7149 = vpack.c.b16 %v7147, %v7146
        %7152 = vrot.lane.b32.xlu0 %v7138, 16
        %v7153 = vpop.permute.xlu0 %7152
        %7154 = vrot.lane.b32.xlu0 %v7139, 16
        %v7155 = vpop.permute.xlu0 %7154
        %v7158 = vsel %vm902, %v7148, %v7153
        %v7161 = vsel %vm902, %v7149, %v7155
        %v7162 = vunpack.c.l.bf16 %v616
        %v7163 = vunpack.c.l.bf16 %v617
        %v7164 = vunpack.c.l.bf16 %v618
        %v7165 = vunpack.c.l.bf16 %v619
        %v7166 = vld [vmem:[%s11] sm:$0xf]
        %v7167 = vld [vmem:[%s11 + $0x4] sm:$0xf]
        %v7168 = vld [vmem:[%s11 + $0x8] sm:$0xf]
        %v7169 = vld [vmem:[%s11 + $0xc] sm:$0xf]
        %v7174 = vunpack.c.l.b16 %v7166
        %v7175 = vunpack.c.l.b16 %v7167
        %v7176 = vunpack.c.l.b16 %v7168
        %v7177 = vunpack.c.l.b16 %v7169
        %v7178 = vpack.c.b16 %v7175, %v7174
        %v7179 = vpack.c.b16 %v7177, %v7176
        %v7182 = vsel %vm6358, %v7158, 0
        %v7184 = vsel %vm6358, %v7161, 0
        %7186 = vmatprep.subr.bf16.mxu0 0
        %7187 = vmatpush1.bf16.msra.mxu0 0
        %7188 = vmatprep.subr.bf16.mxu0 0
        %7189 = vmatpush1.bf16.msra.mxu0 0
        %7190 = vmatprep.subr.bf16.mxu0 0
        %7191 = vmatpush1.bf16.msra.mxu0 0
        %7192 = vmatprep.subr.bf16.mxu0 0
        %7193 = vmatpush1.bf16.msra.mxu0 0
        %7194 = vmatprep.subr.bf16.mxu0 0
        %7195 = vmatpush1.bf16.msra.mxu0 0
        %7196 = vmatprep.subr.bf16.mxu0 0
        %7197 = vmatpush1.bf16.msra.mxu0 0
        %7198 = vmatprep.subr.bf16.mxu0 0
        %7199 = vmatpush1.bf16.msra.mxu0 %v7179
        %7200 = vmatprep.subr.bf16.mxu0 0
        %7201 = vmatpush1.bf16.msra.mxu0 %v7178
        %7202 = vmatprep.subr.bf16.mxu0 0
        %7203 = vmatpush2.bf16.msra.mxu0 0
        %7204 = vmatprep.subr.bf16.mxu0 0
        %7205 = vmatpush2.bf16.msra.mxu0 0
        %7206 = vmatprep.subr.bf16.mxu0 0
        %7207 = vmatpush2.bf16.msra.mxu0 0
        %7208 = vmatprep.subr.bf16.mxu0 0
        %7209 = vmatpush2.bf16.msra.mxu0 0
        %7210 = vmatprep.subr.bf16.mxu0 0
        %7211 = vmatpush2.bf16.msra.mxu0 0
        %7212 = vmatprep.subr.bf16.mxu0 0
        %7213 = vmatpush2.bf16.msra.mxu0 0
        %7214 = vmatprep.subr.bf16.mxu0 0
        %7215 = vmatpush2.bf16.msra.mxu0 0
        %7216 = vmatprep.subr.bf16.mxu0 0
        %7217 = vmatpush2.bf16.msra.mxu0 0
        %7218 = vmatprep.mubr.bf16.mxu0 0
        %7219 = vmatmul.mubr.bf16.gmra.mxu0 %v7182
        %v7220 = vpop.f32.mrf.mxu0
        %v7221 = vadd.f32 0.0, %v7220
        %v7222 = vpop.f32.mrf.mxu0
        %v7223 = vpop.f32.mrf.mxu0
        %v7224 = vadd.f32 0.0, %v7223
        %v7225 = vpop.f32.mrf.mxu0
        %7226 = vmatprep.mubr.bf16.mxu0 0
        %7227 = vmatmul.mubr.bf16.gmra.mxu0 %v7184
        %v7228 = vpop.f32.mrf.mxu0
        %v7229 = vadd.f32 0.0, %v7228
        %v7230 = vpop.f32.mrf.mxu0
        %v7231 = vpop.f32.mrf.mxu0
        %v7232 = vadd.f32 0.0, %v7231
        %v7233 = vpop.f32.mrf.mxu0
        %7234 = vdwg.mxu0
        %v7235 = vadd.f32 %v7162, %v7221
        %v7236 = vadd.f32 %v7163, %v7224
        %v7237 = vadd.f32 %v7164, %v7229
        %v7238 = vadd.f32 %v7165, %v7232
        %v7239 = vpack.c.bf16 %v7236, %v7235
        %v7240 = vpack.c.bf16 %v7238, %v7237
        %v7243 = vunpack.c.l.b16 %v7239
        %v7244 = vunpack.c.h.b16 %v7239
        %v7245 = vunpack.c.l.b16 %v7240
        %v7246 = vunpack.c.h.b16 %v7240
        %v7247 = vpack.c.b16 %v7243, %v7243
        %v7248 = vpack.c.b16 %v7244, %v7244
        %v7249 = vpack.c.b16 %v7245, %v7245
        %v7250 = vpack.c.b16 %v7246, %v7246
        %vm7255 = vcmask 125952
        %7256 = vst.msk [vmem:[%s573] sm:$0xf] %vm7255, %v7247
        %7257 = vst.msk [vmem:[%s573 + $0x4] sm:$0xf] %vm7255, %v7248
        %7258 = vst.msk [vmem:[%s573 + $0x8] sm:$0xf] %vm7255, %v7249
        %7259 = vst.msk [vmem:[%s573 + $0xc] sm:$0xf] %vm7255, %v7250
        %s7260 = smul.u32 36, %s30
        %p7261 = scmp.lt.s32.totalorder %s7260, 71
        %s7262 = scalar_select %p7261, %s7260, 71
        %s7263 = smul.addr %s7262, 2
        %s7264 = smul.addr %s7263, 4
        %s7265 = scalar_lea.vmem %s13, %s7264
        %s7266 = sand.u32 %s352, 1
        %s7267 = scalar_lea.sflag [#allocation3], %s7266
        %s7268 = sand.u32 %s352, 1
        %s7269 = smul.addr %s7268, 32
        %s7270 = scalar_lea.vmem [#allocation2], %s7269
        %s7271 = smul.u32 4, %s30
        %p7272 = scmp.lt.s32.totalorder %s7271, 7
        %s7273 = scalar_select %p7272, %s7271, 7
        %s7274 = smul.addr %s7273, 4
        %s7275 = scalar_lea.vmem %s15, %s7274
        // Predicated region
        $region73: #{tpu_custom_call.1} parent=71 // pred_check
          %p7276 = pneg %p336
        $region74: #{tpu_custom_call.1} parent=71 // pred_check_branch
          %7278 = sbr.rel (%p7276) target = $region76
        $region75: #{tpu_custom_call.1} parent=71 // pred_region
          %s7279 = smul.u32 36, %s30
        $region76: #{tpu_custom_call.1} parent=71 // pred_fallthru
          _
        // Predicated region
        $region77: #{tpu_custom_call.1} parent=71 // pred_check
          %p7280 = pneg %p362
        $region78: #{tpu_custom_call.1} parent=71 // pred_check_branch
          %7282 = sbr.rel (%p7280) target = $region80
        $region79: #{tpu_custom_call.1} parent=71 // pred_region
          %s7283 = smul.u32 4, %s30
          %s7285 = ssub.s32 512, 512
          %7286 = vsyncadd %s7267, %s7285
          %s7287 = smul.addr %s7283, 2
          %s7288 = smul.addr %s7287, 64
          %s7289 = scalar_lea.hbm %s14, %s7288
          %s7290 = sshll.u32 %s7270, 4
          %s7291 = int_to_ptr.vmem [resolvable:$true] %s7290
          %7296 = dma.vmem_to_hbm [thread:$0]  %s7291, 512, %s7289, %s7267, 128, 128, 8
        $region80: #{tpu_custom_call.1} parent=71 // pred_fallthru
          _
        // Predicated region
        $region81: #{tpu_custom_call.1} parent=71 // pred_check
          %p7297 = pneg %p388
        $region82: #{tpu_custom_call.1} parent=71 // pred_check_branch
          %7299 = sbr.rel (%p7297) target = $region84
        $region83: #{tpu_custom_call.1} parent=71 // pred_region
          %s7300 = smul.u32 4, %s30
        $region84: #{tpu_custom_call.1} parent=71 // pred_fallthru
          _
      $region72: #{tpu_custom_call.1} parent=5 // pred_fallthru
        _
      %p7301 = scmp.le.s32.totalorder 2, %s25
      // Predicated region
      $region85: #{tpu_custom_call.1} parent=5 // pred_check
        %p7302 = pneg %p7301
      $region86: #{tpu_custom_call.1} parent=5 // pred_check_branch
        %7304 = sbr.rel (%p7302) target = $region88
      $region87: #{tpu_custom_call.1} parent=5 // pred_region
        %s7305 = ssub.s32 %s25, 2
        // Predicated region
        $region89: #{tpu_custom_call.1} parent=87 // pred_check
          %p7306 = pneg %p342
        $region90: #{tpu_custom_call.1} parent=87 // pred_check_branch
          %7308 = sbr.rel (%p7306) target = $region92
        $region91: #{tpu_custom_call.1} parent=87 // pred_region
          %s7309 = smul.u32 36, %s31
          %p7310 = scmp.lt.s32.totalorder %s7309, 71
          %s7311 = scalar_select %p7310, %s7309, 71
          %s7312 = smul.addr %s7311, 2
          %s7313 = smul.addr %s7312, 4
          %s7314 = scalar_lea.vmem %s13, %s7313
        $region92: #{tpu_custom_call.1} parent=87 // pred_fallthru
          _
        // Predicated region
        $region93: #{tpu_custom_call.1} parent=87 // pred_check
          %p7315 = pneg %p368
        $region94: #{tpu_custom_call.1} parent=87 // pred_check_branch
          %7317 = sbr.rel (%p7315) target = $region96
        $region95: #{tpu_custom_call.1} parent=87 // pred_region
          %s7318 = sand.u32 %s353, 1
          %s7319 = scalar_lea.sflag [#allocation3], %s7318
          %s7320 = sand.u32 %s353, 1
          %s7321 = smul.addr %s7320, 32
          %s7322 = scalar_lea.vmem [#allocation2], %s7321
          %7323 = dma.done %s7319, 512
        $region96: #{tpu_custom_call.1} parent=87 // pred_fallthru
          _
        // Predicated region
        $region97: #{tpu_custom_call.1} parent=87 // pred_check
          %p7324 = pneg %p394
        $region98: #{tpu_custom_call.1} parent=87 // pred_check_branch
          %7326 = sbr.rel (%p7324) target = $region100
        $region99: #{tpu_custom_call.1} parent=87 // pred_region
          %s7327 = smul.u32 4, %s31
          %p7328 = scmp.lt.s32.totalorder %s7327, 7
          %s7329 = scalar_select %p7328, %s7327, 7
          %s7330 = smul.addr %s7329, 4
          %s7331 = scalar_lea.vmem %s15, %s7330
        $region100: #{tpu_custom_call.1} parent=87 // pred_fallthru
          _
      $region88: #{tpu_custom_call.1} parent=5 // pred_fallthru
        _
    $region6: #{tpu_custom_call.1} parent=1 // loop_footer
      %s29 = sadd.s32 1, %s25
    $region7: #{tpu_custom_call.1} parent=1 // loop_footer_branch
      %24 = sbr.rel target = $region3
    $region8: #{tpu_custom_call.1} parent=1 // loop_exit
      _
    %7332 = vsyncpa [#allocation3], 1
    %s7333 = scalar_lea.sflag [#allocation3], 1
    %7334 = vsyncpa %s7333, 1

</llo_original>
